<compile_context>
chip_gen: v6e
topology: v6e:2x2x1
jax: 0.10.0
libtpu: 0.0.40
codegen_flags: <defaults>
</compile_context>

<pallas_src>
import jax
import jax.numpy as jnp
from jax.experimental import pallas as pl
from jax.experimental.pallas import tpu as pltpu


# ----------------------------------------------------------------------------
# Pallas kernel: mean(stack) -> conv1 -> conv2 -> dropout -> flatten -> fc
# (everything after conv1's channel-contraction is pre-composed into wc/bias)
# ----------------------------------------------------------------------------
def bert_nn_kernel(hs1_ref, hs2_ref, oss_ref, w1_ref, wc_ref, b_ref, out_ref):
    # x = mean(stack([hs[-1], hs[-2], os]), 0): only the add is done here, the
    # 1/3 is folded into w1.  Upcast bf16 -> f32 before adding (v5e VPU has no
    # bf16); all accumulation stays in f32.
    x = (hs1_ref[...].astype(jnp.float32)
         + hs2_ref[...].astype(jnp.float32)
         + oss_ref[...].astype(jnp.float32))                # (Bt, C, L)

    # conv1 with all 3 taps fused into a single channel contraction:
    #   t[b, k*16 + i, l] = sum_c (w1[i, c, k] / 3) * x[b, c, l]
    # (the per-tap lane shifts of the 'same' conv are folded into wc below).
    t = jnp.einsum('qc,bcl->bql', w1_ref[...], x,
                   preferred_element_type=jnp.float32)      # (Bt, 48, L)

    # conv1 tap shifts + conv2 + flatten + fc, pre-composed (wrapper) into one
    # lane-dense weight wc: (2, 48*L) and bias: (1, 2).
    # TODO(synk): nn.Dropout(0.5) omitted (inference-mode identity).
    bt = t.shape[0]
    t2 = t.reshape(bt, -1)                                  # (Bt, 48*L)
    out = jnp.einsum('bk,ok->bo', t2, wc_ref[...],
                     preferred_element_type=jnp.float32) + b_ref[...]
    out_ref[...] = out


# ----------------------------------------------------------------------------
# Wrapper-side linear-algebra fusion of the head parameters (exact).
# ----------------------------------------------------------------------------
def pack_bert_nn_params(w1, b1, w2, b2, wfc, bfc):
    """Fold mean(1/3), conv1 tap shifts, conv2, fc and all biases."""
    c1 = w1.shape[0]                  # conv1 out channels (16)
    c2 = w2.shape[0]                  # cnn_output_size (2)
    n_out = wfc.shape[0]              # 2
    hidden = wfc.shape[1] // c2

    # conv1 weights (16, max_len, 3) -> (3*16, max_len); 1/3 of the mean folded.
    w1cat = (jnp.transpose(w1, (2, 0, 1)).reshape(3 * c1, -1)
             / 3.0).astype(jnp.float32)

    def shift_last(a, s):
        # result[..., m] = a[..., m + s], zero where m + s is out of range.
        if s == 0:
            return a
        pad = [(0, 0)] * (a.ndim - 1)
        if s > 0:
            return jnp.pad(a[..., s:], pad + [(0, s)])
        return jnp.pad(a[..., :s], pad + [(-s, 0)])

    wfc3 = wfc.reshape(n_out, c2, hidden)                            # (2, 2, H)
    # conv2 composed with fc: A[o, i, m] = d out_o / d conv1_out[i, m].
    g = [jnp.einsum('ojl,ji->oil', wfc3, w2[:, :, k]) for k in range(3)]
    A = shift_last(g[0], +1) + g[1] + shift_last(g[2], -1)           # (2,16,H)
    # conv1 tap-k 'same'-padding shift composed in: B_k[o,i,n] = A[o,i,n-k+1].
    bk = [shift_last(A, 1 - k) for k in range(3)]
    wc = jnp.stack(bk, axis=1).reshape(n_out, 3 * c1, hidden)        # (2,48,H)
    wc2d = wc.reshape(n_out, -1).astype(jnp.float32)                 # (2,48*H)

    bias = (bfc
            + jnp.einsum('ojl,j->o', wfc3, b2)     # fc applied to conv2 bias
            + jnp.einsum('oim,i->o', A, b1)        # composed conv1 bias
            ).reshape(1, n_out).astype(jnp.float32)
    return w1cat, wc2d, bias


def bert_nn_forward(hs_last, hs_prev, seq_out, packed, *, block_b=8):
    """Batch-tiled, pipelined Pallas call."""
    w1cat, wc2d, bias = packed
    B, C, L = hs_last.shape
    block_b = min(block_b, B)
    assert B % block_b == 0, "batch must be divisible by the batch tile"
    # NOTE: at real BERT shapes pick block_b per generation: smaller (or bf16)
    # tiles on v7x (64 MiB VMEM), larger on v5e/v6e (128 MiB VMEM).

    act_spec = pl.BlockSpec((block_b, C, L), lambda b: (b, 0, 0))
    return pl.pallas_call(
        bert_nn_kernel,
        out_shape=jax.ShapeDtypeStruct((B, wc2d.shape[0]), jnp.float32),
        grid=(B // block_b,),
        in_specs=[act_spec, act_spec, act_spec,
                  pl.BlockSpec(w1cat.shape, lambda b: (0, 0)),
                  pl.BlockSpec(wc2d.shape, lambda b: (0, 0)),
                  pl.BlockSpec(bias.shape, lambda b: (0, 0))],
        out_specs=pl.BlockSpec((block_b, wc2d.shape[0]), lambda b: (b, 0)),
        compiler_params=pltpu.CompilerParams(
            dimension_semantics=("parallel",),   # shards over v7x's 2 TCs
            vmem_limit_bytes=48 * 1024 * 1024),
    )(hs_last, hs_prev, seq_out, w1cat, wc2d, bias)


# ----------------------------------------------------------------------------
# Stand-in "roberta" (plain-JAX glue) + pure-JAX reference for verification.
# ----------------------------------------------------------------------------
def fake_roberta(input_ids, attention_mask, emb, p_last, p_prev, p_out):
    # TODO(synk): RobertaModel backbone has no clean single-kernel Pallas
    # equivalent; stand-in is embedding lookup + per-output linear projection.
    e = emb[input_ids]                                   # (B, max_len, hidden)
    e = e * attention_mask[..., None].astype(e.dtype)
    seq_out = e @ p_out       # "os"   (sequence output)
    hs_last = e @ p_last      # hs[-1]
    hs_prev = e @ p_prev      # hs[-2]
    return seq_out, hs_last, hs_prev


def ref_forward(hs_last, hs_prev, seq_out, params):
    w1, b1, w2, b2, wfc, bfc = params
    x = (hs_last + hs_prev + seq_out) / 3.0

    def conv1d(x, w, b):
        y = jax.lax.conv_general_dilated(
            x, w, window_strides=(1,), padding=[(1, 1)],
            dimension_numbers=('NCH', 'OIH', 'NCH'))
        return y + b[None, :, None]

    y = conv1d(x, w1, b1)
    y = conv1d(y, w2, b2)
    flat = y.reshape(y.shape[0], -1)
    return flat @ wfc.T + bfc


# ----------------------------------------------------------------------------
if __name__ == "__main__":
    B, MAX_LEN, HIDDEN, VOCAB = 16, 16, 128, 50
    CONV1_OUT, CNN_OUT = 16, 2

    key = jax.random.PRNGKey(0)
    ks = jax.random.split(key, 11)

    # Inputs (analogous to input_ids / attention_mask).
    input_ids = jax.random.randint(ks[0], (B, MAX_LEN), 0, VOCAB)
    attention_mask = jnp.ones((B, MAX_LEN), jnp.int32)

    # Stand-in encoder parameters (deterministic).
    emb = 0.02 * jax.random.normal(ks[1], (VOCAB, HIDDEN), jnp.float32)
    p_last = 0.1 * jax.random.normal(ks[2], (HIDDEN, HIDDEN), jnp.float32)
    p_prev = 0.1 * jax.random.normal(ks[3], (HIDDEN, HIDDEN), jnp.float32)
    p_out = 0.1 * jax.random.normal(ks[4], (HIDDEN, HIDDEN), jnp.float32)

    # BERT_NN parameters (shapes from the module __init__), deterministic init.
    w1 = 0.1 * jax.random.normal(ks[5], (CONV1_OUT, MAX_LEN, 3), jnp.float32)
    b1 = 0.1 * jax.random.normal(ks[6], (CONV1_OUT,), jnp.float32)
    w2 = 0.1 * jax.random.normal(ks[7], (CNN_OUT, CONV1_OUT, 3), jnp.float32)
    b2 = 0.1 * jax.random.normal(ks[8], (CNN_OUT,), jnp.float32)
    wfc = 0.02 * jax.random.normal(ks[9], (2, HIDDEN * CNN_OUT), jnp.float32)
    bfc = jnp.zeros((2,), jnp.float32)

    seq_out, hs_last, hs_prev = fake_roberta(
        input_ids, attention_mask, emb, p_last, p_prev, p_out)

    # bf16 activations feed the kernel (halves HBM bytes at real shapes).
    hs_last16 = hs_last.astype(jnp.bfloat16)
    hs_prev16 = hs_prev.astype(jnp.bfloat16)
    seq_out16 = seq_out.astype(jnp.bfloat16)

    packed = pack_bert_nn_params(w1, b1, w2, b2, wfc, bfc)
    out = bert_nn_forward(hs_last16, hs_prev16, seq_out16, packed, block_b=8)
    out = jax.block_until_ready(out)

    ref = ref_forward(hs_last16.astype(jnp.float32),
                      hs_prev16.astype(jnp.float32),
                      seq_out16.astype(jnp.float32),
                      (w1, b1, w2, b2, wfc, bfc))
    assert out.shape == (B, 2)
    assert jnp.allclose(out, ref, atol=1e-3, rtol=1e-3), (out, ref)

    print("KERNEL_OK")
</pallas_src>

<mosaic_0001>
module attributes {stable_mosaic.version = 11 : i64} {
  func.func @bert_nn_kernel(%arg0: i32, %arg1: memref<8x16x128xbf16, #tpu.memory_space<vmem>>, %arg2: memref<8x16x128xbf16, #tpu.memory_space<vmem>>, %arg3: memref<8x16x128xbf16, #tpu.memory_space<vmem>>, %arg4: memref<48x16xf32, #tpu.memory_space<vmem>>, %arg5: memref<2x6144xf32, #tpu.memory_space<vmem>>, %arg6: memref<1x2xf32, #tpu.memory_space<vmem>>, %arg7: memref<8x2xf32, #tpu.memory_space<vmem>>) attributes {dimension_semantics = [#tpu.dimension_semantics<parallel>], iteration_bounds = array<i64: 2>, scalar_prefetch = 0 : i64, scratch_operands = 0 : i64, tpu.core_type = #tpu.core_type<tc>, window_params = [{transform_indices = @transform_0, window_bounds = array<i64: 8, 16, 128>}, {transform_indices = @transform_1, window_bounds = array<i64: 8, 16, 128>}, {transform_indices = @transform_2, window_bounds = array<i64: 8, 16, 128>}, {pipeline_mode = #tpu.pipeline_mode<synchronous>, transform_indices = @transform_3, window_bounds = array<i64: 48, 16>}, {pipeline_mode = #tpu.pipeline_mode<synchronous>, transform_indices = @transform_4, window_bounds = array<i64: 2, 6144>}, {pipeline_mode = #tpu.pipeline_mode<synchronous>, transform_indices = @transform_5, window_bounds = array<i64: 1, 2>}, {transform_indices = @transform_6, window_bounds = array<i64: 8, 2>}]} {
    %c0 = arith.constant 0 : index
    %c0_0 = arith.constant 0 : index
    %c0_1 = arith.constant 0 : index
    %0 = vector.load %arg1[%c0, %c0_0, %c0_1] : memref<8x16x128xbf16, #tpu.memory_space<vmem>>, vector<8x16x128xbf16>
    %1 = arith.extf %0 : vector<8x16x128xbf16> to vector<8x16x128xf32>
    %c0_2 = arith.constant 0 : index
    %c0_3 = arith.constant 0 : index
    %c0_4 = arith.constant 0 : index
    %2 = vector.load %arg2[%c0_2, %c0_3, %c0_4] : memref<8x16x128xbf16, #tpu.memory_space<vmem>>, vector<8x16x128xbf16>
    %3 = arith.extf %2 : vector<8x16x128xbf16> to vector<8x16x128xf32>
    %4 = arith.addf %1, %3 : vector<8x16x128xf32>
    %c0_5 = arith.constant 0 : index
    %c0_6 = arith.constant 0 : index
    %c0_7 = arith.constant 0 : index
    %5 = vector.load %arg3[%c0_5, %c0_6, %c0_7] : memref<8x16x128xbf16, #tpu.memory_space<vmem>>, vector<8x16x128xbf16>
    %6 = arith.extf %5 : vector<8x16x128xbf16> to vector<8x16x128xf32>
    %7 = arith.addf %4, %6 : vector<8x16x128xf32>
    %c0_8 = arith.constant 0 : index
    %c0_9 = arith.constant 0 : index
    %8 = vector.load %arg4[%c0_8, %c0_9] : memref<48x16xf32, #tpu.memory_space<vmem>>, vector<48x16xf32>
    "tpu.trace_start"() <{level = 10 : i32, message = "qc,bcl->bql"}> : () -> ()
    %cst = arith.constant dense<0.000000e+00> : vector<8x128x48xf32>
    %9 = tpu.matmul %7, %8, %cst {dimension_numbers = #tpu.dot_dimension_numbers<[1], [1], [0, 2], [0], [0, 0, 0, 2, 1, 0], [], []>} : vector<8x16x128xf32>, vector<48x16xf32>, vector<8x128x48xf32> -> vector<8x128x48xf32>
    %10 = tpu.transpose %9, [0, 2, 1] : vector<8x128x48xf32> -> vector<8x48x128xf32>
    "tpu.trace_stop"() : () -> ()
    %11 = vector.shape_cast %10 : vector<8x48x128xf32> to vector<8x6144xf32>
    %c0_10 = arith.constant 0 : index
    %c0_11 = arith.constant 0 : index
    %12 = vector.load %arg5[%c0_10, %c0_11] : memref<2x6144xf32, #tpu.memory_space<vmem>>, vector<2x6144xf32>
    "tpu.trace_start"() <{level = 10 : i32, message = "bk,ok->bo"}> : () -> ()
    %cst_12 = arith.constant dense<0.000000e+00> : vector<8x2xf32>
    %13 = tpu.matmul %11, %12, %cst_12 {dimension_numbers = #tpu.dot_dimension_numbers<[1], [1], [0], [0], [0, 0, 1, 0], [], []>} : vector<8x6144xf32>, vector<2x6144xf32>, vector<8x2xf32> -> vector<8x2xf32>
    "tpu.trace_stop"() : () -> ()
    %c0_13 = arith.constant 0 : index
    %c0_14 = arith.constant 0 : index
    %14 = vector.load %arg6[%c0_13, %c0_14] : memref<1x2xf32, #tpu.memory_space<vmem>>, vector<1x2xf32>
    %15 = vector.broadcast %14 : vector<1x2xf32> to vector<8x2xf32>
    %16 = arith.addf %13, %15 : vector<8x2xf32>
    %c0_15 = arith.constant 0 : index
    %c0_16 = arith.constant 0 : index
    %17 = vector.load %arg7[%c0_15, %c0_16] : memref<8x2xf32, #tpu.memory_space<vmem>>, vector<8x2xf32>
    tpu.vector_store %arg7[%c0_15, %c0_16], %16 {strides = array<i32>} : memref<8x2xf32, #tpu.memory_space<vmem>>, vector<8x2xf32>,
    return
  }
  func.func @transform_0(%arg0: i32) -> (i32, i32, i32) {
    %c0_i32 = arith.constant 0 : i32
    %c0_i32_0 = arith.constant 0 : i32
    %c0_i32_1 = arith.constant 0 : i32
    return %arg0, %c0_i32, %c0_i32_0 : i32, i32, i32
  }
  func.func @transform_1(%arg0: i32) -> (i32, i32, i32) {
    %c0_i32 = arith.constant 0 : i32
    %c0_i32_0 = arith.constant 0 : i32
    %c0_i32_1 = arith.constant 0 : i32
    return %arg0, %c0_i32, %c0_i32_0 : i32, i32, i32
  }
  func.func @transform_2(%arg0: i32) -> (i32, i32, i32) {
    %c0_i32 = arith.constant 0 : i32
    %c0_i32_0 = arith.constant 0 : i32
    %c0_i32_1 = arith.constant 0 : i32
    return %arg0, %c0_i32, %c0_i32_0 : i32, i32, i32
  }
  func.func @transform_3(%arg0: i32) -> (i32, i32) {
    %c0_i32 = arith.constant 0 : i32
    %c0_i32_0 = arith.constant 0 : i32
    %c0_i32_1 = arith.constant 0 : i32
    return %c0_i32, %c0_i32_0 : i32, i32
  }
  func.func @transform_4(%arg0: i32) -> (i32, i32) {
    %c0_i32 = arith.constant 0 : i32
    %c0_i32_0 = arith.constant 0 : i32
    %c0_i32_1 = arith.constant 0 : i32
    return %c0_i32, %c0_i32_0 : i32, i32
  }
  func.func @transform_5(%arg0: i32) -> (i32, i32) {
    %c0_i32 = arith.constant 0 : i32
    %c0_i32_0 = arith.constant 0 : i32
    %c0_i32_1 = arith.constant 0 : i32
    return %c0_i32, %c0_i32_0 : i32, i32
  }
  func.func @transform_6(%arg0: i32) -> (i32, i32) {
    %c0_i32 = arith.constant 0 : i32
    %c0_i32_0 = arith.constant 0 : i32
    return %arg0, %c0_i32 : i32, i32
  }
}

</mosaic_0001>

<llo_original>
// kernel: tpu_custom_call.1
$region0: #{tpu_custom_call.1}
  #allocation0 [shape = 'u32[]', space=smem, size = 0x4, offset = 0x4, fixed_abs, tag = 'smem constant byte address 0x4 - core index']
  #allocation1 [shape = 'u32[144,128]{1,0:T(1,128)}', space=vmem, size = 0x12000, scoped, tag = 'internal scratch']
  %s0 = inlined_call_operand.hbm [shape: bf16[16,16,128], index: 0, kind: input, shape index: {}]
  %s1 = inlined_call_operand.hbm [shape: bf16[16,16,128], index: 1, kind: input, shape index: {}]
  %s2 = inlined_call_operand.hbm [shape: bf16[16,16,128], index: 2, kind: input, shape index: {}]
  %s3 = inlined_call_operand.vmem [shape: f32[48,16], index: 3, kind: input, shape index: {}]
  %s4 = inlined_call_operand.hbm [shape: f32[2,6144], index: 4, kind: input, shape index: {}]
  %s5 = inlined_call_operand.vmem [shape: f32[1,2], index: 5, kind: input, shape index: {}]
  %s6 = inlined_call_operand.vmem [shape: f32[16,2], index: 6, kind: output, shape index: {}]
  %s7 = sld [smem:[#allocation0]]
  $region73: #{tpu_custom_call.1} parent=0
    _
  %s9 = ssub.s32 1, %s7
  %s10 = scalar_select 0, %s9, %s7
  $region1: #{tpu_custom_call.1} parent=0
    #allocation2 [shape = 'u8[65536]{0}', space=vmem, size = 0x10000, scoped, tag = 'input window, operand 0']
    #allocation3 [shape = 's32[2]{0}', space=sflag, size = 0x8, scoped, tag = 'scoped memory for tpu_custom_call.1']
    #allocation4 [shape = 'u8[65536]{0}', space=vmem, size = 0x10000, scoped, tag = 'input window, operand 1']
    #allocation5 [shape = 's32[2]{0}', space=sflag, size = 0x8, scoped, tag = 'scoped memory for tpu_custom_call.1']
    #allocation6 [shape = 'u8[65536]{0}', space=vmem, size = 0x10000, scoped, tag = 'input window, operand 2']
    #allocation7 [shape = 'u8[49152]{0}', space=vmem, size = 0xc000, scoped, tag = 'input window, operand 4, single buffered']
    #allocation8 [shape = 's32[1]{0}', space=sflag, size = 0x4, scoped, tag = 'scoped memory for tpu_custom_call.1']
    %11 = vsyncpa [#allocation3], 0
    %s12 = scalar_lea.sflag [#allocation3], 1
    %13 = vsyncpa %s12, 0
    %14 = vsyncpa [#allocation5], 0
    %s15 = scalar_lea.sflag [#allocation5], 1
    %16 = vsyncpa %s15, 0
    %17 = vsyncpa [#allocation8], 0
    loop: start=0, step=1, limit=4
    $region2: #{tpu_custom_call.1} parent=1 // loop_pre_header
      _
    $region3: #{tpu_custom_call.1} parent=1 // loop_header
      %s19 = sphi 0, %s23
      %p20 = scmp.ge.s32.totalorder %s19, 4
      %s29 = sphi 0, %s31
      %s32 = sphi 0, %s29
      %s33 = sphi 0, %s32
      %s49 = sphi 0, %s33
      %s55 = sphi 0, %s57
      %s58 = sphi 0, %s55
      %s59 = sphi 0, %s58
      %s75 = sphi 0, %s59
      %s81 = sphi 0, %s83
      %s84 = sphi 0, %s81
      %s85 = sphi 0, %s84
      %s101 = sphi 0, %s85
      %s105 = sphi 0, %s105
      %s107 = sphi 0, %s105
      %s108 = sphi 0, %s107
      %s122 = sphi 0, %s108
      %s126 = sphi 0, %s126
      %s128 = sphi 0, %s126
      %s129 = sphi 0, %s128
      %s143 = sphi 0, %s129
      %s147 = sphi 0, %s147
      %s149 = sphi 0, %s147
      %s150 = sphi 0, %s149
      %s164 = sphi 0, %s150
      %s170 = sphi 0, %s172
      %s173 = sphi 0, %s170
      %s174 = sphi 0, %s173
      %s190 = sphi 0, %s174
    $region4: #{tpu_custom_call.1} parent=1 // loop_header_branch
      %22 = sbr.rel (%p20) target = $region8
    $region5: #{tpu_custom_call.1} parent=1 // loop_body
      %s24 = ssub.s32 %s19, 1
      %s25 = ssub.s32 %s19, 2
      %s26 = sadd.s32 %s19, 1
      %s27 = ssub.s32 %s19, %s26
      %p28 = scmp.eq.s32.totalorder %s27, 0
      %s30 = sadd.s32 %s29, 1
      %s31 = scalar_select %p28, %s29, %s30
      %p34 = pneg %p28
      %p35 = scmp.eq.s32.totalorder %s19, 1
      %p36 = por %p34, %p35
      %p37 = scmp.ne.s32.totalorder %s29, %s32
      %p38 = scmp.eq.s32.totalorder %s19, 0
      %p39 = por %p37, %p38
      %p40 = scmp.ne.s32.totalorder %s29, %s32
      %p41 = scmp.eq.s32.totalorder %s24, 1
      %p42 = por %p40, %p41
      %p43 = scmp.ne.s32.totalorder %s32, %s33
      %p44 = scmp.eq.s32.totalorder %s24, 0
      %p45 = por %p43, %p44
      %p46 = scmp.ne.s32.totalorder %s32, %s33
      %p47 = scmp.eq.s32.totalorder %s25, 1
      %p48 = por %p46, %p47
      %p50 = scmp.ne.s32.totalorder %s33, %s49
      %p51 = scmp.eq.s32.totalorder %s25, 0
      %p52 = por %p50, %p51
      %s53 = ssub.s32 %s19, %s26
      %p54 = scmp.eq.s32.totalorder %s53, 0
      %s56 = sadd.s32 %s55, 1
      %s57 = scalar_select %p54, %s55, %s56
      %p60 = pneg %p54
      %p61 = scmp.eq.s32.totalorder %s19, 1
      %p62 = por %p60, %p61
      %p63 = scmp.ne.s32.totalorder %s55, %s58
      %p64 = scmp.eq.s32.totalorder %s19, 0
      %p65 = por %p63, %p64
      %p66 = scmp.ne.s32.totalorder %s55, %s58
      %p67 = scmp.eq.s32.totalorder %s24, 1
      %p68 = por %p66, %p67
      %p69 = scmp.ne.s32.totalorder %s58, %s59
      %p70 = scmp.eq.s32.totalorder %s24, 0
      %p71 = por %p69, %p70
      %p72 = scmp.ne.s32.totalorder %s58, %s59
      %p73 = scmp.eq.s32.totalorder %s25, 1
      %p74 = por %p72, %p73
      %p76 = scmp.ne.s32.totalorder %s59, %s75
      %p77 = scmp.eq.s32.totalorder %s25, 0
      %p78 = por %p76, %p77
      %s79 = ssub.s32 %s19, %s26
      %p80 = scmp.eq.s32.totalorder %s79, 0
      %s82 = sadd.s32 %s81, 1
      %s83 = scalar_select %p80, %s81, %s82
      %p86 = pneg %p80
      %p87 = scmp.eq.s32.totalorder %s19, 1
      %p88 = por %p86, %p87
      %p89 = scmp.ne.s32.totalorder %s81, %s84
      %p90 = scmp.eq.s32.totalorder %s19, 0
      %p91 = por %p89, %p90
      %p92 = scmp.ne.s32.totalorder %s81, %s84
      %p93 = scmp.eq.s32.totalorder %s24, 1
      %p94 = por %p92, %p93
      %p95 = scmp.ne.s32.totalorder %s84, %s85
      %p96 = scmp.eq.s32.totalorder %s24, 0
      %p97 = por %p95, %p96
      %p98 = scmp.ne.s32.totalorder %s84, %s85
      %p99 = scmp.eq.s32.totalorder %s25, 1
      %p100 = por %p98, %p99
      %p102 = scmp.ne.s32.totalorder %s85, %s101
      %p103 = scmp.eq.s32.totalorder %s25, 0
      %p104 = por %p102, %p103
      %s106 = sadd.s32 %s105, 1
      %p109 = scmp.eq.s32.totalorder %s19, 1
      %p110 = scmp.ne.s32.totalorder %s105, %s107
      %p111 = scmp.eq.s32.totalorder %s19, 0
      %p112 = por %p110, %p111
      %p113 = scmp.ne.s32.totalorder %s105, %s107
      %p114 = scmp.eq.s32.totalorder %s24, 1
      %p115 = por %p113, %p114
      %p116 = scmp.ne.s32.totalorder %s107, %s108
      %p117 = scmp.eq.s32.totalorder %s24, 0
      %p118 = por %p116, %p117
      %p119 = scmp.ne.s32.totalorder %s107, %s108
      %p120 = scmp.eq.s32.totalorder %s25, 1
      %p121 = por %p119, %p120
      %p123 = scmp.ne.s32.totalorder %s108, %s122
      %p124 = scmp.eq.s32.totalorder %s25, 0
      %p125 = por %p123, %p124
      %s127 = sadd.s32 %s126, 1
      %p130 = scmp.eq.s32.totalorder %s19, 1
      %p131 = scmp.ne.s32.totalorder %s126, %s128
      %p132 = scmp.eq.s32.totalorder %s19, 0
      %p133 = por %p131, %p132
      %p134 = scmp.ne.s32.totalorder %s126, %s128
      %p135 = scmp.eq.s32.totalorder %s24, 1
      %p136 = por %p134, %p135
      %p137 = scmp.ne.s32.totalorder %s128, %s129
      %p138 = scmp.eq.s32.totalorder %s24, 0
      %p139 = por %p137, %p138
      %p140 = scmp.ne.s32.totalorder %s128, %s129
      %p141 = scmp.eq.s32.totalorder %s25, 1
      %p142 = por %p140, %p141
      %p144 = scmp.ne.s32.totalorder %s129, %s143
      %p145 = scmp.eq.s32.totalorder %s25, 0
      %p146 = por %p144, %p145
      %s148 = sadd.s32 %s147, 1
      %p151 = scmp.eq.s32.totalorder %s19, 1
      %p152 = scmp.ne.s32.totalorder %s147, %s149
      %p153 = scmp.eq.s32.totalorder %s19, 0
      %p154 = por %p152, %p153
      %p155 = scmp.ne.s32.totalorder %s147, %s149
      %p156 = scmp.eq.s32.totalorder %s24, 1
      %p157 = por %p155, %p156
      %p158 = scmp.ne.s32.totalorder %s149, %s150
      %p159 = scmp.eq.s32.totalorder %s24, 0
      %p160 = por %p158, %p159
      %p161 = scmp.ne.s32.totalorder %s149, %s150
      %p162 = scmp.eq.s32.totalorder %s25, 1
      %p163 = por %p161, %p162
      %p165 = scmp.ne.s32.totalorder %s150, %s164
      %p166 = scmp.eq.s32.totalorder %s25, 0
      %p167 = por %p165, %p166
      %s168 = ssub.s32 %s19, %s26
      %p169 = scmp.eq.s32.totalorder %s168, 0
      %s171 = sadd.s32 %s170, 1
      %s172 = scalar_select %p169, %s170, %s171
      %p175 = pneg %p169
      %p176 = scmp.eq.s32.totalorder %s19, 1
      %p177 = por %p175, %p176
      %p178 = scmp.ne.s32.totalorder %s170, %s173
      %p179 = scmp.eq.s32.totalorder %s19, 0
      %p180 = por %p178, %p179
      %p181 = scmp.ne.s32.totalorder %s170, %s173
      %p182 = scmp.eq.s32.totalorder %s24, 1
      %p183 = por %p181, %p182
      %p184 = scmp.ne.s32.totalorder %s173, %s174
      %p185 = scmp.eq.s32.totalorder %s24, 0
      %p186 = por %p184, %p185
      %p187 = scmp.ne.s32.totalorder %s173, %s174
      %p188 = scmp.eq.s32.totalorder %s25, 1
      %p189 = por %p187, %p188
      %p191 = scmp.ne.s32.totalorder %s174, %s190
      %p192 = scmp.eq.s32.totalorder %s25, 0
      %p193 = por %p191, %p192
      %p194 = scmp.le.s32.totalorder 1, %s19
      %p195 = scmp.lt.s32.totalorder %s19, 3
      %p196 = pnand %p194, %p195
      %p197 = pneg %p196
      // Predicated region
      $region9: #{tpu_custom_call.1} parent=5 // pred_check
        _
      $region10: #{tpu_custom_call.1} parent=5 // pred_check_branch
        %199 = sbr.rel (%p196) target = $region12
      $region11: #{tpu_custom_call.1} parent=5 // pred_region
        %s200 = ssub.s32 %s19, 1
        // Predicated region
        $region13: #{tpu_custom_call.1} parent=11 // pred_check
          %p201 = pneg %p118
        $region14: #{tpu_custom_call.1} parent=11 // pred_check_branch
          %203 = sbr.rel (%p201) target = $region16
        $region15: #{tpu_custom_call.1} parent=11 // pred_region
          _
        $region16: #{tpu_custom_call.1} parent=11 // pred_fallthru
          _
        // Predicated region
        $region17: #{tpu_custom_call.1} parent=11 // pred_check
          %p204 = pneg %p139
        $region18: #{tpu_custom_call.1} parent=11 // pred_check_branch
          %206 = sbr.rel (%p204) target = $region20
        $region19: #{tpu_custom_call.1} parent=11 // pred_region
          %s208 = ssub.s32 1536, 1536
          %209 = vsyncadd [#allocation8], %s208
          %s211 = sshll.u32 [#allocation7], 4
          %s212 = int_to_ptr.vmem [resolvable:$true] %s211
          %214 = dma.hbm_to_vmem [thread:$0]  %s4, 1536, %s212, [#allocation8]
        $region20: #{tpu_custom_call.1} parent=11 // pred_fallthru
          _
        // Predicated region
        $region21: #{tpu_custom_call.1} parent=11 // pred_check
          %p215 = pneg %p160
        $region22: #{tpu_custom_call.1} parent=11 // pred_check_branch
          %217 = sbr.rel (%p215) target = $region24
        $region23: #{tpu_custom_call.1} parent=11 // pred_region
          _
        $region24: #{tpu_custom_call.1} parent=11 // pred_fallthru
          _
      $region12: #{tpu_custom_call.1} parent=5 // pred_fallthru
        _
      %p218 = scmp.lt.s32.totalorder %s19, 2
      // Predicated region
      $region25: #{tpu_custom_call.1} parent=5 // pred_check
        %p219 = pneg %p218
      $region26: #{tpu_custom_call.1} parent=5 // pred_check_branch
        %221 = sbr.rel (%p219) target = $region28
      $region27: #{tpu_custom_call.1} parent=5 // pred_region
        // Predicated region
        $region29: #{tpu_custom_call.1} parent=27 // pred_check
          %p222 = pneg %p39
        $region30: #{tpu_custom_call.1} parent=27 // pred_check_branch
          %224 = sbr.rel (%p222) target = $region32
        $region31: #{tpu_custom_call.1} parent=27 // pred_region
          %s225 = sand.u32 %s29, 1
          %s226 = scalar_lea.sflag [#allocation3], %s225
          %s227 = sand.u32 %s29, 1
          %s228 = smul.addr %s227, 64
          %s229 = scalar_lea.vmem [#allocation2], %s228
          %s230 = smul.u32 8, %s19
          %s232 = ssub.s32 1024, 1024
          %233 = vsyncadd %s226, %s232
          %s234 = smul.addr %s230, 2
          %s235 = smul.addr %s234, 64
          %s236 = scalar_lea.hbm %s0, %s235
          %s237 = sshll.u32 %s229, 4
          %s238 = int_to_ptr.vmem [resolvable:$true] %s237
          %243 = dma.hbm_to_vmem [thread:$0]  %s236, 1024, %s238, %s226, 64, 64, 4
        $region32: #{tpu_custom_call.1} parent=27 // pred_fallthru
          _
        // Predicated region
        $region33: #{tpu_custom_call.1} parent=27 // pred_check
          %p244 = pneg %p65
        $region34: #{tpu_custom_call.1} parent=27 // pred_check_branch
          %246 = sbr.rel (%p244) target = $region36
        $region35: #{tpu_custom_call.1} parent=27 // pred_region
          %s247 = sand.u32 %s19, 1
          %s248 = scalar_lea.sflag [#allocation5], %s247
          %s249 = sand.u32 %s55, 1
          %s250 = smul.addr %s249, 64
          %s251 = scalar_lea.vmem [#allocation4], %s250
          %s252 = smul.u32 8, %s19
          %s254 = ssub.s32 1024, 1024
          %255 = vsyncadd %s248, %s254
          %s256 = smul.addr %s252, 2
          %s257 = smul.addr %s256, 64
          %s258 = scalar_lea.hbm %s1, %s257
          %s259 = sshll.u32 %s251, 4
          %s260 = int_to_ptr.vmem [resolvable:$true] %s259
          %265 = dma.hbm_to_vmem [thread:$0]  %s258, 1024, %s260, %s248, 64, 64, 4
        $region36: #{tpu_custom_call.1} parent=27 // pred_fallthru
          _
        // Predicated region
        $region37: #{tpu_custom_call.1} parent=27 // pred_check
          %p266 = pneg %p91
        $region38: #{tpu_custom_call.1} parent=27 // pred_check_branch
          %268 = sbr.rel (%p266) target = $region40
        $region39: #{tpu_custom_call.1} parent=27 // pred_region
          %s269 = sand.u32 %s19, 1
          %s270 = scalar_lea.sflag [#allocation5], %s269
          %s271 = sand.u32 %s81, 1
          %s272 = smul.addr %s271, 64
          %s273 = scalar_lea.vmem [#allocation6], %s272
          %s274 = smul.u32 8, %s19
          %s276 = ssub.s32 1024, 1024
          %277 = vsyncadd %s270, %s276
          %s278 = smul.addr %s274, 2
          %s279 = smul.addr %s278, 64
          %s280 = scalar_lea.hbm %s2, %s279
          %s281 = sshll.u32 %s273, 4
          %s282 = int_to_ptr.vmem [resolvable:$true] %s281
          %287 = dma.hbm_to_vmem [thread:$0]  %s280, 1024, %s282, %s270, 64, 64, 4
        $region40: #{tpu_custom_call.1} parent=27 // pred_fallthru
          _
      $region28: #{tpu_custom_call.1} parent=5 // pred_fallthru
        _
      %p288 = scmp.le.s32.totalorder 1, %s19
      %p289 = scmp.lt.s32.totalorder %s19, 3
      %p290 = pnand %p288, %p289
      %p291 = pneg %p290
      // Predicated region
      $region41: #{tpu_custom_call.1} parent=5 // pred_check
        _
      $region42: #{tpu_custom_call.1} parent=5 // pred_check_branch
        %293 = sbr.rel (%p290) target = $region44
      $region43: #{tpu_custom_call.1} parent=5 // pred_region
        %s294 = ssub.s32 %s19, 1
        %s295 = sand.u32 %s32, 1
        %s296 = scalar_lea.sflag [#allocation3], %s295
        %s297 = sand.u32 %s32, 1
        %s298 = smul.addr %s297, 64
        %s299 = scalar_lea.vmem [#allocation2], %s298
        // Predicated region
        $region45: #{tpu_custom_call.1} parent=43 // pred_check
          %p300 = pneg %p45
        $region46: #{tpu_custom_call.1} parent=43 // pred_check_branch
          %302 = sbr.rel (%p300) target = $region48
        $region47: #{tpu_custom_call.1} parent=43 // pred_region
          %303 = dma.done %s296, 1024
        $region48: #{tpu_custom_call.1} parent=43 // pred_fallthru
          _
        %s304 = sand.u32 %s24, 1
        %s305 = scalar_lea.sflag [#allocation5], %s304
        %s306 = sand.u32 %s58, 1
        %s307 = smul.addr %s306, 64
        %s308 = scalar_lea.vmem [#allocation4], %s307
        // Predicated region
        $region49: #{tpu_custom_call.1} parent=43 // pred_check
          %p309 = pneg %p71
        $region50: #{tpu_custom_call.1} parent=43 // pred_check_branch
          %311 = sbr.rel (%p309) target = $region52
        $region51: #{tpu_custom_call.1} parent=43 // pred_region
          %312 = dma.done %s305, 1024
        $region52: #{tpu_custom_call.1} parent=43 // pred_fallthru
          _
        %s313 = sand.u32 %s24, 1
        %s314 = scalar_lea.sflag [#allocation5], %s313
        %s315 = sand.u32 %s84, 1
        %s316 = smul.addr %s315, 64
        %s317 = scalar_lea.vmem [#allocation6], %s316
        // Predicated region
        $region53: #{tpu_custom_call.1} parent=43 // pred_check
          %p318 = pneg %p97
        $region54: #{tpu_custom_call.1} parent=43 // pred_check_branch
          %320 = sbr.rel (%p318) target = $region56
        $region55: #{tpu_custom_call.1} parent=43 // pred_region
          %321 = dma.done %s314, 1024
        $region56: #{tpu_custom_call.1} parent=43 // pred_fallthru
          _
        // Predicated region
        $region57: #{tpu_custom_call.1} parent=43 // pred_check
          %p322 = pneg %p139
        $region58: #{tpu_custom_call.1} parent=43 // pred_check_branch
          %324 = sbr.rel (%p322) target = $region60
        $region59: #{tpu_custom_call.1} parent=43 // pred_region
          %325 = dma.done [#allocation8], 1536
        $region60: #{tpu_custom_call.1} parent=43 // pred_fallthru
          _
        %s326 = sand.u32 %s32, 1
        %s327 = scalar_lea.sflag [#allocation3], %s326
        %s328 = sand.u32 %s32, 1
        %s329 = smul.addr %s328, 64
        %s330 = scalar_lea.vmem [#allocation2], %s329
        %p331 = pneg %p45
        %p332 = pneg %p42
        %s333 = sand.u32 %s24, 1
        %s334 = scalar_lea.sflag [#allocation5], %s333
        %s335 = sand.u32 %s58, 1
        %s336 = smul.addr %s335, 64
        %s337 = scalar_lea.vmem [#allocation4], %s336
        %p338 = pneg %p71
        %p339 = pneg %p68
        %s340 = sand.u32 %s24, 1
        %s341 = scalar_lea.sflag [#allocation5], %s340
        %s342 = sand.u32 %s84, 1
        %s343 = smul.addr %s342, 64
        %s344 = scalar_lea.vmem [#allocation6], %s343
        %p345 = pneg %p97
        %p346 = pneg %p94
        %p347 = pneg %p118
        %p348 = pneg %p115
        %p349 = pneg %p139
        %p350 = pneg %p136
        %p351 = pneg %p160
        %p352 = pneg %p157
        %p353 = pneg %p186
        %p354 = pneg %p183
        %p355 = scmp.lt.s32.totalorder %s24, 1
        %s356 = scalar_select %p355, %s24, 1
        %s357 = smul.addr %s356, 8
        %s358 = scalar_lea.vmem %s6, %s357
        %s359 = smul.u32 8, %s24
        %s360 = smul.u32 8, %s24
        %s361 = smul.u32 8, %s24
        %p362 = scmp.lt.s32.totalorder %s24, 1
        %s363 = scalar_select %p362, %s24, 1
        %s364 = smul.addr %s363, 8
        %s365 = scalar_lea.vmem %s6, %s364
        %v366 = vld [vmem:[%s299] sm:$0xf]
        %v367 = vld [vmem:[%s299 + $0x4] sm:$0xf]
        %v368 = vld [vmem:[%s299 + $0x8] sm:$0xf]
        %v369 = vld [vmem:[%s299 + $0xc] sm:$0xf]
        %v370 = vld [vmem:[%s299 + $0x10] sm:$0xf]
        %v371 = vld [vmem:[%s299 + $0x14] sm:$0xf]
        %v372 = vld [vmem:[%s299 + $0x18] sm:$0xf]
        %v373 = vld [vmem:[%s299 + $0x1c] sm:$0xf]
        %v374 = vld [vmem:[%s299 + $0x20] sm:$0xf]
        %v375 = vld [vmem:[%s299 + $0x24] sm:$0xf]
        %v376 = vld [vmem:[%s299 + $0x28] sm:$0xf]
        %v377 = vld [vmem:[%s299 + $0x2c] sm:$0xf]
        %v378 = vld [vmem:[%s299 + $0x30] sm:$0xf]
        %v379 = vld [vmem:[%s299 + $0x34] sm:$0xf]
        %v380 = vld [vmem:[%s299 + $0x38] sm:$0xf]
        %v381 = vld [vmem:[%s299 + $0x3c] sm:$0xf]
        %v382 = vunpack.c.l.bf16 %v366
        %v383 = vunpack.c.l.bf16 %v367
        %v384 = vunpack.c.l.bf16 %v368
        %v385 = vunpack.c.l.bf16 %v369
        %v386 = vunpack.c.l.bf16 %v370
        %v387 = vunpack.c.l.bf16 %v371
        %v388 = vunpack.c.l.bf16 %v372
        %v389 = vunpack.c.l.bf16 %v373
        %v390 = vunpack.c.l.bf16 %v374
        %v391 = vunpack.c.l.bf16 %v375
        %v392 = vunpack.c.l.bf16 %v376
        %v393 = vunpack.c.l.bf16 %v377
        %v394 = vunpack.c.l.bf16 %v378
        %v395 = vunpack.c.l.bf16 %v379
        %v396 = vunpack.c.l.bf16 %v380
        %v397 = vunpack.c.l.bf16 %v381
        %v398 = vld [vmem:[%s308] sm:$0xf]
        %v399 = vld [vmem:[%s308 + $0x4] sm:$0xf]
        %v400 = vld [vmem:[%s308 + $0x8] sm:$0xf]
        %v401 = vld [vmem:[%s308 + $0xc] sm:$0xf]
        %v402 = vld [vmem:[%s308 + $0x10] sm:$0xf]
        %v403 = vld [vmem:[%s308 + $0x14] sm:$0xf]
        %v404 = vld [vmem:[%s308 + $0x18] sm:$0xf]
        %v405 = vld [vmem:[%s308 + $0x1c] sm:$0xf]
        %v406 = vld [vmem:[%s308 + $0x20] sm:$0xf]
        %v407 = vld [vmem:[%s308 + $0x24] sm:$0xf]
        %v408 = vld [vmem:[%s308 + $0x28] sm:$0xf]
        %v409 = vld [vmem:[%s308 + $0x2c] sm:$0xf]
        %v410 = vld [vmem:[%s308 + $0x30] sm:$0xf]
        %v411 = vld [vmem:[%s308 + $0x34] sm:$0xf]
        %v412 = vld [vmem:[%s308 + $0x38] sm:$0xf]
        %v413 = vld [vmem:[%s308 + $0x3c] sm:$0xf]
        %v414 = vunpack.c.l.bf16 %v398
        %v415 = vunpack.c.l.bf16 %v399
        %v416 = vunpack.c.l.bf16 %v400
        %v417 = vunpack.c.l.bf16 %v401
        %v418 = vunpack.c.l.bf16 %v402
        %v419 = vunpack.c.l.bf16 %v403
        %v420 = vunpack.c.l.bf16 %v404
        %v421 = vunpack.c.l.bf16 %v405
        %v422 = vunpack.c.l.bf16 %v406
        %v423 = vunpack.c.l.bf16 %v407
        %v424 = vunpack.c.l.bf16 %v408
        %v425 = vunpack.c.l.bf16 %v409
        %v426 = vunpack.c.l.bf16 %v410
        %v427 = vunpack.c.l.bf16 %v411
        %v428 = vunpack.c.l.bf16 %v412
        %v429 = vunpack.c.l.bf16 %v413
        %v430 = vadd.f32 %v382, %v414
        %v431 = vadd.f32 %v383, %v415
        %v432 = vadd.f32 %v384, %v416
        %v433 = vadd.f32 %v385, %v417
        %v434 = vadd.f32 %v386, %v418
        %v435 = vadd.f32 %v387, %v419
        %v436 = vadd.f32 %v388, %v420
        %v437 = vadd.f32 %v389, %v421
        %v438 = vadd.f32 %v390, %v422
        %v439 = vadd.f32 %v391, %v423
        %v440 = vadd.f32 %v392, %v424
        %v441 = vadd.f32 %v393, %v425
        %v442 = vadd.f32 %v394, %v426
        %v443 = vadd.f32 %v395, %v427
        %v444 = vadd.f32 %v396, %v428
        %v445 = vadd.f32 %v397, %v429
        %v446 = vld [vmem:[%s317] sm:$0xf]
        %v447 = vld [vmem:[%s317 + $0x4] sm:$0xf]
        %v448 = vld [vmem:[%s317 + $0x8] sm:$0xf]
        %v449 = vld [vmem:[%s317 + $0xc] sm:$0xf]
        %v450 = vld [vmem:[%s317 + $0x10] sm:$0xf]
        %v451 = vld [vmem:[%s317 + $0x14] sm:$0xf]
        %v452 = vld [vmem:[%s317 + $0x18] sm:$0xf]
        %v453 = vld [vmem:[%s317 + $0x1c] sm:$0xf]
        %v454 = vld [vmem:[%s317 + $0x20] sm:$0xf]
        %v455 = vld [vmem:[%s317 + $0x24] sm:$0xf]
        %v456 = vld [vmem:[%s317 + $0x28] sm:$0xf]
        %v457 = vld [vmem:[%s317 + $0x2c] sm:$0xf]
        %v458 = vld [vmem:[%s317 + $0x30] sm:$0xf]
        %v459 = vld [vmem:[%s317 + $0x34] sm:$0xf]
        %v460 = vld [vmem:[%s317 + $0x38] sm:$0xf]
        %v461 = vld [vmem:[%s317 + $0x3c] sm:$0xf]
        %v462 = vunpack.c.l.bf16 %v446
        %v463 = vunpack.c.l.bf16 %v447
        %v464 = vunpack.c.l.bf16 %v448
        %v465 = vunpack.c.l.bf16 %v449
        %v466 = vunpack.c.l.bf16 %v450
        %v467 = vunpack.c.l.bf16 %v451
        %v468 = vunpack.c.l.bf16 %v452
        %v469 = vunpack.c.l.bf16 %v453
        %v470 = vunpack.c.l.bf16 %v454
        %v471 = vunpack.c.l.bf16 %v455
        %v472 = vunpack.c.l.bf16 %v456
        %v473 = vunpack.c.l.bf16 %v457
        %v474 = vunpack.c.l.bf16 %v458
        %v475 = vunpack.c.l.bf16 %v459
        %v476 = vunpack.c.l.bf16 %v460
        %v477 = vunpack.c.l.bf16 %v461
        %v478 = vadd.f32 %v430, %v462
        %v479 = vadd.f32 %v431, %v463
        %v480 = vadd.f32 %v432, %v464
        %v481 = vadd.f32 %v433, %v465
        %v482 = vadd.f32 %v434, %v466
        %v483 = vadd.f32 %v435, %v467
        %v484 = vadd.f32 %v436, %v468
        %v485 = vadd.f32 %v437, %v469
        %v486 = vadd.f32 %v438, %v470
        %v487 = vadd.f32 %v439, %v471
        %v488 = vadd.f32 %v440, %v472
        %v489 = vadd.f32 %v441, %v473
        %v490 = vadd.f32 %v442, %v474
        %v491 = vadd.f32 %v443, %v475
        %v492 = vadd.f32 %v444, %v476
        %v493 = vadd.f32 %v445, %v477
        %v494 = vld [vmem:[%s3] sm:$0xff]
        %v495 = vld [vmem:[%s3 + $0x8] sm:$0xff]
        %v496 = vld [vmem:[%s3 + $0x10] sm:$0xff]
        %v497 = vld [vmem:[%s3 + $0x18] sm:$0xff]
        %v498 = vld [vmem:[%s3 + $0x20] sm:$0xff]
        %v499 = vld [vmem:[%s3 + $0x28] sm:$0xff]
        %500 = vxpose.xlu0.b32.start [1/16] %v478, 128
        %501 = vxpose.xlu0.b32.cont [2/16] %v479, 128
        %502 = vxpose.xlu0.b32.cont [3/16] 0.0, 128
        %503 = vxpose.xlu0.b32.cont [4/16] 0.0, 128
        %504 = vxpose.xlu0.b32.cont [5/16] 0.0, 128
        %505 = vxpose.xlu0.b32.cont [6/16] 0.0, 128
        %506 = vxpose.xlu0.b32.cont [7/16] 0.0, 128
        %507 = vxpose.xlu0.b32.cont [8/16] 0.0, 128
        %508 = vxpose.xlu0.b32.cont [9/16] 0.0, 128
        %509 = vxpose.xlu0.b32.cont [10/16] 0.0, 128
        %510 = vxpose.xlu0.b32.cont [11/16] 0.0, 128
        %511 = vxpose.xlu0.b32.cont [12/16] 0.0, 128
        %512 = vxpose.xlu0.b32.cont [13/16] 0.0, 128
        %513 = vxpose.xlu0.b32.cont [14/16] 0.0, 128
        %514 = vxpose.xlu0.b32.cont [15/16] 0.0, 128
        %515 = vxpose.xlu0.b32.end [16/16] 0.0, 128
        %v516 = vpop.trf.xlu0
        %v517 = vpop.trf.xlu0
        %v518 = vpop.trf.xlu0
        %v519 = vpop.trf.xlu0
        %v520 = vpop.trf.xlu0
        %v521 = vpop.trf.xlu0
        %v522 = vpop.trf.xlu0
        %v523 = vpop.trf.xlu0
        %v524 = vpop.trf.xlu0
        %v525 = vpop.trf.xlu0
        %v526 = vpop.trf.xlu0
        %v527 = vpop.trf.xlu0
        %v528 = vpop.trf.xlu0
        %v529 = vpop.trf.xlu0
        %v530 = vpop.trf.xlu0
        %v531 = vpop.trf.xlu0
        %532 = vxpose.xlu0.b32.start [1/16] %v480, 128
        %533 = vxpose.xlu0.b32.cont [2/16] %v481, 128
        %534 = vxpose.xlu0.b32.cont [3/16] 0.0, 128
        %535 = vxpose.xlu0.b32.cont [4/16] 0.0, 128
        %536 = vxpose.xlu0.b32.cont [5/16] 0.0, 128
        %537 = vxpose.xlu0.b32.cont [6/16] 0.0, 128
        %538 = vxpose.xlu0.b32.cont [7/16] 0.0, 128
        %539 = vxpose.xlu0.b32.cont [8/16] 0.0, 128
        %540 = vxpose.xlu0.b32.cont [9/16] 0.0, 128
        %541 = vxpose.xlu0.b32.cont [10/16] 0.0, 128
        %542 = vxpose.xlu0.b32.cont [11/16] 0.0, 128
        %543 = vxpose.xlu0.b32.cont [12/16] 0.0, 128
        %544 = vxpose.xlu0.b32.cont [13/16] 0.0, 128
        %545 = vxpose.xlu0.b32.cont [14/16] 0.0, 128
        %546 = vxpose.xlu0.b32.cont [15/16] 0.0, 128
        %547 = vxpose.xlu0.b32.end [16/16] 0.0, 128
        %v548 = vpop.trf.xlu0
        %v549 = vpop.trf.xlu0
        %v550 = vpop.trf.xlu0
        %v551 = vpop.trf.xlu0
        %v552 = vpop.trf.xlu0
        %v553 = vpop.trf.xlu0
        %v554 = vpop.trf.xlu0
        %v555 = vpop.trf.xlu0
        %v556 = vpop.trf.xlu0
        %v557 = vpop.trf.xlu0
        %v558 = vpop.trf.xlu0
        %v559 = vpop.trf.xlu0
        %v560 = vpop.trf.xlu0
        %v561 = vpop.trf.xlu0
        %v562 = vpop.trf.xlu0
        %v563 = vpop.trf.xlu0
        %564 = vxpose.xlu0.b32.start [1/16] %v482, 128
        %565 = vxpose.xlu0.b32.cont [2/16] %v483, 128
        %566 = vxpose.xlu0.b32.cont [3/16] 0.0, 128
        %567 = vxpose.xlu0.b32.cont [4/16] 0.0, 128
        %568 = vxpose.xlu0.b32.cont [5/16] 0.0, 128
        %569 = vxpose.xlu0.b32.cont [6/16] 0.0, 128
        %570 = vxpose.xlu0.b32.cont [7/16] 0.0, 128
        %571 = vxpose.xlu0.b32.cont [8/16] 0.0, 128
        %572 = vxpose.xlu0.b32.cont [9/16] 0.0, 128
        %573 = vxpose.xlu0.b32.cont [10/16] 0.0, 128
        %574 = vxpose.xlu0.b32.cont [11/16] 0.0, 128
        %575 = vxpose.xlu0.b32.cont [12/16] 0.0, 128
        %576 = vxpose.xlu0.b32.cont [13/16] 0.0, 128
        %577 = vxpose.xlu0.b32.cont [14/16] 0.0, 128
        %578 = vxpose.xlu0.b32.cont [15/16] 0.0, 128
        %579 = vxpose.xlu0.b32.end [16/16] 0.0, 128
        %v580 = vpop.trf.xlu0
        %v581 = vpop.trf.xlu0
        %v582 = vpop.trf.xlu0
        %v583 = vpop.trf.xlu0
        %v584 = vpop.trf.xlu0
        %v585 = vpop.trf.xlu0
        %v586 = vpop.trf.xlu0
        %v587 = vpop.trf.xlu0
        %v588 = vpop.trf.xlu0
        %v589 = vpop.trf.xlu0
        %v590 = vpop.trf.xlu0
        %v591 = vpop.trf.xlu0
        %v592 = vpop.trf.xlu0
        %v593 = vpop.trf.xlu0
        %v594 = vpop.trf.xlu0
        %v595 = vpop.trf.xlu0
        %596 = vxpose.xlu0.b32.start [1/16] %v484, 128
        %597 = vxpose.xlu0.b32.cont [2/16] %v485, 128
        %598 = vxpose.xlu0.b32.cont [3/16] 0.0, 128
        %599 = vxpose.xlu0.b32.cont [4/16] 0.0, 128
        %600 = vxpose.xlu0.b32.cont [5/16] 0.0, 128
        %601 = vxpose.xlu0.b32.cont [6/16] 0.0, 128
        %602 = vxpose.xlu0.b32.cont [7/16] 0.0, 128
        %603 = vxpose.xlu0.b32.cont [8/16] 0.0, 128
        %604 = vxpose.xlu0.b32.cont [9/16] 0.0, 128
        %605 = vxpose.xlu0.b32.cont [10/16] 0.0, 128
        %606 = vxpose.xlu0.b32.cont [11/16] 0.0, 128
        %607 = vxpose.xlu0.b32.cont [12/16] 0.0, 128
        %608 = vxpose.xlu0.b32.cont [13/16] 0.0, 128
        %609 = vxpose.xlu0.b32.cont [14/16] 0.0, 128
        %610 = vxpose.xlu0.b32.cont [15/16] 0.0, 128
        %611 = vxpose.xlu0.b32.end [16/16] 0.0, 128
        %v612 = vpop.trf.xlu0
        %v613 = vpop.trf.xlu0
        %v614 = vpop.trf.xlu0
        %v615 = vpop.trf.xlu0
        %v616 = vpop.trf.xlu0
        %v617 = vpop.trf.xlu0
        %v618 = vpop.trf.xlu0
        %v619 = vpop.trf.xlu0
        %v620 = vpop.trf.xlu0
        %v621 = vpop.trf.xlu0
        %v622 = vpop.trf.xlu0
        %v623 = vpop.trf.xlu0
        %v624 = vpop.trf.xlu0
        %v625 = vpop.trf.xlu0
        %v626 = vpop.trf.xlu0
        %v627 = vpop.trf.xlu0
        %628 = vxpose.xlu0.b32.start [1/16] %v486, 128
        %629 = vxpose.xlu0.b32.cont [2/16] %v487, 128
        %630 = vxpose.xlu0.b32.cont [3/16] 0.0, 128
        %631 = vxpose.xlu0.b32.cont [4/16] 0.0, 128
        %632 = vxpose.xlu0.b32.cont [5/16] 0.0, 128
        %633 = vxpose.xlu0.b32.cont [6/16] 0.0, 128
        %634 = vxpose.xlu0.b32.cont [7/16] 0.0, 128
        %635 = vxpose.xlu0.b32.cont [8/16] 0.0, 128
        %636 = vxpose.xlu0.b32.cont [9/16] 0.0, 128
        %637 = vxpose.xlu0.b32.cont [10/16] 0.0, 128
        %638 = vxpose.xlu0.b32.cont [11/16] 0.0, 128
        %639 = vxpose.xlu0.b32.cont [12/16] 0.0, 128
        %640 = vxpose.xlu0.b32.cont [13/16] 0.0, 128
        %641 = vxpose.xlu0.b32.cont [14/16] 0.0, 128
        %642 = vxpose.xlu0.b32.cont [15/16] 0.0, 128
        %643 = vxpose.xlu0.b32.end [16/16] 0.0, 128
        %v644 = vpop.trf.xlu0
        %v645 = vpop.trf.xlu0
        %v646 = vpop.trf.xlu0
        %v647 = vpop.trf.xlu0
        %v648 = vpop.trf.xlu0
        %v649 = vpop.trf.xlu0
        %v650 = vpop.trf.xlu0
        %v651 = vpop.trf.xlu0
        %v652 = vpop.trf.xlu0
        %v653 = vpop.trf.xlu0
        %v654 = vpop.trf.xlu0
        %v655 = vpop.trf.xlu0
        %v656 = vpop.trf.xlu0
        %v657 = vpop.trf.xlu0
        %v658 = vpop.trf.xlu0
        %v659 = vpop.trf.xlu0
        %660 = vxpose.xlu0.b32.start [1/16] %v488, 128
        %661 = vxpose.xlu0.b32.cont [2/16] %v489, 128
        %662 = vxpose.xlu0.b32.cont [3/16] 0.0, 128
        %663 = vxpose.xlu0.b32.cont [4/16] 0.0, 128
        %664 = vxpose.xlu0.b32.cont [5/16] 0.0, 128
        %665 = vxpose.xlu0.b32.cont [6/16] 0.0, 128
        %666 = vxpose.xlu0.b32.cont [7/16] 0.0, 128
        %667 = vxpose.xlu0.b32.cont [8/16] 0.0, 128
        %668 = vxpose.xlu0.b32.cont [9/16] 0.0, 128
        %669 = vxpose.xlu0.b32.cont [10/16] 0.0, 128
        %670 = vxpose.xlu0.b32.cont [11/16] 0.0, 128
        %671 = vxpose.xlu0.b32.cont [12/16] 0.0, 128
        %672 = vxpose.xlu0.b32.cont [13/16] 0.0, 128
        %673 = vxpose.xlu0.b32.cont [14/16] 0.0, 128
        %674 = vxpose.xlu0.b32.cont [15/16] 0.0, 128
        %675 = vxpose.xlu0.b32.end [16/16] 0.0, 128
        %v676 = vpop.trf.xlu0
        %v677 = vpop.trf.xlu0
        %v678 = vpop.trf.xlu0
        %v679 = vpop.trf.xlu0
        %v680 = vpop.trf.xlu0
        %v681 = vpop.trf.xlu0
        %v682 = vpop.trf.xlu0
        %v683 = vpop.trf.xlu0
        %v684 = vpop.trf.xlu0
        %v685 = vpop.trf.xlu0
        %v686 = vpop.trf.xlu0
        %v687 = vpop.trf.xlu0
        %v688 = vpop.trf.xlu0
        %v689 = vpop.trf.xlu0
        %v690 = vpop.trf.xlu0
        %v691 = vpop.trf.xlu0
        %692 = vxpose.xlu0.b32.start [1/16] %v490, 128
        %693 = vxpose.xlu0.b32.cont [2/16] %v491, 128
        %694 = vxpose.xlu0.b32.cont [3/16] 0.0, 128
        %695 = vxpose.xlu0.b32.cont [4/16] 0.0, 128
        %696 = vxpose.xlu0.b32.cont [5/16] 0.0, 128
        %697 = vxpose.xlu0.b32.cont [6/16] 0.0, 128
        %698 = vxpose.xlu0.b32.cont [7/16] 0.0, 128
        %699 = vxpose.xlu0.b32.cont [8/16] 0.0, 128
        %700 = vxpose.xlu0.b32.cont [9/16] 0.0, 128
        %701 = vxpose.xlu0.b32.cont [10/16] 0.0, 128
        %702 = vxpose.xlu0.b32.cont [11/16] 0.0, 128
        %703 = vxpose.xlu0.b32.cont [12/16] 0.0, 128
        %704 = vxpose.xlu0.b32.cont [13/16] 0.0, 128
        %705 = vxpose.xlu0.b32.cont [14/16] 0.0, 128
        %706 = vxpose.xlu0.b32.cont [15/16] 0.0, 128
        %707 = vxpose.xlu0.b32.end [16/16] 0.0, 128
        %v708 = vpop.trf.xlu0
        %v709 = vpop.trf.xlu0
        %v710 = vpop.trf.xlu0
        %v711 = vpop.trf.xlu0
        %v712 = vpop.trf.xlu0
        %v713 = vpop.trf.xlu0
        %v714 = vpop.trf.xlu0
        %v715 = vpop.trf.xlu0
        %v716 = vpop.trf.xlu0
        %v717 = vpop.trf.xlu0
        %v718 = vpop.trf.xlu0
        %v719 = vpop.trf.xlu0
        %v720 = vpop.trf.xlu0
        %v721 = vpop.trf.xlu0
        %v722 = vpop.trf.xlu0
        %v723 = vpop.trf.xlu0
        %724 = vxpose.xlu0.b32.start [1/16] %v492, 128
        %725 = vxpose.xlu0.b32.cont [2/16] %v493, 128
        %726 = vxpose.xlu0.b32.cont [3/16] 0.0, 128
        %727 = vxpose.xlu0.b32.cont [4/16] 0.0, 128
        %728 = vxpose.xlu0.b32.cont [5/16] 0.0, 128
        %729 = vxpose.xlu0.b32.cont [6/16] 0.0, 128
        %730 = vxpose.xlu0.b32.cont [7/16] 0.0, 128
        %731 = vxpose.xlu0.b32.cont [8/16] 0.0, 128
        %732 = vxpose.xlu0.b32.cont [9/16] 0.0, 128
        %733 = vxpose.xlu0.b32.cont [10/16] 0.0, 128
        %734 = vxpose.xlu0.b32.cont [11/16] 0.0, 128
        %735 = vxpose.xlu0.b32.cont [12/16] 0.0, 128
        %736 = vxpose.xlu0.b32.cont [13/16] 0.0, 128
        %737 = vxpose.xlu0.b32.cont [14/16] 0.0, 128
        %738 = vxpose.xlu0.b32.cont [15/16] 0.0, 128
        %739 = vxpose.xlu0.b32.end [16/16] 0.0, 128
        %v740 = vpop.trf.xlu0
        %v741 = vpop.trf.xlu0
        %v742 = vpop.trf.xlu0
        %v743 = vpop.trf.xlu0
        %v744 = vpop.trf.xlu0
        %v745 = vpop.trf.xlu0
        %v746 = vpop.trf.xlu0
        %v747 = vpop.trf.xlu0
        %v748 = vpop.trf.xlu0
        %v749 = vpop.trf.xlu0
        %v750 = vpop.trf.xlu0
        %v751 = vpop.trf.xlu0
        %v752 = vpop.trf.xlu0
        %v753 = vpop.trf.xlu0
        %v754 = vpop.trf.xlu0
        %v755 = vpop.trf.xlu0
        %vm756 = vcmask 130048
        %v758 = vsel %vm756, %v516, 0
        %v761 = vsel %vm756, %v517, 0
        %v764 = vsel %vm756, %v518, 0
        %v767 = vsel %vm756, %v519, 0
        %v770 = vsel %vm756, %v520, 0
        %v773 = vsel %vm756, %v521, 0
        %v776 = vsel %vm756, %v522, 0
        %v779 = vsel %vm756, %v523, 0
        %v782 = vsel %vm756, %v524, 0
        %v785 = vsel %vm756, %v525, 0
        %v788 = vsel %vm756, %v526, 0
        %v791 = vsel %vm756, %v527, 0
        %v794 = vsel %vm756, %v528, 0
        %v797 = vsel %vm756, %v529, 0
        %v800 = vsel %vm756, %v530, 0
        %v803 = vsel %vm756, %v531, 0
        %v806 = vsel %vm756, %v548, 0
        %v809 = vsel %vm756, %v549, 0
        %v812 = vsel %vm756, %v550, 0
        %v815 = vsel %vm756, %v551, 0
        %v818 = vsel %vm756, %v552, 0
        %v821 = vsel %vm756, %v553, 0
        %v824 = vsel %vm756, %v554, 0
        %v827 = vsel %vm756, %v555, 0
        %v830 = vsel %vm756, %v556, 0
        %v833 = vsel %vm756, %v557, 0
        %v836 = vsel %vm756, %v558, 0
        %v839 = vsel %vm756, %v559, 0
        %v842 = vsel %vm756, %v560, 0
        %v845 = vsel %vm756, %v561, 0
        %v848 = vsel %vm756, %v562, 0
        %v851 = vsel %vm756, %v563, 0
        %v854 = vsel %vm756, %v580, 0
        %v857 = vsel %vm756, %v581, 0
        %v860 = vsel %vm756, %v582, 0
        %v863 = vsel %vm756, %v583, 0
        %v866 = vsel %vm756, %v584, 0
        %v869 = vsel %vm756, %v585, 0
        %v872 = vsel %vm756, %v586, 0
        %v875 = vsel %vm756, %v587, 0
        %v878 = vsel %vm756, %v588, 0
        %v881 = vsel %vm756, %v589, 0
        %v884 = vsel %vm756, %v590, 0
        %v887 = vsel %vm756, %v591, 0
        %v890 = vsel %vm756, %v592, 0
        %v893 = vsel %vm756, %v593, 0
        %v896 = vsel %vm756, %v594, 0
        %v899 = vsel %vm756, %v595, 0
        %v902 = vsel %vm756, %v612, 0
        %v905 = vsel %vm756, %v613, 0
        %v908 = vsel %vm756, %v614, 0
        %v911 = vsel %vm756, %v615, 0
        %v914 = vsel %vm756, %v616, 0
        %v917 = vsel %vm756, %v617, 0
        %v920 = vsel %vm756, %v618, 0
        %v923 = vsel %vm756, %v619, 0
        %v926 = vsel %vm756, %v620, 0
        %v929 = vsel %vm756, %v621, 0
        %v932 = vsel %vm756, %v622, 0
        %v935 = vsel %vm756, %v623, 0
        %v938 = vsel %vm756, %v624, 0
        %v941 = vsel %vm756, %v625, 0
        %v944 = vsel %vm756, %v626, 0
        %v947 = vsel %vm756, %v627, 0
        %v950 = vsel %vm756, %v644, 0
        %v953 = vsel %vm756, %v645, 0
        %v956 = vsel %vm756, %v646, 0
        %v959 = vsel %vm756, %v647, 0
        %v962 = vsel %vm756, %v648, 0
        %v965 = vsel %vm756, %v649, 0
        %v968 = vsel %vm756, %v650, 0
        %v971 = vsel %vm756, %v651, 0
        %v974 = vsel %vm756, %v652, 0
        %v977 = vsel %vm756, %v653, 0
        %v980 = vsel %vm756, %v654, 0
        %v983 = vsel %vm756, %v655, 0
        %v986 = vsel %vm756, %v656, 0
        %v989 = vsel %vm756, %v657, 0
        %v992 = vsel %vm756, %v658, 0
        %v995 = vsel %vm756, %v659, 0
        %v998 = vsel %vm756, %v676, 0
        %v1001 = vsel %vm756, %v677, 0
        %v1004 = vsel %vm756, %v678, 0
        %v1007 = vsel %vm756, %v679, 0
        %v1010 = vsel %vm756, %v680, 0
        %v1013 = vsel %vm756, %v681, 0
        %v1016 = vsel %vm756, %v682, 0
        %v1019 = vsel %vm756, %v683, 0
        %v1022 = vsel %vm756, %v684, 0
        %v1025 = vsel %vm756, %v685, 0
        %v1028 = vsel %vm756, %v686, 0
        %v1031 = vsel %vm756, %v687, 0
        %v1034 = vsel %vm756, %v688, 0
        %v1037 = vsel %vm756, %v689, 0
        %v1040 = vsel %vm756, %v690, 0
        %v1043 = vsel %vm756, %v691, 0
        %v1046 = vsel %vm756, %v708, 0
        %v1049 = vsel %vm756, %v709, 0
        %v1052 = vsel %vm756, %v710, 0
        %v1055 = vsel %vm756, %v711, 0
        %v1058 = vsel %vm756, %v712, 0
        %v1061 = vsel %vm756, %v713, 0
        %v1064 = vsel %vm756, %v714, 0
        %v1067 = vsel %vm756, %v715, 0
        %v1070 = vsel %vm756, %v716, 0
        %v1073 = vsel %vm756, %v717, 0
        %v1076 = vsel %vm756, %v718, 0
        %v1079 = vsel %vm756, %v719, 0
        %v1082 = vsel %vm756, %v720, 0
        %v1085 = vsel %vm756, %v721, 0
        %v1088 = vsel %vm756, %v722, 0
        %v1091 = vsel %vm756, %v723, 0
        %v1094 = vsel %vm756, %v740, 0
        %v1097 = vsel %vm756, %v741, 0
        %v1100 = vsel %vm756, %v742, 0
        %v1103 = vsel %vm756, %v743, 0
        %v1106 = vsel %vm756, %v744, 0
        %v1109 = vsel %vm756, %v745, 0
        %v1112 = vsel %vm756, %v746, 0
        %v1115 = vsel %vm756, %v747, 0
        %v1118 = vsel %vm756, %v748, 0
        %v1121 = vsel %vm756, %v749, 0
        %v1124 = vsel %vm756, %v750, 0
        %v1127 = vsel %vm756, %v751, 0
        %v1130 = vsel %vm756, %v752, 0
        %v1133 = vsel %vm756, %v753, 0
        %v1136 = vsel %vm756, %v754, 0
        %v1139 = vsel %vm756, %v755, 0
        %v1142 = vsel %vm756, %v494, 0
        %v1145 = vsel %vm756, %v495, 0
        %v1148 = vsel %vm756, %v496, 0
        %v1151 = vsel %vm756, %v497, 0
        %v1154 = vsel %vm756, %v498, 0
        %v1157 = vsel %vm756, %v499, 0
        %1159 = vmatprep.subr.mxu0 0.0
        %1160 = vmatpush1.xpose.msra.mxu0 0.0
        %1161 = vmatprep.subr.mxu0 0.0
        %1162 = vmatpush1.xpose.msra.mxu0 0.0
        %1163 = vmatprep.subr.mxu0 0.0
        %1164 = vmatpush1.xpose.msra.mxu0 0.0
        %1165 = vmatprep.subr.mxu0 0.0
        %1166 = vmatpush1.xpose.msra.mxu0 0.0
        %1167 = vmatprep.subr.mxu0 0.0
        %1168 = vmatpush1.xpose.msra.mxu0 0.0
        %1169 = vmatprep.subr.mxu0 0.0
        %1170 = vmatpush1.xpose.msra.mxu0 0.0
        %1171 = vmatprep.subr.mxu0 0.0
        %1172 = vmatpush1.xpose.msra.mxu0 0.0
        %1173 = vmatprep.subr.mxu0 0.0
        %1174 = vmatpush1.xpose.msra.mxu0 0.0
        %1175 = vmatprep.subr.mxu0 0.0
        %1176 = vmatpush1.xpose.msra.mxu0 0.0
        %1177 = vmatprep.subr.mxu0 0.0
        %1178 = vmatpush1.xpose.msra.mxu0 0.0
        %1179 = vmatprep.subr.mxu0 0.0
        %1180 = vmatpush1.xpose.msra.mxu0 %v1157
        %1181 = vmatprep.subr.mxu0 0.0
        %1182 = vmatpush1.xpose.msra.mxu0 %v1154
        %1183 = vmatprep.subr.mxu0 0.0
        %1184 = vmatpush1.xpose.msra.mxu0 %v1151
        %1185 = vmatprep.subr.mxu0 0.0
        %1186 = vmatpush1.xpose.msra.mxu0 %v1148
        %1187 = vmatprep.subr.mxu0 0.0
        %1188 = vmatpush1.xpose.msra.mxu0 %v1145
        %1189 = vmatprep.subr.mxu0 0.0
        %1190 = vmatpush1.xpose.msra.mxu0 %v1142
        %1191 = vmatprep.subr.mxu0 0.0
        %1192 = vmatpush2.xpose.msra.mxu0 0.0
        %1193 = vmatprep.subr.mxu0 0.0
        %1194 = vmatpush2.xpose.msra.mxu0 0.0
        %1195 = vmatprep.subr.mxu0 0.0
        %1196 = vmatpush2.xpose.msra.mxu0 0.0
        %1197 = vmatprep.subr.mxu0 0.0
        %1198 = vmatpush2.xpose.msra.mxu0 0.0
        %1199 = vmatprep.subr.mxu0 0.0
        %1200 = vmatpush2.xpose.msra.mxu0 0.0
        %1201 = vmatprep.subr.mxu0 0.0
        %1202 = vmatpush2.xpose.msra.mxu0 0.0
        %1203 = vmatprep.subr.mxu0 0.0
        %1204 = vmatpush2.xpose.msra.mxu0 0.0
        %1205 = vmatprep.subr.mxu0 0.0
        %1206 = vmatpush2.xpose.msra.mxu0 0.0
        %1207 = vmatprep.subr.mxu0 0.0
        %1208 = vmatpush2.xpose.msra.mxu0 0.0
        %1209 = vmatprep.subr.mxu0 0.0
        %1210 = vmatpush2.xpose.msra.mxu0 0.0
        %1211 = vmatprep.subr.mxu0 0.0
        %1212 = vmatpush2.xpose.msra.mxu0 0.0
        %1213 = vmatprep.subr.mxu0 0.0
        %1214 = vmatpush2.xpose.msra.mxu0 0.0
        %1215 = vmatprep.subr.mxu0 0.0
        %1216 = vmatpush2.xpose.msra.mxu0 0.0
        %1217 = vmatprep.subr.mxu0 0.0
        %1218 = vmatpush2.xpose.msra.mxu0 0.0
        %1219 = vmatprep.subr.mxu0 0.0
        %1220 = vmatpush2.xpose.msra.mxu0 0.0
        %1221 = vmatprep.subr.mxu0 0.0
        %1222 = vmatpush2.xpose.msra.mxu0 0.0
        %1223 = vmatprep.mubr.f32.mxu0 0.0
        %1224 = vmatmul.mubr.f32.gmra.mxu0 %v758
        %v1225 = vpop.f32.mrf.mxu0
        %v1226 = vadd.f32 0.0, %v1225
        %v1227 = vpop.f32.mrf.mxu0
        %1228 = vmatprep.mubr.f32.mxu0 0.0
        %1229 = vmatmul.mubr.f32.gmra.mxu0 %v761
        %v1230 = vpop.f32.mrf.mxu0
        %v1231 = vadd.f32 0.0, %v1230
        %v1232 = vpop.f32.mrf.mxu0
        %1233 = vmatprep.mubr.f32.mxu0 0.0
        %1234 = vmatmul.mubr.f32.gmra.mxu0 %v764
        %v1235 = vpop.f32.mrf.mxu0
        %v1236 = vadd.f32 0.0, %v1235
        %v1237 = vpop.f32.mrf.mxu0
        %1238 = vmatprep.mubr.f32.mxu0 0.0
        %1239 = vmatmul.mubr.f32.gmra.mxu0 %v767
        %v1240 = vpop.f32.mrf.mxu0
        %v1241 = vadd.f32 0.0, %v1240
        %v1242 = vpop.f32.mrf.mxu0
        %1243 = vmatprep.mubr.f32.mxu0 0.0
        %1244 = vmatmul.mubr.f32.gmra.mxu0 %v770
        %v1245 = vpop.f32.mrf.mxu0
        %v1246 = vadd.f32 0.0, %v1245
        %v1247 = vpop.f32.mrf.mxu0
        %1248 = vmatprep.mubr.f32.mxu0 0.0
        %1249 = vmatmul.mubr.f32.gmra.mxu0 %v773
        %v1250 = vpop.f32.mrf.mxu0
        %v1251 = vadd.f32 0.0, %v1250
        %v1252 = vpop.f32.mrf.mxu0
        %1253 = vmatprep.mubr.f32.mxu0 0.0
        %1254 = vmatmul.mubr.f32.gmra.mxu0 %v776
        %v1255 = vpop.f32.mrf.mxu0
        %v1256 = vadd.f32 0.0, %v1255
        %v1257 = vpop.f32.mrf.mxu0
        %1258 = vmatprep.mubr.f32.mxu0 0.0
        %1259 = vmatmul.mubr.f32.gmra.mxu0 %v779
        %v1260 = vpop.f32.mrf.mxu0
        %v1261 = vadd.f32 0.0, %v1260
        %v1262 = vpop.f32.mrf.mxu0
        %1263 = vmatprep.mubr.f32.mxu0 0.0
        %1264 = vmatmul.mubr.f32.gmra.mxu0 %v782
        %v1265 = vpop.f32.mrf.mxu0
        %v1266 = vadd.f32 0.0, %v1265
        %v1267 = vpop.f32.mrf.mxu0
        %1268 = vmatprep.mubr.f32.mxu0 0.0
        %1269 = vmatmul.mubr.f32.gmra.mxu0 %v785
        %v1270 = vpop.f32.mrf.mxu0
        %v1271 = vadd.f32 0.0, %v1270
        %v1272 = vpop.f32.mrf.mxu0
        %1273 = vmatprep.mubr.f32.mxu0 0.0
        %1274 = vmatmul.mubr.f32.gmra.mxu0 %v788
        %v1275 = vpop.f32.mrf.mxu0
        %v1276 = vadd.f32 0.0, %v1275
        %v1277 = vpop.f32.mrf.mxu0
        %1278 = vmatprep.mubr.f32.mxu0 0.0
        %1279 = vmatmul.mubr.f32.gmra.mxu0 %v791
        %v1280 = vpop.f32.mrf.mxu0
        %v1281 = vadd.f32 0.0, %v1280
        %v1282 = vpop.f32.mrf.mxu0
        %1283 = vmatprep.mubr.f32.mxu0 0.0
        %1284 = vmatmul.mubr.f32.gmra.mxu0 %v794
        %v1285 = vpop.f32.mrf.mxu0
        %v1286 = vadd.f32 0.0, %v1285
        %v1287 = vpop.f32.mrf.mxu0
        %1288 = vmatprep.mubr.f32.mxu0 0.0
        %1289 = vmatmul.mubr.f32.gmra.mxu0 %v797
        %v1290 = vpop.f32.mrf.mxu0
        %v1291 = vadd.f32 0.0, %v1290
        %v1292 = vpop.f32.mrf.mxu0
        %1293 = vmatprep.mubr.f32.mxu0 0.0
        %1294 = vmatmul.mubr.f32.gmra.mxu0 %v800
        %v1295 = vpop.f32.mrf.mxu0
        %v1296 = vadd.f32 0.0, %v1295
        %v1297 = vpop.f32.mrf.mxu0
        %1298 = vmatprep.mubr.f32.mxu0 0.0
        %1299 = vmatmul.mubr.f32.gmra.mxu0 %v803
        %v1300 = vpop.f32.mrf.mxu0
        %v1301 = vadd.f32 0.0, %v1300
        %v1302 = vpop.f32.mrf.mxu0
        %1303 = vmatprep.mubr.f32.mxu0 0.0
        %1304 = vmatmul.mubr.f32.gmra.mxu0 %v806
        %v1305 = vpop.f32.mrf.mxu0
        %v1306 = vadd.f32 0.0, %v1305
        %v1307 = vpop.f32.mrf.mxu0
        %1308 = vmatprep.mubr.f32.mxu0 0.0
        %1309 = vmatmul.mubr.f32.gmra.mxu0 %v809
        %v1310 = vpop.f32.mrf.mxu0
        %v1311 = vadd.f32 0.0, %v1310
        %v1312 = vpop.f32.mrf.mxu0
        %1313 = vmatprep.mubr.f32.mxu0 0.0
        %1314 = vmatmul.mubr.f32.gmra.mxu0 %v812
        %v1315 = vpop.f32.mrf.mxu0
        %v1316 = vadd.f32 0.0, %v1315
        %v1317 = vpop.f32.mrf.mxu0
        %1318 = vmatprep.mubr.f32.mxu0 0.0
        %1319 = vmatmul.mubr.f32.gmra.mxu0 %v815
        %v1320 = vpop.f32.mrf.mxu0
        %v1321 = vadd.f32 0.0, %v1320
        %v1322 = vpop.f32.mrf.mxu0
        %1323 = vmatprep.mubr.f32.mxu0 0.0
        %1324 = vmatmul.mubr.f32.gmra.mxu0 %v818
        %v1325 = vpop.f32.mrf.mxu0
        %v1326 = vadd.f32 0.0, %v1325
        %v1327 = vpop.f32.mrf.mxu0
        %1328 = vmatprep.mubr.f32.mxu0 0.0
        %1329 = vmatmul.mubr.f32.gmra.mxu0 %v821
        %v1330 = vpop.f32.mrf.mxu0
        %v1331 = vadd.f32 0.0, %v1330
        %v1332 = vpop.f32.mrf.mxu0
        %1333 = vmatprep.mubr.f32.mxu0 0.0
        %1334 = vmatmul.mubr.f32.gmra.mxu0 %v824
        %v1335 = vpop.f32.mrf.mxu0
        %v1336 = vadd.f32 0.0, %v1335
        %v1337 = vpop.f32.mrf.mxu0
        %1338 = vmatprep.mubr.f32.mxu0 0.0
        %1339 = vmatmul.mubr.f32.gmra.mxu0 %v827
        %v1340 = vpop.f32.mrf.mxu0
        %v1341 = vadd.f32 0.0, %v1340
        %v1342 = vpop.f32.mrf.mxu0
        %1343 = vmatprep.mubr.f32.mxu0 0.0
        %1344 = vmatmul.mubr.f32.gmra.mxu0 %v830
        %v1345 = vpop.f32.mrf.mxu0
        %v1346 = vadd.f32 0.0, %v1345
        %v1347 = vpop.f32.mrf.mxu0
        %1348 = vmatprep.mubr.f32.mxu0 0.0
        %1349 = vmatmul.mubr.f32.gmra.mxu0 %v833
        %v1350 = vpop.f32.mrf.mxu0
        %v1351 = vadd.f32 0.0, %v1350
        %v1352 = vpop.f32.mrf.mxu0
        %1353 = vmatprep.mubr.f32.mxu0 0.0
        %1354 = vmatmul.mubr.f32.gmra.mxu0 %v836
        %v1355 = vpop.f32.mrf.mxu0
        %v1356 = vadd.f32 0.0, %v1355
        %v1357 = vpop.f32.mrf.mxu0
        %1358 = vmatprep.mubr.f32.mxu0 0.0
        %1359 = vmatmul.mubr.f32.gmra.mxu0 %v839
        %v1360 = vpop.f32.mrf.mxu0
        %v1361 = vadd.f32 0.0, %v1360
        %v1362 = vpop.f32.mrf.mxu0
        %1363 = vmatprep.mubr.f32.mxu0 0.0
        %1364 = vmatmul.mubr.f32.gmra.mxu0 %v842
        %v1365 = vpop.f32.mrf.mxu0
        %v1366 = vadd.f32 0.0, %v1365
        %v1367 = vpop.f32.mrf.mxu0
        %1368 = vmatprep.mubr.f32.mxu0 0.0
        %1369 = vmatmul.mubr.f32.gmra.mxu0 %v845
        %v1370 = vpop.f32.mrf.mxu0
        %v1371 = vadd.f32 0.0, %v1370
        %v1372 = vpop.f32.mrf.mxu0
        %1373 = vmatprep.mubr.f32.mxu0 0.0
        %1374 = vmatmul.mubr.f32.gmra.mxu0 %v848
        %v1375 = vpop.f32.mrf.mxu0
        %v1376 = vadd.f32 0.0, %v1375
        %v1377 = vpop.f32.mrf.mxu0
        %1378 = vmatprep.mubr.f32.mxu0 0.0
        %1379 = vmatmul.mubr.f32.gmra.mxu0 %v851
        %v1380 = vpop.f32.mrf.mxu0
        %v1381 = vadd.f32 0.0, %v1380
        %v1382 = vpop.f32.mrf.mxu0
        %1383 = vmatprep.mubr.f32.mxu0 0.0
        %1384 = vmatmul.mubr.f32.gmra.mxu0 %v854
        %v1385 = vpop.f32.mrf.mxu0
        %v1386 = vadd.f32 0.0, %v1385
        %v1387 = vpop.f32.mrf.mxu0
        %1388 = vmatprep.mubr.f32.mxu0 0.0
        %1389 = vmatmul.mubr.f32.gmra.mxu0 %v857
        %v1390 = vpop.f32.mrf.mxu0
        %v1391 = vadd.f32 0.0, %v1390
        %v1392 = vpop.f32.mrf.mxu0
        %1393 = vmatprep.mubr.f32.mxu0 0.0
        %1394 = vmatmul.mubr.f32.gmra.mxu0 %v860
        %v1395 = vpop.f32.mrf.mxu0
        %v1396 = vadd.f32 0.0, %v1395
        %v1397 = vpop.f32.mrf.mxu0
        %1398 = vmatprep.mubr.f32.mxu0 0.0
        %1399 = vmatmul.mubr.f32.gmra.mxu0 %v863
        %v1400 = vpop.f32.mrf.mxu0
        %v1401 = vadd.f32 0.0, %v1400
        %v1402 = vpop.f32.mrf.mxu0
        %1403 = vmatprep.mubr.f32.mxu0 0.0
        %1404 = vmatmul.mubr.f32.gmra.mxu0 %v866
        %v1405 = vpop.f32.mrf.mxu0
        %v1406 = vadd.f32 0.0, %v1405
        %v1407 = vpop.f32.mrf.mxu0
        %1408 = vmatprep.mubr.f32.mxu0 0.0
        %1409 = vmatmul.mubr.f32.gmra.mxu0 %v869
        %v1410 = vpop.f32.mrf.mxu0
        %v1411 = vadd.f32 0.0, %v1410
        %v1412 = vpop.f32.mrf.mxu0
        %1413 = vmatprep.mubr.f32.mxu0 0.0
        %1414 = vmatmul.mubr.f32.gmra.mxu0 %v872
        %v1415 = vpop.f32.mrf.mxu0
        %v1416 = vadd.f32 0.0, %v1415
        %v1417 = vpop.f32.mrf.mxu0
        %1418 = vmatprep.mubr.f32.mxu0 0.0
        %1419 = vmatmul.mubr.f32.gmra.mxu0 %v875
        %v1420 = vpop.f32.mrf.mxu0
        %v1421 = vadd.f32 0.0, %v1420
        %v1422 = vpop.f32.mrf.mxu0
        %1423 = vmatprep.mubr.f32.mxu0 0.0
        %1424 = vmatmul.mubr.f32.gmra.mxu0 %v878
        %v1425 = vpop.f32.mrf.mxu0
        %v1426 = vadd.f32 0.0, %v1425
        %v1427 = vpop.f32.mrf.mxu0
        %1428 = vmatprep.mubr.f32.mxu0 0.0
        %1429 = vmatmul.mubr.f32.gmra.mxu0 %v881
        %v1430 = vpop.f32.mrf.mxu0
        %v1431 = vadd.f32 0.0, %v1430
        %v1432 = vpop.f32.mrf.mxu0
        %1433 = vmatprep.mubr.f32.mxu0 0.0
        %1434 = vmatmul.mubr.f32.gmra.mxu0 %v884
        %v1435 = vpop.f32.mrf.mxu0
        %v1436 = vadd.f32 0.0, %v1435
        %v1437 = vpop.f32.mrf.mxu0
        %1438 = vmatprep.mubr.f32.mxu0 0.0
        %1439 = vmatmul.mubr.f32.gmra.mxu0 %v887
        %v1440 = vpop.f32.mrf.mxu0
        %v1441 = vadd.f32 0.0, %v1440
        %v1442 = vpop.f32.mrf.mxu0
        %1443 = vmatprep.mubr.f32.mxu0 0.0
        %1444 = vmatmul.mubr.f32.gmra.mxu0 %v890
        %v1445 = vpop.f32.mrf.mxu0
        %v1446 = vadd.f32 0.0, %v1445
        %v1447 = vpop.f32.mrf.mxu0
        %1448 = vmatprep.mubr.f32.mxu0 0.0
        %1449 = vmatmul.mubr.f32.gmra.mxu0 %v893
        %v1450 = vpop.f32.mrf.mxu0
        %v1451 = vadd.f32 0.0, %v1450
        %v1452 = vpop.f32.mrf.mxu0
        %1453 = vmatprep.mubr.f32.mxu0 0.0
        %1454 = vmatmul.mubr.f32.gmra.mxu0 %v896
        %v1455 = vpop.f32.mrf.mxu0
        %v1456 = vadd.f32 0.0, %v1455
        %v1457 = vpop.f32.mrf.mxu0
        %1458 = vmatprep.mubr.f32.mxu0 0.0
        %1459 = vmatmul.mubr.f32.gmra.mxu0 %v899
        %v1460 = vpop.f32.mrf.mxu0
        %v1461 = vadd.f32 0.0, %v1460
        %v1462 = vpop.f32.mrf.mxu0
        %1463 = vmatprep.mubr.f32.mxu0 0.0
        %1464 = vmatmul.mubr.f32.gmra.mxu0 %v902
        %v1465 = vpop.f32.mrf.mxu0
        %v1466 = vadd.f32 0.0, %v1465
        %v1467 = vpop.f32.mrf.mxu0
        %1468 = vmatprep.mubr.f32.mxu0 0.0
        %1469 = vmatmul.mubr.f32.gmra.mxu0 %v905
        %v1470 = vpop.f32.mrf.mxu0
        %v1471 = vadd.f32 0.0, %v1470
        %v1472 = vpop.f32.mrf.mxu0
        %1473 = vmatprep.mubr.f32.mxu0 0.0
        %1474 = vmatmul.mubr.f32.gmra.mxu0 %v908
        %v1475 = vpop.f32.mrf.mxu0
        %v1476 = vadd.f32 0.0, %v1475
        %v1477 = vpop.f32.mrf.mxu0
        %1478 = vmatprep.mubr.f32.mxu0 0.0
        %1479 = vmatmul.mubr.f32.gmra.mxu0 %v911
        %v1480 = vpop.f32.mrf.mxu0
        %v1481 = vadd.f32 0.0, %v1480
        %v1482 = vpop.f32.mrf.mxu0
        %1483 = vmatprep.mubr.f32.mxu0 0.0
        %1484 = vmatmul.mubr.f32.gmra.mxu0 %v914
        %v1485 = vpop.f32.mrf.mxu0
        %v1486 = vadd.f32 0.0, %v1485
        %v1487 = vpop.f32.mrf.mxu0
        %1488 = vmatprep.mubr.f32.mxu0 0.0
        %1489 = vmatmul.mubr.f32.gmra.mxu0 %v917
        %v1490 = vpop.f32.mrf.mxu0
        %v1491 = vadd.f32 0.0, %v1490
        %v1492 = vpop.f32.mrf.mxu0
        %1493 = vmatprep.mubr.f32.mxu0 0.0
        %1494 = vmatmul.mubr.f32.gmra.mxu0 %v920
        %v1495 = vpop.f32.mrf.mxu0
        %v1496 = vadd.f32 0.0, %v1495
        %v1497 = vpop.f32.mrf.mxu0
        %1498 = vmatprep.mubr.f32.mxu0 0.0
        %1499 = vmatmul.mubr.f32.gmra.mxu0 %v923
        %v1500 = vpop.f32.mrf.mxu0
        %v1501 = vadd.f32 0.0, %v1500
        %v1502 = vpop.f32.mrf.mxu0
        %1503 = vmatprep.mubr.f32.mxu0 0.0
        %1504 = vmatmul.mubr.f32.gmra.mxu0 %v926
        %v1505 = vpop.f32.mrf.mxu0
        %v1506 = vadd.f32 0.0, %v1505
        %v1507 = vpop.f32.mrf.mxu0
        %1508 = vmatprep.mubr.f32.mxu0 0.0
        %1509 = vmatmul.mubr.f32.gmra.mxu0 %v929
        %v1510 = vpop.f32.mrf.mxu0
        %v1511 = vadd.f32 0.0, %v1510
        %v1512 = vpop.f32.mrf.mxu0
        %1513 = vmatprep.mubr.f32.mxu0 0.0
        %1514 = vmatmul.mubr.f32.gmra.mxu0 %v932
        %v1515 = vpop.f32.mrf.mxu0
        %v1516 = vadd.f32 0.0, %v1515
        %v1517 = vpop.f32.mrf.mxu0
        %1518 = vmatprep.mubr.f32.mxu0 0.0
        %1519 = vmatmul.mubr.f32.gmra.mxu0 %v935
        %v1520 = vpop.f32.mrf.mxu0
        %v1521 = vadd.f32 0.0, %v1520
        %v1522 = vpop.f32.mrf.mxu0
        %1523 = vmatprep.mubr.f32.mxu0 0.0
        %1524 = vmatmul.mubr.f32.gmra.mxu0 %v938
        %v1525 = vpop.f32.mrf.mxu0
        %v1526 = vadd.f32 0.0, %v1525
        %v1527 = vpop.f32.mrf.mxu0
        %1528 = vmatprep.mubr.f32.mxu0 0.0
        %1529 = vmatmul.mubr.f32.gmra.mxu0 %v941
        %v1530 = vpop.f32.mrf.mxu0
        %v1531 = vadd.f32 0.0, %v1530
        %v1532 = vpop.f32.mrf.mxu0
        %1533 = vmatprep.mubr.f32.mxu0 0.0
        %1534 = vmatmul.mubr.f32.gmra.mxu0 %v944
        %v1535 = vpop.f32.mrf.mxu0
        %v1536 = vadd.f32 0.0, %v1535
        %v1537 = vpop.f32.mrf.mxu0
        %1538 = vmatprep.mubr.f32.mxu0 0.0
        %1539 = vmatmul.mubr.f32.gmra.mxu0 %v947
        %v1540 = vpop.f32.mrf.mxu0
        %v1541 = vadd.f32 0.0, %v1540
        %v1542 = vpop.f32.mrf.mxu0
        %1543 = vmatprep.mubr.f32.mxu0 0.0
        %1544 = vmatmul.mubr.f32.gmra.mxu0 %v950
        %v1545 = vpop.f32.mrf.mxu0
        %v1546 = vadd.f32 0.0, %v1545
        %v1547 = vpop.f32.mrf.mxu0
        %1548 = vmatprep.mubr.f32.mxu0 0.0
        %1549 = vmatmul.mubr.f32.gmra.mxu0 %v953
        %v1550 = vpop.f32.mrf.mxu0
        %v1551 = vadd.f32 0.0, %v1550
        %v1552 = vpop.f32.mrf.mxu0
        %1553 = vmatprep.mubr.f32.mxu0 0.0
        %1554 = vmatmul.mubr.f32.gmra.mxu0 %v956
        %v1555 = vpop.f32.mrf.mxu0
        %v1556 = vadd.f32 0.0, %v1555
        %v1557 = vpop.f32.mrf.mxu0
        %1558 = vmatprep.mubr.f32.mxu0 0.0
        %1559 = vmatmul.mubr.f32.gmra.mxu0 %v959
        %v1560 = vpop.f32.mrf.mxu0
        %v1561 = vadd.f32 0.0, %v1560
        %v1562 = vpop.f32.mrf.mxu0
        %1563 = vmatprep.mubr.f32.mxu0 0.0
        %1564 = vmatmul.mubr.f32.gmra.mxu0 %v962
        %v1565 = vpop.f32.mrf.mxu0
        %v1566 = vadd.f32 0.0, %v1565
        %v1567 = vpop.f32.mrf.mxu0
        %1568 = vmatprep.mubr.f32.mxu0 0.0
        %1569 = vmatmul.mubr.f32.gmra.mxu0 %v965
        %v1570 = vpop.f32.mrf.mxu0
        %v1571 = vadd.f32 0.0, %v1570
        %v1572 = vpop.f32.mrf.mxu0
        %1573 = vmatprep.mubr.f32.mxu0 0.0
        %1574 = vmatmul.mubr.f32.gmra.mxu0 %v968
        %v1575 = vpop.f32.mrf.mxu0
        %v1576 = vadd.f32 0.0, %v1575
        %v1577 = vpop.f32.mrf.mxu0
        %1578 = vmatprep.mubr.f32.mxu0 0.0
        %1579 = vmatmul.mubr.f32.gmra.mxu0 %v971
        %v1580 = vpop.f32.mrf.mxu0
        %v1581 = vadd.f32 0.0, %v1580
        %v1582 = vpop.f32.mrf.mxu0
        %1583 = vmatprep.mubr.f32.mxu0 0.0
        %1584 = vmatmul.mubr.f32.gmra.mxu0 %v974
        %v1585 = vpop.f32.mrf.mxu0
        %v1586 = vadd.f32 0.0, %v1585
        %v1587 = vpop.f32.mrf.mxu0
        %1588 = vmatprep.mubr.f32.mxu0 0.0
        %1589 = vmatmul.mubr.f32.gmra.mxu0 %v977
        %v1590 = vpop.f32.mrf.mxu0
        %v1591 = vadd.f32 0.0, %v1590
        %v1592 = vpop.f32.mrf.mxu0
        %1593 = vmatprep.mubr.f32.mxu0 0.0
        %1594 = vmatmul.mubr.f32.gmra.mxu0 %v980
        %v1595 = vpop.f32.mrf.mxu0
        %v1596 = vadd.f32 0.0, %v1595
        %v1597 = vpop.f32.mrf.mxu0
        %1598 = vmatprep.mubr.f32.mxu0 0.0
        %1599 = vmatmul.mubr.f32.gmra.mxu0 %v983
        %v1600 = vpop.f32.mrf.mxu0
        %v1601 = vadd.f32 0.0, %v1600
        %v1602 = vpop.f32.mrf.mxu0
        %1603 = vmatprep.mubr.f32.mxu0 0.0
        %1604 = vmatmul.mubr.f32.gmra.mxu0 %v986
        %v1605 = vpop.f32.mrf.mxu0
        %v1606 = vadd.f32 0.0, %v1605
        %v1607 = vpop.f32.mrf.mxu0
        %1608 = vmatprep.mubr.f32.mxu0 0.0
        %1609 = vmatmul.mubr.f32.gmra.mxu0 %v989
        %v1610 = vpop.f32.mrf.mxu0
        %v1611 = vadd.f32 0.0, %v1610
        %v1612 = vpop.f32.mrf.mxu0
        %1613 = vmatprep.mubr.f32.mxu0 0.0
        %1614 = vmatmul.mubr.f32.gmra.mxu0 %v992
        %v1615 = vpop.f32.mrf.mxu0
        %v1616 = vadd.f32 0.0, %v1615
        %v1617 = vpop.f32.mrf.mxu0
        %1618 = vmatprep.mubr.f32.mxu0 0.0
        %1619 = vmatmul.mubr.f32.gmra.mxu0 %v995
        %v1620 = vpop.f32.mrf.mxu0
        %v1621 = vadd.f32 0.0, %v1620
        %v1622 = vpop.f32.mrf.mxu0
        %1623 = vmatprep.mubr.f32.mxu0 0.0
        %1624 = vmatmul.mubr.f32.gmra.mxu0 %v998
        %v1625 = vpop.f32.mrf.mxu0
        %v1626 = vadd.f32 0.0, %v1625
        %v1627 = vpop.f32.mrf.mxu0
        %1628 = vmatprep.mubr.f32.mxu0 0.0
        %1629 = vmatmul.mubr.f32.gmra.mxu0 %v1001
        %v1630 = vpop.f32.mrf.mxu0
        %v1631 = vadd.f32 0.0, %v1630
        %v1632 = vpop.f32.mrf.mxu0
        %1633 = vmatprep.mubr.f32.mxu0 0.0
        %1634 = vmatmul.mubr.f32.gmra.mxu0 %v1004
        %v1635 = vpop.f32.mrf.mxu0
        %v1636 = vadd.f32 0.0, %v1635
        %v1637 = vpop.f32.mrf.mxu0
        %1638 = vmatprep.mubr.f32.mxu0 0.0
        %1639 = vmatmul.mubr.f32.gmra.mxu0 %v1007
        %v1640 = vpop.f32.mrf.mxu0
        %v1641 = vadd.f32 0.0, %v1640
        %v1642 = vpop.f32.mrf.mxu0
        %1643 = vmatprep.mubr.f32.mxu0 0.0
        %1644 = vmatmul.mubr.f32.gmra.mxu0 %v1010
        %v1645 = vpop.f32.mrf.mxu0
        %v1646 = vadd.f32 0.0, %v1645
        %v1647 = vpop.f32.mrf.mxu0
        %1648 = vmatprep.mubr.f32.mxu0 0.0
        %1649 = vmatmul.mubr.f32.gmra.mxu0 %v1013
        %v1650 = vpop.f32.mrf.mxu0
        %v1651 = vadd.f32 0.0, %v1650
        %v1652 = vpop.f32.mrf.mxu0
        %1653 = vmatprep.mubr.f32.mxu0 0.0
        %1654 = vmatmul.mubr.f32.gmra.mxu0 %v1016
        %v1655 = vpop.f32.mrf.mxu0
        %v1656 = vadd.f32 0.0, %v1655
        %v1657 = vpop.f32.mrf.mxu0
        %1658 = vmatprep.mubr.f32.mxu0 0.0
        %1659 = vmatmul.mubr.f32.gmra.mxu0 %v1019
        %v1660 = vpop.f32.mrf.mxu0
        %v1661 = vadd.f32 0.0, %v1660
        %v1662 = vpop.f32.mrf.mxu0
        %1663 = vmatprep.mubr.f32.mxu0 0.0
        %1664 = vmatmul.mubr.f32.gmra.mxu0 %v1022
        %v1665 = vpop.f32.mrf.mxu0
        %v1666 = vadd.f32 0.0, %v1665
        %v1667 = vpop.f32.mrf.mxu0
        %1668 = vmatprep.mubr.f32.mxu0 0.0
        %1669 = vmatmul.mubr.f32.gmra.mxu0 %v1025
        %v1670 = vpop.f32.mrf.mxu0
        %v1671 = vadd.f32 0.0, %v1670
        %v1672 = vpop.f32.mrf.mxu0
        %1673 = vmatprep.mubr.f32.mxu0 0.0
        %1674 = vmatmul.mubr.f32.gmra.mxu0 %v1028
        %v1675 = vpop.f32.mrf.mxu0
        %v1676 = vadd.f32 0.0, %v1675
        %v1677 = vpop.f32.mrf.mxu0
        %1678 = vmatprep.mubr.f32.mxu0 0.0
        %1679 = vmatmul.mubr.f32.gmra.mxu0 %v1031
        %v1680 = vpop.f32.mrf.mxu0
        %v1681 = vadd.f32 0.0, %v1680
        %v1682 = vpop.f32.mrf.mxu0
        %1683 = vmatprep.mubr.f32.mxu0 0.0
        %1684 = vmatmul.mubr.f32.gmra.mxu0 %v1034
        %v1685 = vpop.f32.mrf.mxu0
        %v1686 = vadd.f32 0.0, %v1685
        %v1687 = vpop.f32.mrf.mxu0
        %1688 = vmatprep.mubr.f32.mxu0 0.0
        %1689 = vmatmul.mubr.f32.gmra.mxu0 %v1037
        %v1690 = vpop.f32.mrf.mxu0
        %v1691 = vadd.f32 0.0, %v1690
        %v1692 = vpop.f32.mrf.mxu0
        %1693 = vmatprep.mubr.f32.mxu0 0.0
        %1694 = vmatmul.mubr.f32.gmra.mxu0 %v1040
        %v1695 = vpop.f32.mrf.mxu0
        %v1696 = vadd.f32 0.0, %v1695
        %v1697 = vpop.f32.mrf.mxu0
        %1698 = vmatprep.mubr.f32.mxu0 0.0
        %1699 = vmatmul.mubr.f32.gmra.mxu0 %v1043
        %v1700 = vpop.f32.mrf.mxu0
        %v1701 = vadd.f32 0.0, %v1700
        %v1702 = vpop.f32.mrf.mxu0
        %1703 = vmatprep.mubr.f32.mxu0 0.0
        %1704 = vmatmul.mubr.f32.gmra.mxu0 %v1046
        %v1705 = vpop.f32.mrf.mxu0
        %v1706 = vadd.f32 0.0, %v1705
        %v1707 = vpop.f32.mrf.mxu0
        %1708 = vmatprep.mubr.f32.mxu0 0.0
        %1709 = vmatmul.mubr.f32.gmra.mxu0 %v1049
        %v1710 = vpop.f32.mrf.mxu0
        %v1711 = vadd.f32 0.0, %v1710
        %v1712 = vpop.f32.mrf.mxu0
        %1713 = vmatprep.mubr.f32.mxu0 0.0
        %1714 = vmatmul.mubr.f32.gmra.mxu0 %v1052
        %v1715 = vpop.f32.mrf.mxu0
        %v1716 = vadd.f32 0.0, %v1715
        %v1717 = vpop.f32.mrf.mxu0
        %1718 = vmatprep.mubr.f32.mxu0 0.0
        %1719 = vmatmul.mubr.f32.gmra.mxu0 %v1055
        %v1720 = vpop.f32.mrf.mxu0
        %v1721 = vadd.f32 0.0, %v1720
        %v1722 = vpop.f32.mrf.mxu0
        %1723 = vmatprep.mubr.f32.mxu0 0.0
        %1724 = vmatmul.mubr.f32.gmra.mxu0 %v1058
        %v1725 = vpop.f32.mrf.mxu0
        %v1726 = vadd.f32 0.0, %v1725
        %v1727 = vpop.f32.mrf.mxu0
        %1728 = vmatprep.mubr.f32.mxu0 0.0
        %1729 = vmatmul.mubr.f32.gmra.mxu0 %v1061
        %v1730 = vpop.f32.mrf.mxu0
        %v1731 = vadd.f32 0.0, %v1730
        %v1732 = vpop.f32.mrf.mxu0
        %1733 = vmatprep.mubr.f32.mxu0 0.0
        %1734 = vmatmul.mubr.f32.gmra.mxu0 %v1064
        %v1735 = vpop.f32.mrf.mxu0
        %v1736 = vadd.f32 0.0, %v1735
        %v1737 = vpop.f32.mrf.mxu0
        %1738 = vmatprep.mubr.f32.mxu0 0.0
        %1739 = vmatmul.mubr.f32.gmra.mxu0 %v1067
        %v1740 = vpop.f32.mrf.mxu0
        %v1741 = vadd.f32 0.0, %v1740
        %v1742 = vpop.f32.mrf.mxu0
        %1743 = vmatprep.mubr.f32.mxu0 0.0
        %1744 = vmatmul.mubr.f32.gmra.mxu0 %v1070
        %v1745 = vpop.f32.mrf.mxu0
        %v1746 = vadd.f32 0.0, %v1745
        %v1747 = vpop.f32.mrf.mxu0
        %1748 = vmatprep.mubr.f32.mxu0 0.0
        %1749 = vmatmul.mubr.f32.gmra.mxu0 %v1073
        %v1750 = vpop.f32.mrf.mxu0
        %v1751 = vadd.f32 0.0, %v1750
        %v1752 = vpop.f32.mrf.mxu0
        %1753 = vmatprep.mubr.f32.mxu0 0.0
        %1754 = vmatmul.mubr.f32.gmra.mxu0 %v1076
        %v1755 = vpop.f32.mrf.mxu0
        %v1756 = vadd.f32 0.0, %v1755
        %v1757 = vpop.f32.mrf.mxu0
        %1758 = vmatprep.mubr.f32.mxu0 0.0
        %1759 = vmatmul.mubr.f32.gmra.mxu0 %v1079
        %v1760 = vpop.f32.mrf.mxu0
        %v1761 = vadd.f32 0.0, %v1760
        %v1762 = vpop.f32.mrf.mxu0
        %1763 = vmatprep.mubr.f32.mxu0 0.0
        %1764 = vmatmul.mubr.f32.gmra.mxu0 %v1082
        %v1765 = vpop.f32.mrf.mxu0
        %v1766 = vadd.f32 0.0, %v1765
        %v1767 = vpop.f32.mrf.mxu0
        %1768 = vmatprep.mubr.f32.mxu0 0.0
        %1769 = vmatmul.mubr.f32.gmra.mxu0 %v1085
        %v1770 = vpop.f32.mrf.mxu0
        %v1771 = vadd.f32 0.0, %v1770
        %v1772 = vpop.f32.mrf.mxu0
        %1773 = vmatprep.mubr.f32.mxu0 0.0
        %1774 = vmatmul.mubr.f32.gmra.mxu0 %v1088
        %v1775 = vpop.f32.mrf.mxu0
        %v1776 = vadd.f32 0.0, %v1775
        %v1777 = vpop.f32.mrf.mxu0
        %1778 = vmatprep.mubr.f32.mxu0 0.0
        %1779 = vmatmul.mubr.f32.gmra.mxu0 %v1091
        %v1780 = vpop.f32.mrf.mxu0
        %v1781 = vadd.f32 0.0, %v1780
        %v1782 = vpop.f32.mrf.mxu0
        %1783 = vmatprep.mubr.f32.mxu0 0.0
        %1784 = vmatmul.mubr.f32.gmra.mxu0 %v1094
        %v1785 = vpop.f32.mrf.mxu0
        %v1786 = vadd.f32 0.0, %v1785
        %v1787 = vpop.f32.mrf.mxu0
        %1788 = vmatprep.mubr.f32.mxu0 0.0
        %1789 = vmatmul.mubr.f32.gmra.mxu0 %v1097
        %v1790 = vpop.f32.mrf.mxu0
        %v1791 = vadd.f32 0.0, %v1790
        %v1792 = vpop.f32.mrf.mxu0
        %1793 = vmatprep.mubr.f32.mxu0 0.0
        %1794 = vmatmul.mubr.f32.gmra.mxu0 %v1100
        %v1795 = vpop.f32.mrf.mxu0
        %v1796 = vadd.f32 0.0, %v1795
        %v1797 = vpop.f32.mrf.mxu0
        %1798 = vmatprep.mubr.f32.mxu0 0.0
        %1799 = vmatmul.mubr.f32.gmra.mxu0 %v1103
        %v1800 = vpop.f32.mrf.mxu0
        %v1801 = vadd.f32 0.0, %v1800
        %v1802 = vpop.f32.mrf.mxu0
        %1803 = vmatprep.mubr.f32.mxu0 0.0
        %1804 = vmatmul.mubr.f32.gmra.mxu0 %v1106
        %v1805 = vpop.f32.mrf.mxu0
        %v1806 = vadd.f32 0.0, %v1805
        %v1807 = vpop.f32.mrf.mxu0
        %1808 = vmatprep.mubr.f32.mxu0 0.0
        %1809 = vmatmul.mubr.f32.gmra.mxu0 %v1109
        %v1810 = vpop.f32.mrf.mxu0
        %v1811 = vadd.f32 0.0, %v1810
        %v1812 = vpop.f32.mrf.mxu0
        %1813 = vmatprep.mubr.f32.mxu0 0.0
        %1814 = vmatmul.mubr.f32.gmra.mxu0 %v1112
        %v1815 = vpop.f32.mrf.mxu0
        %v1816 = vadd.f32 0.0, %v1815
        %v1817 = vpop.f32.mrf.mxu0
        %1818 = vmatprep.mubr.f32.mxu0 0.0
        %1819 = vmatmul.mubr.f32.gmra.mxu0 %v1115
        %v1820 = vpop.f32.mrf.mxu0
        %v1821 = vadd.f32 0.0, %v1820
        %v1822 = vpop.f32.mrf.mxu0
        %1823 = vmatprep.mubr.f32.mxu0 0.0
        %1824 = vmatmul.mubr.f32.gmra.mxu0 %v1118
        %v1825 = vpop.f32.mrf.mxu0
        %v1826 = vadd.f32 0.0, %v1825
        %v1827 = vpop.f32.mrf.mxu0
        %1828 = vmatprep.mubr.f32.mxu0 0.0
        %1829 = vmatmul.mubr.f32.gmra.mxu0 %v1121
        %v1830 = vpop.f32.mrf.mxu0
        %v1831 = vadd.f32 0.0, %v1830
        %v1832 = vpop.f32.mrf.mxu0
        %1833 = vmatprep.mubr.f32.mxu0 0.0
        %1834 = vmatmul.mubr.f32.gmra.mxu0 %v1124
        %v1835 = vpop.f32.mrf.mxu0
        %v1836 = vadd.f32 0.0, %v1835
        %v1837 = vpop.f32.mrf.mxu0
        %1838 = vmatprep.mubr.f32.mxu0 0.0
        %1839 = vmatmul.mubr.f32.gmra.mxu0 %v1127
        %v1840 = vpop.f32.mrf.mxu0
        %v1841 = vadd.f32 0.0, %v1840
        %v1842 = vpop.f32.mrf.mxu0
        %1843 = vmatprep.mubr.f32.mxu0 0.0
        %1844 = vmatmul.mubr.f32.gmra.mxu0 %v1130
        %v1845 = vpop.f32.mrf.mxu0
        %v1846 = vadd.f32 0.0, %v1845
        %v1847 = vpop.f32.mrf.mxu0
        %1848 = vmatprep.mubr.f32.mxu0 0.0
        %1849 = vmatmul.mubr.f32.gmra.mxu0 %v1133
        %v1850 = vpop.f32.mrf.mxu0
        %v1851 = vadd.f32 0.0, %v1850
        %v1852 = vpop.f32.mrf.mxu0
        %1853 = vmatprep.mubr.f32.mxu0 0.0
        %1854 = vmatmul.mubr.f32.gmra.mxu0 %v1136
        %v1855 = vpop.f32.mrf.mxu0
        %v1856 = vadd.f32 0.0, %v1855
        %v1857 = vpop.f32.mrf.mxu0
        %1858 = vmatprep.mubr.f32.mxu0 0.0
        %1859 = vmatmul.mubr.f32.gmra.mxu0 %v1139
        %v1860 = vpop.f32.mrf.mxu0
        %v1861 = vadd.f32 0.0, %v1860
        %v1862 = vpop.f32.mrf.mxu0
        %1863 = vdwg.mxu0
        %1864 = vxpose.xlu0.b32.start [1/16] %v1226, 128
        %1865 = vxpose.xlu0.b32.cont [2/16] %v1231, 128
        %1866 = vxpose.xlu0.b32.cont [3/16] %v1236, 128
        %1867 = vxpose.xlu0.b32.cont [4/16] %v1241, 128
        %1868 = vxpose.xlu0.b32.cont [5/16] %v1246, 128
        %1869 = vxpose.xlu0.b32.cont [6/16] %v1251, 128
        %1870 = vxpose.xlu0.b32.cont [7/16] %v1256, 128
        %1871 = vxpose.xlu0.b32.cont [8/16] %v1261, 128
        %1872 = vxpose.xlu0.b32.cont [9/16] %v1266, 128
        %1873 = vxpose.xlu0.b32.cont [10/16] %v1271, 128
        %1874 = vxpose.xlu0.b32.cont [11/16] %v1276, 128
        %1875 = vxpose.xlu0.b32.cont [12/16] %v1281, 128
        %1876 = vxpose.xlu0.b32.cont [13/16] %v1286, 128
        %1877 = vxpose.xlu0.b32.cont [14/16] %v1291, 128
        %1878 = vxpose.xlu0.b32.cont [15/16] %v1296, 128
        %1879 = vxpose.xlu0.b32.end [16/16] %v1301, 128
        %v1880 = vpop.trf.xlu0
        %v1881 = vpop.trf.xlu0
        %v1882 = vpop.trf.xlu0
        %v1883 = vpop.trf.xlu0
        %v1884 = vpop.trf.xlu0
        %v1885 = vpop.trf.xlu0
        %v1886 = vpop.trf.xlu0
        %v1887 = vpop.trf.xlu0
        %v1888 = vpop.trf.xlu0
        %v1889 = vpop.trf.xlu0
        %v1890 = vpop.trf.xlu0
        %v1891 = vpop.trf.xlu0
        %v1892 = vpop.trf.xlu0
        %v1893 = vpop.trf.xlu0
        %v1894 = vpop.trf.xlu0
        %v1895 = vpop.trf.xlu0
        %1896 = vxpose.xlu0.b32.start [1/16] %v1306, 128
        %1897 = vxpose.xlu0.b32.cont [2/16] %v1311, 128
        %1898 = vxpose.xlu0.b32.cont [3/16] %v1316, 128
        %1899 = vxpose.xlu0.b32.cont [4/16] %v1321, 128
        %1900 = vxpose.xlu0.b32.cont [5/16] %v1326, 128
        %1901 = vxpose.xlu0.b32.cont [6/16] %v1331, 128
        %1902 = vxpose.xlu0.b32.cont [7/16] %v1336, 128
        %1903 = vxpose.xlu0.b32.cont [8/16] %v1341, 128
        %1904 = vxpose.xlu0.b32.cont [9/16] %v1346, 128
        %1905 = vxpose.xlu0.b32.cont [10/16] %v1351, 128
        %1906 = vxpose.xlu0.b32.cont [11/16] %v1356, 128
        %1907 = vxpose.xlu0.b32.cont [12/16] %v1361, 128
        %1908 = vxpose.xlu0.b32.cont [13/16] %v1366, 128
        %1909 = vxpose.xlu0.b32.cont [14/16] %v1371, 128
        %1910 = vxpose.xlu0.b32.cont [15/16] %v1376, 128
        %1911 = vxpose.xlu0.b32.end [16/16] %v1381, 128
        %v1912 = vpop.trf.xlu0
        %v1913 = vpop.trf.xlu0
        %v1914 = vpop.trf.xlu0
        %v1915 = vpop.trf.xlu0
        %v1916 = vpop.trf.xlu0
        %v1917 = vpop.trf.xlu0
        %v1918 = vpop.trf.xlu0
        %v1919 = vpop.trf.xlu0
        %v1920 = vpop.trf.xlu0
        %v1921 = vpop.trf.xlu0
        %v1922 = vpop.trf.xlu0
        %v1923 = vpop.trf.xlu0
        %v1924 = vpop.trf.xlu0
        %v1925 = vpop.trf.xlu0
        %v1926 = vpop.trf.xlu0
        %v1927 = vpop.trf.xlu0
        %1928 = vxpose.xlu0.b32.start [1/16] %v1386, 128
        %1929 = vxpose.xlu0.b32.cont [2/16] %v1391, 128
        %1930 = vxpose.xlu0.b32.cont [3/16] %v1396, 128
        %1931 = vxpose.xlu0.b32.cont [4/16] %v1401, 128
        %1932 = vxpose.xlu0.b32.cont [5/16] %v1406, 128
        %1933 = vxpose.xlu0.b32.cont [6/16] %v1411, 128
        %1934 = vxpose.xlu0.b32.cont [7/16] %v1416, 128
        %1935 = vxpose.xlu0.b32.cont [8/16] %v1421, 128
        %1936 = vxpose.xlu0.b32.cont [9/16] %v1426, 128
        %1937 = vxpose.xlu0.b32.cont [10/16] %v1431, 128
        %1938 = vxpose.xlu0.b32.cont [11/16] %v1436, 128
        %1939 = vxpose.xlu0.b32.cont [12/16] %v1441, 128
        %1940 = vxpose.xlu0.b32.cont [13/16] %v1446, 128
        %1941 = vxpose.xlu0.b32.cont [14/16] %v1451, 128
        %1942 = vxpose.xlu0.b32.cont [15/16] %v1456, 128
        %1943 = vxpose.xlu0.b32.end [16/16] %v1461, 128
        %v1944 = vpop.trf.xlu0
        %v1945 = vpop.trf.xlu0
        %v1946 = vpop.trf.xlu0
        %v1947 = vpop.trf.xlu0
        %v1948 = vpop.trf.xlu0
        %v1949 = vpop.trf.xlu0
        %v1950 = vpop.trf.xlu0
        %v1951 = vpop.trf.xlu0
        %v1952 = vpop.trf.xlu0
        %v1953 = vpop.trf.xlu0
        %v1954 = vpop.trf.xlu0
        %v1955 = vpop.trf.xlu0
        %v1956 = vpop.trf.xlu0
        %v1957 = vpop.trf.xlu0
        %v1958 = vpop.trf.xlu0
        %v1959 = vpop.trf.xlu0
        %1960 = vxpose.xlu0.b32.start [1/16] %v1466, 128
        %1961 = vxpose.xlu0.b32.cont [2/16] %v1471, 128
        %1962 = vxpose.xlu0.b32.cont [3/16] %v1476, 128
        %1963 = vxpose.xlu0.b32.cont [4/16] %v1481, 128
        %1964 = vxpose.xlu0.b32.cont [5/16] %v1486, 128
        %1965 = vxpose.xlu0.b32.cont [6/16] %v1491, 128
        %1966 = vxpose.xlu0.b32.cont [7/16] %v1496, 128
        %1967 = vxpose.xlu0.b32.cont [8/16] %v1501, 128
        %1968 = vxpose.xlu0.b32.cont [9/16] %v1506, 128
        %1969 = vxpose.xlu0.b32.cont [10/16] %v1511, 128
        %1970 = vxpose.xlu0.b32.cont [11/16] %v1516, 128
        %1971 = vxpose.xlu0.b32.cont [12/16] %v1521, 128
        %1972 = vxpose.xlu0.b32.cont [13/16] %v1526, 128
        %1973 = vxpose.xlu0.b32.cont [14/16] %v1531, 128
        %1974 = vxpose.xlu0.b32.cont [15/16] %v1536, 128
        %1975 = vxpose.xlu0.b32.end [16/16] %v1541, 128
        %v1976 = vpop.trf.xlu0
        %v1977 = vpop.trf.xlu0
        %v1978 = vpop.trf.xlu0
        %v1979 = vpop.trf.xlu0
        %v1980 = vpop.trf.xlu0
        %v1981 = vpop.trf.xlu0
        %v1982 = vpop.trf.xlu0
        %v1983 = vpop.trf.xlu0
        %v1984 = vpop.trf.xlu0
        %v1985 = vpop.trf.xlu0
        %v1986 = vpop.trf.xlu0
        %v1987 = vpop.trf.xlu0
        %v1988 = vpop.trf.xlu0
        %v1989 = vpop.trf.xlu0
        %v1990 = vpop.trf.xlu0
        %v1991 = vpop.trf.xlu0
        %1992 = vxpose.xlu0.b32.start [1/16] %v1546, 128
        %1993 = vxpose.xlu0.b32.cont [2/16] %v1551, 128
        %1994 = vxpose.xlu0.b32.cont [3/16] %v1556, 128
        %1995 = vxpose.xlu0.b32.cont [4/16] %v1561, 128
        %1996 = vxpose.xlu0.b32.cont [5/16] %v1566, 128
        %1997 = vxpose.xlu0.b32.cont [6/16] %v1571, 128
        %1998 = vxpose.xlu0.b32.cont [7/16] %v1576, 128
        %1999 = vxpose.xlu0.b32.cont [8/16] %v1581, 128
        %2000 = vxpose.xlu0.b32.cont [9/16] %v1586, 128
        %2001 = vxpose.xlu0.b32.cont [10/16] %v1591, 128
        %2002 = vxpose.xlu0.b32.cont [11/16] %v1596, 128
        %2003 = vxpose.xlu0.b32.cont [12/16] %v1601, 128
        %2004 = vxpose.xlu0.b32.cont [13/16] %v1606, 128
        %2005 = vxpose.xlu0.b32.cont [14/16] %v1611, 128
        %2006 = vxpose.xlu0.b32.cont [15/16] %v1616, 128
        %2007 = vxpose.xlu0.b32.end [16/16] %v1621, 128
        %v2008 = vpop.trf.xlu0
        %v2009 = vpop.trf.xlu0
        %v2010 = vpop.trf.xlu0
        %v2011 = vpop.trf.xlu0
        %v2012 = vpop.trf.xlu0
        %v2013 = vpop.trf.xlu0
        %v2014 = vpop.trf.xlu0
        %v2015 = vpop.trf.xlu0
        %v2016 = vpop.trf.xlu0
        %v2017 = vpop.trf.xlu0
        %v2018 = vpop.trf.xlu0
        %v2019 = vpop.trf.xlu0
        %v2020 = vpop.trf.xlu0
        %v2021 = vpop.trf.xlu0
        %v2022 = vpop.trf.xlu0
        %v2023 = vpop.trf.xlu0
        %2024 = vxpose.xlu0.b32.start [1/16] %v1626, 128
        %2025 = vxpose.xlu0.b32.cont [2/16] %v1631, 128
        %2026 = vxpose.xlu0.b32.cont [3/16] %v1636, 128
        %2027 = vxpose.xlu0.b32.cont [4/16] %v1641, 128
        %2028 = vxpose.xlu0.b32.cont [5/16] %v1646, 128
        %2029 = vxpose.xlu0.b32.cont [6/16] %v1651, 128
        %2030 = vxpose.xlu0.b32.cont [7/16] %v1656, 128
        %2031 = vxpose.xlu0.b32.cont [8/16] %v1661, 128
        %2032 = vxpose.xlu0.b32.cont [9/16] %v1666, 128
        %2033 = vxpose.xlu0.b32.cont [10/16] %v1671, 128
        %2034 = vxpose.xlu0.b32.cont [11/16] %v1676, 128
        %2035 = vxpose.xlu0.b32.cont [12/16] %v1681, 128
        %2036 = vxpose.xlu0.b32.cont [13/16] %v1686, 128
        %2037 = vxpose.xlu0.b32.cont [14/16] %v1691, 128
        %2038 = vxpose.xlu0.b32.cont [15/16] %v1696, 128
        %2039 = vxpose.xlu0.b32.end [16/16] %v1701, 128
        %v2040 = vpop.trf.xlu0
        %v2041 = vpop.trf.xlu0
        %v2042 = vpop.trf.xlu0
        %v2043 = vpop.trf.xlu0
        %v2044 = vpop.trf.xlu0
        %v2045 = vpop.trf.xlu0
        %v2046 = vpop.trf.xlu0
        %v2047 = vpop.trf.xlu0
        %v2048 = vpop.trf.xlu0
        %v2049 = vpop.trf.xlu0
        %v2050 = vpop.trf.xlu0
        %v2051 = vpop.trf.xlu0
        %v2052 = vpop.trf.xlu0
        %v2053 = vpop.trf.xlu0
        %v2054 = vpop.trf.xlu0
        %v2055 = vpop.trf.xlu0
        %2056 = vxpose.xlu0.b32.start [1/16] %v1706, 128
        %2057 = vxpose.xlu0.b32.cont [2/16] %v1711, 128
        %2058 = vxpose.xlu0.b32.cont [3/16] %v1716, 128
        %2059 = vxpose.xlu0.b32.cont [4/16] %v1721, 128
        %2060 = vxpose.xlu0.b32.cont [5/16] %v1726, 128
        %2061 = vxpose.xlu0.b32.cont [6/16] %v1731, 128
        %2062 = vxpose.xlu0.b32.cont [7/16] %v1736, 128
        %2063 = vxpose.xlu0.b32.cont [8/16] %v1741, 128
        %2064 = vxpose.xlu0.b32.cont [9/16] %v1746, 128
        %2065 = vxpose.xlu0.b32.cont [10/16] %v1751, 128
        %2066 = vxpose.xlu0.b32.cont [11/16] %v1756, 128
        %2067 = vxpose.xlu0.b32.cont [12/16] %v1761, 128
        %2068 = vxpose.xlu0.b32.cont [13/16] %v1766, 128
        %2069 = vxpose.xlu0.b32.cont [14/16] %v1771, 128
        %2070 = vxpose.xlu0.b32.cont [15/16] %v1776, 128
        %2071 = vxpose.xlu0.b32.end [16/16] %v1781, 128
        %v2072 = vpop.trf.xlu0
        %v2073 = vpop.trf.xlu0
        %v2074 = vpop.trf.xlu0
        %v2075 = vpop.trf.xlu0
        %v2076 = vpop.trf.xlu0
        %v2077 = vpop.trf.xlu0
        %v2078 = vpop.trf.xlu0
        %v2079 = vpop.trf.xlu0
        %v2080 = vpop.trf.xlu0
        %v2081 = vpop.trf.xlu0
        %v2082 = vpop.trf.xlu0
        %v2083 = vpop.trf.xlu0
        %v2084 = vpop.trf.xlu0
        %v2085 = vpop.trf.xlu0
        %v2086 = vpop.trf.xlu0
        %v2087 = vpop.trf.xlu0
        %2088 = vxpose.xlu0.b32.start [1/16] %v1786, 128
        %2089 = vxpose.xlu0.b32.cont [2/16] %v1791, 128
        %2090 = vxpose.xlu0.b32.cont [3/16] %v1796, 128
        %2091 = vxpose.xlu0.b32.cont [4/16] %v1801, 128
        %2092 = vxpose.xlu0.b32.cont [5/16] %v1806, 128
        %2093 = vxpose.xlu0.b32.cont [6/16] %v1811, 128
        %2094 = vxpose.xlu0.b32.cont [7/16] %v1816, 128
        %2095 = vxpose.xlu0.b32.cont [8/16] %v1821, 128
        %2096 = vxpose.xlu0.b32.cont [9/16] %v1826, 128
        %2097 = vxpose.xlu0.b32.cont [10/16] %v1831, 128
        %2098 = vxpose.xlu0.b32.cont [11/16] %v1836, 128
        %2099 = vxpose.xlu0.b32.cont [12/16] %v1841, 128
        %2100 = vxpose.xlu0.b32.cont [13/16] %v1846, 128
        %2101 = vxpose.xlu0.b32.cont [14/16] %v1851, 128
        %2102 = vxpose.xlu0.b32.cont [15/16] %v1856, 128
        %2103 = vxpose.xlu0.b32.end [16/16] %v1861, 128
        %v2104 = vpop.trf.xlu0
        %v2105 = vpop.trf.xlu0
        %v2106 = vpop.trf.xlu0
        %v2107 = vpop.trf.xlu0
        %v2108 = vpop.trf.xlu0
        %v2109 = vpop.trf.xlu0
        %v2110 = vpop.trf.xlu0
        %v2111 = vpop.trf.xlu0
        %v2112 = vpop.trf.xlu0
        %v2113 = vpop.trf.xlu0
        %v2114 = vpop.trf.xlu0
        %v2115 = vpop.trf.xlu0
        %v2116 = vpop.trf.xlu0
        %v2117 = vpop.trf.xlu0
        %v2118 = vpop.trf.xlu0
        %v2119 = vpop.trf.xlu0
        %v2120 = vcombine.low %v1880, %v1944
        %v2121 = vcombine.high %v1880, %v1944
        %v2123 = vunpack.c.l.s4 1983009808
        %v2124 = vunpack.c.0.s8 %v2123
        %v2125 = vlaneseq
        %v2126 = vshrl.u32 %v2125, 7
        %v2127 = vsub.s32 %v2124, %v2126
        %v2128 = vrot.slane %v2120, %v2127
        %v2130 = vunpack.c.l.s4 1983009808
        %v2131 = vunpack.c.0.s8 %v2130
        %v2132 = vlaneseq
        %v2133 = vshrl.u32 %v2132, 7
        %v2134 = vsub.s32 %v2131, %v2133
        %v2135 = vrot.slane %v2121, %v2134
        %v2136 = vcombine.low %v1912, %v1976
        %v2137 = vcombine.high %v1912, %v1976
        %v2139 = vunpack.c.l.s4 1983009808
        %v2140 = vunpack.c.0.s8 %v2139
        %v2141 = vlaneseq
        %v2142 = vshrl.u32 %v2141, 7
        %v2143 = vsub.s32 %v2140, %v2142
        %v2144 = vrot.slane %v2136, %v2143
        %v2146 = vunpack.c.l.s4 1983009808
        %v2147 = vunpack.c.0.s8 %v2146
        %v2148 = vlaneseq
        %v2149 = vshrl.u32 %v2148, 7
        %v2150 = vsub.s32 %v2147, %v2149
        %v2151 = vrot.slane %v2137, %v2150
        %v2152 = vcombine.low %v2008, %v2072
        %v2153 = vcombine.high %v2008, %v2072
        %v2155 = vunpack.c.l.s4 1983009808
        %v2156 = vunpack.c.0.s8 %v2155
        %v2157 = vlaneseq
        %v2158 = vshrl.u32 %v2157, 7
        %v2159 = vsub.s32 %v2156, %v2158
        %v2160 = vrot.slane %v2152, %v2159
        %v2162 = vunpack.c.l.s4 1983009808
        %v2163 = vunpack.c.0.s8 %v2162
        %v2164 = vlaneseq
        %v2165 = vshrl.u32 %v2164, 7
        %v2166 = vsub.s32 %v2163, %v2165
        %v2167 = vrot.slane %v2153, %v2166
        %v2168 = vcombine.low %v2040, %v2104
        %v2169 = vcombine.high %v2040, %v2104
        %v2171 = vunpack.c.l.s4 1983009808
        %v2172 = vunpack.c.0.s8 %v2171
        %v2173 = vlaneseq
        %v2174 = vshrl.u32 %v2173, 7
        %v2175 = vsub.s32 %v2172, %v2174
        %v2176 = vrot.slane %v2168, %v2175
        %v2178 = vunpack.c.l.s4 1983009808
        %v2179 = vunpack.c.0.s8 %v2178
        %v2180 = vlaneseq
        %v2181 = vshrl.u32 %v2180, 7
        %v2182 = vsub.s32 %v2179, %v2181
        %v2183 = vrot.slane %v2169, %v2182
        %v2184 = vcombine.low %v2128, %v2144
        %v2185 = vcombine.high %v2128, %v2144
        %v2187 = vunpack.c.l.s4 1934713408
        %v2188 = vunpack.c.0.s8 %v2187
        %v2189 = vlaneseq
        %v2190 = vshrl.u32 %v2189, 7
        %v2191 = vsub.s32 %v2188, %v2190
        %v2192 = vrot.slane %v2184, %v2191
        %v2194 = vunpack.c.l.s4 1934713408
        %v2195 = vunpack.c.0.s8 %v2194
        %v2196 = vlaneseq
        %v2197 = vshrl.u32 %v2196, 7
        %v2198 = vsub.s32 %v2195, %v2197
        %v2199 = vrot.slane %v2185, %v2198
        %v2200 = vcombine.low %v2135, %v2151
        %v2201 = vcombine.high %v2135, %v2151
        %v2203 = vunpack.c.l.s4 1934713408
        %v2204 = vunpack.c.0.s8 %v2203
        %v2205 = vlaneseq
        %v2206 = vshrl.u32 %v2205, 7
        %v2207 = vsub.s32 %v2204, %v2206
        %v2208 = vrot.slane %v2200, %v2207
        %v2210 = vunpack.c.l.s4 1934713408
        %v2211 = vunpack.c.0.s8 %v2210
        %v2212 = vlaneseq
        %v2213 = vshrl.u32 %v2212, 7
        %v2214 = vsub.s32 %v2211, %v2213
        %v2215 = vrot.slane %v2201, %v2214
        %v2216 = vcombine.low %v2160, %v2176
        %v2217 = vcombine.high %v2160, %v2176
        %v2219 = vunpack.c.l.s4 1934713408
        %v2220 = vunpack.c.0.s8 %v2219
        %v2221 = vlaneseq
        %v2222 = vshrl.u32 %v2221, 7
        %v2223 = vsub.s32 %v2220, %v2222
        %v2224 = vrot.slane %v2216, %v2223
        %v2226 = vunpack.c.l.s4 1934713408
        %v2227 = vunpack.c.0.s8 %v2226
        %v2228 = vlaneseq
        %v2229 = vshrl.u32 %v2228, 7
        %v2230 = vsub.s32 %v2227, %v2229
        %v2231 = vrot.slane %v2217, %v2230
        %v2232 = vcombine.low %v2167, %v2183
        %v2233 = vcombine.high %v2167, %v2183
        %v2235 = vunpack.c.l.s4 1934713408
        %v2236 = vunpack.c.0.s8 %v2235
        %v2237 = vlaneseq
        %v2238 = vshrl.u32 %v2237, 7
        %v2239 = vsub.s32 %v2236, %v2238
        %v2240 = vrot.slane %v2232, %v2239
        %v2242 = vunpack.c.l.s4 1934713408
        %v2243 = vunpack.c.0.s8 %v2242
        %v2244 = vlaneseq
        %v2245 = vshrl.u32 %v2244, 7
        %v2246 = vsub.s32 %v2243, %v2245
        %v2247 = vrot.slane %v2233, %v2246
        %v2248 = vcombine.low %v2192, %v2224
        %v2249 = vcombine.high %v2192, %v2224
        %v2250 = vcombine.low %v2199, %v2231
        %v2251 = vcombine.high %v2199, %v2231
        %v2252 = vcombine.low %v2208, %v2240
        %v2253 = vcombine.high %v2208, %v2240
        %v2254 = vcombine.low %v2215, %v2247
        %v2255 = vcombine.high %v2215, %v2247
        %v2256 = vcombine.low %v1881, %v1945
        %v2257 = vcombine.high %v1881, %v1945
        %v2259 = vunpack.c.l.s4 1983009808
        %v2260 = vunpack.c.0.s8 %v2259
        %v2261 = vlaneseq
        %v2262 = vshrl.u32 %v2261, 7
        %v2263 = vsub.s32 %v2260, %v2262
        %v2264 = vrot.slane %v2256, %v2263
        %v2266 = vunpack.c.l.s4 1983009808
        %v2267 = vunpack.c.0.s8 %v2266
        %v2268 = vlaneseq
        %v2269 = vshrl.u32 %v2268, 7
        %v2270 = vsub.s32 %v2267, %v2269
        %v2271 = vrot.slane %v2257, %v2270
        %v2272 = vcombine.low %v1913, %v1977
        %v2273 = vcombine.high %v1913, %v1977
        %v2275 = vunpack.c.l.s4 1983009808
        %v2276 = vunpack.c.0.s8 %v2275
        %v2277 = vlaneseq
        %v2278 = vshrl.u32 %v2277, 7
        %v2279 = vsub.s32 %v2276, %v2278
        %v2280 = vrot.slane %v2272, %v2279
        %v2282 = vunpack.c.l.s4 1983009808
        %v2283 = vunpack.c.0.s8 %v2282
        %v2284 = vlaneseq
        %v2285 = vshrl.u32 %v2284, 7
        %v2286 = vsub.s32 %v2283, %v2285
        %v2287 = vrot.slane %v2273, %v2286
        %v2288 = vcombine.low %v2009, %v2073
        %v2289 = vcombine.high %v2009, %v2073
        %v2291 = vunpack.c.l.s4 1983009808
        %v2292 = vunpack.c.0.s8 %v2291
        %v2293 = vlaneseq
        %v2294 = vshrl.u32 %v2293, 7
        %v2295 = vsub.s32 %v2292, %v2294
        %v2296 = vrot.slane %v2288, %v2295
        %v2298 = vunpack.c.l.s4 1983009808
        %v2299 = vunpack.c.0.s8 %v2298
        %v2300 = vlaneseq
        %v2301 = vshrl.u32 %v2300, 7
        %v2302 = vsub.s32 %v2299, %v2301
        %v2303 = vrot.slane %v2289, %v2302
        %v2304 = vcombine.low %v2041, %v2105
        %v2305 = vcombine.high %v2041, %v2105
        %v2307 = vunpack.c.l.s4 1983009808
        %v2308 = vunpack.c.0.s8 %v2307
        %v2309 = vlaneseq
        %v2310 = vshrl.u32 %v2309, 7
        %v2311 = vsub.s32 %v2308, %v2310
        %v2312 = vrot.slane %v2304, %v2311
        %v2314 = vunpack.c.l.s4 1983009808
        %v2315 = vunpack.c.0.s8 %v2314
        %v2316 = vlaneseq
        %v2317 = vshrl.u32 %v2316, 7
        %v2318 = vsub.s32 %v2315, %v2317
        %v2319 = vrot.slane %v2305, %v2318
        %v2320 = vcombine.low %v2264, %v2280
        %v2321 = vcombine.high %v2264, %v2280
        %v2323 = vunpack.c.l.s4 1934713408
        %v2324 = vunpack.c.0.s8 %v2323
        %v2325 = vlaneseq
        %v2326 = vshrl.u32 %v2325, 7
        %v2327 = vsub.s32 %v2324, %v2326
        %v2328 = vrot.slane %v2320, %v2327
        %v2330 = vunpack.c.l.s4 1934713408
        %v2331 = vunpack.c.0.s8 %v2330
        %v2332 = vlaneseq
        %v2333 = vshrl.u32 %v2332, 7
        %v2334 = vsub.s32 %v2331, %v2333
        %v2335 = vrot.slane %v2321, %v2334
        %v2336 = vcombine.low %v2271, %v2287
        %v2337 = vcombine.high %v2271, %v2287
        %v2339 = vunpack.c.l.s4 1934713408
        %v2340 = vunpack.c.0.s8 %v2339
        %v2341 = vlaneseq
        %v2342 = vshrl.u32 %v2341, 7
        %v2343 = vsub.s32 %v2340, %v2342
        %v2344 = vrot.slane %v2336, %v2343
        %v2346 = vunpack.c.l.s4 1934713408
        %v2347 = vunpack.c.0.s8 %v2346
        %v2348 = vlaneseq
        %v2349 = vshrl.u32 %v2348, 7
        %v2350 = vsub.s32 %v2347, %v2349
        %v2351 = vrot.slane %v2337, %v2350
        %v2352 = vcombine.low %v2296, %v2312
        %v2353 = vcombine.high %v2296, %v2312
        %v2355 = vunpack.c.l.s4 1934713408
        %v2356 = vunpack.c.0.s8 %v2355
        %v2357 = vlaneseq
        %v2358 = vshrl.u32 %v2357, 7
        %v2359 = vsub.s32 %v2356, %v2358
        %v2360 = vrot.slane %v2352, %v2359
        %v2362 = vunpack.c.l.s4 1934713408
        %v2363 = vunpack.c.0.s8 %v2362
        %v2364 = vlaneseq
        %v2365 = vshrl.u32 %v2364, 7
        %v2366 = vsub.s32 %v2363, %v2365
        %v2367 = vrot.slane %v2353, %v2366
        %v2368 = vcombine.low %v2303, %v2319
        %v2369 = vcombine.high %v2303, %v2319
        %v2371 = vunpack.c.l.s4 1934713408
        %v2372 = vunpack.c.0.s8 %v2371
        %v2373 = vlaneseq
        %v2374 = vshrl.u32 %v2373, 7
        %v2375 = vsub.s32 %v2372, %v2374
        %v2376 = vrot.slane %v2368, %v2375
        %v2378 = vunpack.c.l.s4 1934713408
        %v2379 = vunpack.c.0.s8 %v2378
        %v2380 = vlaneseq
        %v2381 = vshrl.u32 %v2380, 7
        %v2382 = vsub.s32 %v2379, %v2381
        %v2383 = vrot.slane %v2369, %v2382
        %v2384 = vcombine.low %v2328, %v2360
        %v2385 = vcombine.high %v2328, %v2360
        %v2386 = vcombine.low %v2335, %v2367
        %v2387 = vcombine.high %v2335, %v2367
        %v2388 = vcombine.low %v2344, %v2376
        %v2389 = vcombine.high %v2344, %v2376
        %v2390 = vcombine.low %v2351, %v2383
        %v2391 = vcombine.high %v2351, %v2383
        %v2392 = vcombine.low %v1882, %v1946
        %v2393 = vcombine.high %v1882, %v1946
        %v2395 = vunpack.c.l.s4 1983009808
        %v2396 = vunpack.c.0.s8 %v2395
        %v2397 = vlaneseq
        %v2398 = vshrl.u32 %v2397, 7
        %v2399 = vsub.s32 %v2396, %v2398
        %v2400 = vrot.slane %v2392, %v2399
        %v2402 = vunpack.c.l.s4 1983009808
        %v2403 = vunpack.c.0.s8 %v2402
        %v2404 = vlaneseq
        %v2405 = vshrl.u32 %v2404, 7
        %v2406 = vsub.s32 %v2403, %v2405
        %v2407 = vrot.slane %v2393, %v2406
        %v2408 = vcombine.low %v1914, %v1978
        %v2409 = vcombine.high %v1914, %v1978
        %v2411 = vunpack.c.l.s4 1983009808
        %v2412 = vunpack.c.0.s8 %v2411
        %v2413 = vlaneseq
        %v2414 = vshrl.u32 %v2413, 7
        %v2415 = vsub.s32 %v2412, %v2414
        %v2416 = vrot.slane %v2408, %v2415
        %v2418 = vunpack.c.l.s4 1983009808
        %v2419 = vunpack.c.0.s8 %v2418
        %v2420 = vlaneseq
        %v2421 = vshrl.u32 %v2420, 7
        %v2422 = vsub.s32 %v2419, %v2421
        %v2423 = vrot.slane %v2409, %v2422
        %v2424 = vcombine.low %v2010, %v2074
        %v2425 = vcombine.high %v2010, %v2074
        %v2427 = vunpack.c.l.s4 1983009808
        %v2428 = vunpack.c.0.s8 %v2427
        %v2429 = vlaneseq
        %v2430 = vshrl.u32 %v2429, 7
        %v2431 = vsub.s32 %v2428, %v2430
        %v2432 = vrot.slane %v2424, %v2431
        %v2434 = vunpack.c.l.s4 1983009808
        %v2435 = vunpack.c.0.s8 %v2434
        %v2436 = vlaneseq
        %v2437 = vshrl.u32 %v2436, 7
        %v2438 = vsub.s32 %v2435, %v2437
        %v2439 = vrot.slane %v2425, %v2438
        %v2440 = vcombine.low %v2042, %v2106
        %v2441 = vcombine.high %v2042, %v2106
        %v2443 = vunpack.c.l.s4 1983009808
        %v2444 = vunpack.c.0.s8 %v2443
        %v2445 = vlaneseq
        %v2446 = vshrl.u32 %v2445, 7
        %v2447 = vsub.s32 %v2444, %v2446
        %v2448 = vrot.slane %v2440, %v2447
        %v2450 = vunpack.c.l.s4 1983009808
        %v2451 = vunpack.c.0.s8 %v2450
        %v2452 = vlaneseq
        %v2453 = vshrl.u32 %v2452, 7
        %v2454 = vsub.s32 %v2451, %v2453
        %v2455 = vrot.slane %v2441, %v2454
        %v2456 = vcombine.low %v2400, %v2416
        %v2457 = vcombine.high %v2400, %v2416
        %v2459 = vunpack.c.l.s4 1934713408
        %v2460 = vunpack.c.0.s8 %v2459
        %v2461 = vlaneseq
        %v2462 = vshrl.u32 %v2461, 7
        %v2463 = vsub.s32 %v2460, %v2462
        %v2464 = vrot.slane %v2456, %v2463
        %v2466 = vunpack.c.l.s4 1934713408
        %v2467 = vunpack.c.0.s8 %v2466
        %v2468 = vlaneseq
        %v2469 = vshrl.u32 %v2468, 7
        %v2470 = vsub.s32 %v2467, %v2469
        %v2471 = vrot.slane %v2457, %v2470
        %v2472 = vcombine.low %v2407, %v2423
        %v2473 = vcombine.high %v2407, %v2423
        %v2475 = vunpack.c.l.s4 1934713408
        %v2476 = vunpack.c.0.s8 %v2475
        %v2477 = vlaneseq
        %v2478 = vshrl.u32 %v2477, 7
        %v2479 = vsub.s32 %v2476, %v2478
        %v2480 = vrot.slane %v2472, %v2479
        %v2482 = vunpack.c.l.s4 1934713408
        %v2483 = vunpack.c.0.s8 %v2482
        %v2484 = vlaneseq
        %v2485 = vshrl.u32 %v2484, 7
        %v2486 = vsub.s32 %v2483, %v2485
        %v2487 = vrot.slane %v2473, %v2486
        %v2488 = vcombine.low %v2432, %v2448
        %v2489 = vcombine.high %v2432, %v2448
        %v2491 = vunpack.c.l.s4 1934713408
        %v2492 = vunpack.c.0.s8 %v2491
        %v2493 = vlaneseq
        %v2494 = vshrl.u32 %v2493, 7
        %v2495 = vsub.s32 %v2492, %v2494
        %v2496 = vrot.slane %v2488, %v2495
        %v2498 = vunpack.c.l.s4 1934713408
        %v2499 = vunpack.c.0.s8 %v2498
        %v2500 = vlaneseq
        %v2501 = vshrl.u32 %v2500, 7
        %v2502 = vsub.s32 %v2499, %v2501
        %v2503 = vrot.slane %v2489, %v2502
        %v2504 = vcombine.low %v2439, %v2455
        %v2505 = vcombine.high %v2439, %v2455
        %v2507 = vunpack.c.l.s4 1934713408
        %v2508 = vunpack.c.0.s8 %v2507
        %v2509 = vlaneseq
        %v2510 = vshrl.u32 %v2509, 7
        %v2511 = vsub.s32 %v2508, %v2510
        %v2512 = vrot.slane %v2504, %v2511
        %v2514 = vunpack.c.l.s4 1934713408
        %v2515 = vunpack.c.0.s8 %v2514
        %v2516 = vlaneseq
        %v2517 = vshrl.u32 %v2516, 7
        %v2518 = vsub.s32 %v2515, %v2517
        %v2519 = vrot.slane %v2505, %v2518
        %v2520 = vcombine.low %v2464, %v2496
        %v2521 = vcombine.high %v2464, %v2496
        %v2522 = vcombine.low %v2471, %v2503
        %v2523 = vcombine.high %v2471, %v2503
        %v2524 = vcombine.low %v2480, %v2512
        %v2525 = vcombine.high %v2480, %v2512
        %v2526 = vcombine.low %v2487, %v2519
        %v2527 = vcombine.high %v2487, %v2519
        %v2528 = vcombine.low %v1883, %v1947
        %v2529 = vcombine.high %v1883, %v1947
        %v2531 = vunpack.c.l.s4 1983009808
        %v2532 = vunpack.c.0.s8 %v2531
        %v2533 = vlaneseq
        %v2534 = vshrl.u32 %v2533, 7
        %v2535 = vsub.s32 %v2532, %v2534
        %v2536 = vrot.slane %v2528, %v2535
        %v2538 = vunpack.c.l.s4 1983009808
        %v2539 = vunpack.c.0.s8 %v2538
        %v2540 = vlaneseq
        %v2541 = vshrl.u32 %v2540, 7
        %v2542 = vsub.s32 %v2539, %v2541
        %v2543 = vrot.slane %v2529, %v2542
        %v2544 = vcombine.low %v1915, %v1979
        %v2545 = vcombine.high %v1915, %v1979
        %v2547 = vunpack.c.l.s4 1983009808
        %v2548 = vunpack.c.0.s8 %v2547
        %v2549 = vlaneseq
        %v2550 = vshrl.u32 %v2549, 7
        %v2551 = vsub.s32 %v2548, %v2550
        %v2552 = vrot.slane %v2544, %v2551
        %v2554 = vunpack.c.l.s4 1983009808
        %v2555 = vunpack.c.0.s8 %v2554
        %v2556 = vlaneseq
        %v2557 = vshrl.u32 %v2556, 7
        %v2558 = vsub.s32 %v2555, %v2557
        %v2559 = vrot.slane %v2545, %v2558
        %v2560 = vcombine.low %v2011, %v2075
        %v2561 = vcombine.high %v2011, %v2075
        %v2563 = vunpack.c.l.s4 1983009808
        %v2564 = vunpack.c.0.s8 %v2563
        %v2565 = vlaneseq
        %v2566 = vshrl.u32 %v2565, 7
        %v2567 = vsub.s32 %v2564, %v2566
        %v2568 = vrot.slane %v2560, %v2567
        %v2570 = vunpack.c.l.s4 1983009808
        %v2571 = vunpack.c.0.s8 %v2570
        %v2572 = vlaneseq
        %v2573 = vshrl.u32 %v2572, 7
        %v2574 = vsub.s32 %v2571, %v2573
        %v2575 = vrot.slane %v2561, %v2574
        %v2576 = vcombine.low %v2043, %v2107
        %v2577 = vcombine.high %v2043, %v2107
        %v2579 = vunpack.c.l.s4 1983009808
        %v2580 = vunpack.c.0.s8 %v2579
        %v2581 = vlaneseq
        %v2582 = vshrl.u32 %v2581, 7
        %v2583 = vsub.s32 %v2580, %v2582
        %v2584 = vrot.slane %v2576, %v2583
        %v2586 = vunpack.c.l.s4 1983009808
        %v2587 = vunpack.c.0.s8 %v2586
        %v2588 = vlaneseq
        %v2589 = vshrl.u32 %v2588, 7
        %v2590 = vsub.s32 %v2587, %v2589
        %v2591 = vrot.slane %v2577, %v2590
        %v2592 = vcombine.low %v2536, %v2552
        %v2593 = vcombine.high %v2536, %v2552
        %v2595 = vunpack.c.l.s4 1934713408
        %v2596 = vunpack.c.0.s8 %v2595
        %v2597 = vlaneseq
        %v2598 = vshrl.u32 %v2597, 7
        %v2599 = vsub.s32 %v2596, %v2598
        %v2600 = vrot.slane %v2592, %v2599
        %v2602 = vunpack.c.l.s4 1934713408
        %v2603 = vunpack.c.0.s8 %v2602
        %v2604 = vlaneseq
        %v2605 = vshrl.u32 %v2604, 7
        %v2606 = vsub.s32 %v2603, %v2605
        %v2607 = vrot.slane %v2593, %v2606
        %v2608 = vcombine.low %v2543, %v2559
        %v2609 = vcombine.high %v2543, %v2559
        %v2611 = vunpack.c.l.s4 1934713408
        %v2612 = vunpack.c.0.s8 %v2611
        %v2613 = vlaneseq
        %v2614 = vshrl.u32 %v2613, 7
        %v2615 = vsub.s32 %v2612, %v2614
        %v2616 = vrot.slane %v2608, %v2615
        %v2618 = vunpack.c.l.s4 1934713408
        %v2619 = vunpack.c.0.s8 %v2618
        %v2620 = vlaneseq
        %v2621 = vshrl.u32 %v2620, 7
        %v2622 = vsub.s32 %v2619, %v2621
        %v2623 = vrot.slane %v2609, %v2622
        %v2624 = vcombine.low %v2568, %v2584
        %v2625 = vcombine.high %v2568, %v2584
        %v2627 = vunpack.c.l.s4 1934713408
        %v2628 = vunpack.c.0.s8 %v2627
        %v2629 = vlaneseq
        %v2630 = vshrl.u32 %v2629, 7
        %v2631 = vsub.s32 %v2628, %v2630
        %v2632 = vrot.slane %v2624, %v2631
        %v2634 = vunpack.c.l.s4 1934713408
        %v2635 = vunpack.c.0.s8 %v2634
        %v2636 = vlaneseq
        %v2637 = vshrl.u32 %v2636, 7
        %v2638 = vsub.s32 %v2635, %v2637
        %v2639 = vrot.slane %v2625, %v2638
        %v2640 = vcombine.low %v2575, %v2591
        %v2641 = vcombine.high %v2575, %v2591
        %v2643 = vunpack.c.l.s4 1934713408
        %v2644 = vunpack.c.0.s8 %v2643
        %v2645 = vlaneseq
        %v2646 = vshrl.u32 %v2645, 7
        %v2647 = vsub.s32 %v2644, %v2646
        %v2648 = vrot.slane %v2640, %v2647
        %v2650 = vunpack.c.l.s4 1934713408
        %v2651 = vunpack.c.0.s8 %v2650
        %v2652 = vlaneseq
        %v2653 = vshrl.u32 %v2652, 7
        %v2654 = vsub.s32 %v2651, %v2653
        %v2655 = vrot.slane %v2641, %v2654
        %v2656 = vcombine.low %v2600, %v2632
        %v2657 = vcombine.high %v2600, %v2632
        %v2658 = vcombine.low %v2607, %v2639
        %v2659 = vcombine.high %v2607, %v2639
        %v2660 = vcombine.low %v2616, %v2648
        %v2661 = vcombine.high %v2616, %v2648
        %v2662 = vcombine.low %v2623, %v2655
        %v2663 = vcombine.high %v2623, %v2655
        %v2664 = vcombine.low %v1884, %v1948
        %v2665 = vcombine.high %v1884, %v1948
        %v2667 = vunpack.c.l.s4 1983009808
        %v2668 = vunpack.c.0.s8 %v2667
        %v2669 = vlaneseq
        %v2670 = vshrl.u32 %v2669, 7
        %v2671 = vsub.s32 %v2668, %v2670
        %v2672 = vrot.slane %v2664, %v2671
        %v2674 = vunpack.c.l.s4 1983009808
        %v2675 = vunpack.c.0.s8 %v2674
        %v2676 = vlaneseq
        %v2677 = vshrl.u32 %v2676, 7
        %v2678 = vsub.s32 %v2675, %v2677
        %v2679 = vrot.slane %v2665, %v2678
        %v2680 = vcombine.low %v1916, %v1980
        %v2681 = vcombine.high %v1916, %v1980
        %v2683 = vunpack.c.l.s4 1983009808
        %v2684 = vunpack.c.0.s8 %v2683
        %v2685 = vlaneseq
        %v2686 = vshrl.u32 %v2685, 7
        %v2687 = vsub.s32 %v2684, %v2686
        %v2688 = vrot.slane %v2680, %v2687
        %v2690 = vunpack.c.l.s4 1983009808
        %v2691 = vunpack.c.0.s8 %v2690
        %v2692 = vlaneseq
        %v2693 = vshrl.u32 %v2692, 7
        %v2694 = vsub.s32 %v2691, %v2693
        %v2695 = vrot.slane %v2681, %v2694
        %v2696 = vcombine.low %v2012, %v2076
        %v2697 = vcombine.high %v2012, %v2076
        %v2699 = vunpack.c.l.s4 1983009808
        %v2700 = vunpack.c.0.s8 %v2699
        %v2701 = vlaneseq
        %v2702 = vshrl.u32 %v2701, 7
        %v2703 = vsub.s32 %v2700, %v2702
        %v2704 = vrot.slane %v2696, %v2703
        %v2706 = vunpack.c.l.s4 1983009808
        %v2707 = vunpack.c.0.s8 %v2706
        %v2708 = vlaneseq
        %v2709 = vshrl.u32 %v2708, 7
        %v2710 = vsub.s32 %v2707, %v2709
        %v2711 = vrot.slane %v2697, %v2710
        %v2712 = vcombine.low %v2044, %v2108
        %v2713 = vcombine.high %v2044, %v2108
        %v2715 = vunpack.c.l.s4 1983009808
        %v2716 = vunpack.c.0.s8 %v2715
        %v2717 = vlaneseq
        %v2718 = vshrl.u32 %v2717, 7
        %v2719 = vsub.s32 %v2716, %v2718
        %v2720 = vrot.slane %v2712, %v2719
        %v2722 = vunpack.c.l.s4 1983009808
        %v2723 = vunpack.c.0.s8 %v2722
        %v2724 = vlaneseq
        %v2725 = vshrl.u32 %v2724, 7
        %v2726 = vsub.s32 %v2723, %v2725
        %v2727 = vrot.slane %v2713, %v2726
        %v2728 = vcombine.low %v2672, %v2688
        %v2729 = vcombine.high %v2672, %v2688
        %v2731 = vunpack.c.l.s4 1934713408
        %v2732 = vunpack.c.0.s8 %v2731
        %v2733 = vlaneseq
        %v2734 = vshrl.u32 %v2733, 7
        %v2735 = vsub.s32 %v2732, %v2734
        %v2736 = vrot.slane %v2728, %v2735
        %v2738 = vunpack.c.l.s4 1934713408
        %v2739 = vunpack.c.0.s8 %v2738
        %v2740 = vlaneseq
        %v2741 = vshrl.u32 %v2740, 7
        %v2742 = vsub.s32 %v2739, %v2741
        %v2743 = vrot.slane %v2729, %v2742
        %v2744 = vcombine.low %v2679, %v2695
        %v2745 = vcombine.high %v2679, %v2695
        %v2747 = vunpack.c.l.s4 1934713408
        %v2748 = vunpack.c.0.s8 %v2747
        %v2749 = vlaneseq
        %v2750 = vshrl.u32 %v2749, 7
        %v2751 = vsub.s32 %v2748, %v2750
        %v2752 = vrot.slane %v2744, %v2751
        %v2754 = vunpack.c.l.s4 1934713408
        %v2755 = vunpack.c.0.s8 %v2754
        %v2756 = vlaneseq
        %v2757 = vshrl.u32 %v2756, 7
        %v2758 = vsub.s32 %v2755, %v2757
        %v2759 = vrot.slane %v2745, %v2758
        %v2760 = vcombine.low %v2704, %v2720
        %v2761 = vcombine.high %v2704, %v2720
        %v2763 = vunpack.c.l.s4 1934713408
        %v2764 = vunpack.c.0.s8 %v2763
        %v2765 = vlaneseq
        %v2766 = vshrl.u32 %v2765, 7
        %v2767 = vsub.s32 %v2764, %v2766
        %v2768 = vrot.slane %v2760, %v2767
        %v2770 = vunpack.c.l.s4 1934713408
        %v2771 = vunpack.c.0.s8 %v2770
        %v2772 = vlaneseq
        %v2773 = vshrl.u32 %v2772, 7
        %v2774 = vsub.s32 %v2771, %v2773
        %v2775 = vrot.slane %v2761, %v2774
        %v2776 = vcombine.low %v2711, %v2727
        %v2777 = vcombine.high %v2711, %v2727
        %v2779 = vunpack.c.l.s4 1934713408
        %v2780 = vunpack.c.0.s8 %v2779
        %v2781 = vlaneseq
        %v2782 = vshrl.u32 %v2781, 7
        %v2783 = vsub.s32 %v2780, %v2782
        %v2784 = vrot.slane %v2776, %v2783
        %v2786 = vunpack.c.l.s4 1934713408
        %v2787 = vunpack.c.0.s8 %v2786
        %v2788 = vlaneseq
        %v2789 = vshrl.u32 %v2788, 7
        %v2790 = vsub.s32 %v2787, %v2789
        %v2791 = vrot.slane %v2777, %v2790
        %v2792 = vcombine.low %v2736, %v2768
        %v2793 = vcombine.high %v2736, %v2768
        %v2794 = vcombine.low %v2743, %v2775
        %v2795 = vcombine.high %v2743, %v2775
        %v2796 = vcombine.low %v2752, %v2784
        %v2797 = vcombine.high %v2752, %v2784
        %v2798 = vcombine.low %v2759, %v2791
        %v2799 = vcombine.high %v2759, %v2791
        %v2800 = vcombine.low %v1885, %v1949
        %v2801 = vcombine.high %v1885, %v1949
        %v2803 = vunpack.c.l.s4 1983009808
        %v2804 = vunpack.c.0.s8 %v2803
        %v2805 = vlaneseq
        %v2806 = vshrl.u32 %v2805, 7
        %v2807 = vsub.s32 %v2804, %v2806
        %v2808 = vrot.slane %v2800, %v2807
        %v2810 = vunpack.c.l.s4 1983009808
        %v2811 = vunpack.c.0.s8 %v2810
        %v2812 = vlaneseq
        %v2813 = vshrl.u32 %v2812, 7
        %v2814 = vsub.s32 %v2811, %v2813
        %v2815 = vrot.slane %v2801, %v2814
        %v2816 = vcombine.low %v1917, %v1981
        %v2817 = vcombine.high %v1917, %v1981
        %v2819 = vunpack.c.l.s4 1983009808
        %v2820 = vunpack.c.0.s8 %v2819
        %v2821 = vlaneseq
        %v2822 = vshrl.u32 %v2821, 7
        %v2823 = vsub.s32 %v2820, %v2822
        %v2824 = vrot.slane %v2816, %v2823
        %v2826 = vunpack.c.l.s4 1983009808
        %v2827 = vunpack.c.0.s8 %v2826
        %v2828 = vlaneseq
        %v2829 = vshrl.u32 %v2828, 7
        %v2830 = vsub.s32 %v2827, %v2829
        %v2831 = vrot.slane %v2817, %v2830
        %v2832 = vcombine.low %v2013, %v2077
        %v2833 = vcombine.high %v2013, %v2077
        %v2835 = vunpack.c.l.s4 1983009808
        %v2836 = vunpack.c.0.s8 %v2835
        %v2837 = vlaneseq
        %v2838 = vshrl.u32 %v2837, 7
        %v2839 = vsub.s32 %v2836, %v2838
        %v2840 = vrot.slane %v2832, %v2839
        %v2842 = vunpack.c.l.s4 1983009808
        %v2843 = vunpack.c.0.s8 %v2842
        %v2844 = vlaneseq
        %v2845 = vshrl.u32 %v2844, 7
        %v2846 = vsub.s32 %v2843, %v2845
        %v2847 = vrot.slane %v2833, %v2846
        %v2848 = vcombine.low %v2045, %v2109
        %v2849 = vcombine.high %v2045, %v2109
        %v2851 = vunpack.c.l.s4 1983009808
        %v2852 = vunpack.c.0.s8 %v2851
        %v2853 = vlaneseq
        %v2854 = vshrl.u32 %v2853, 7
        %v2855 = vsub.s32 %v2852, %v2854
        %v2856 = vrot.slane %v2848, %v2855
        %v2858 = vunpack.c.l.s4 1983009808
        %v2859 = vunpack.c.0.s8 %v2858
        %v2860 = vlaneseq
        %v2861 = vshrl.u32 %v2860, 7
        %v2862 = vsub.s32 %v2859, %v2861
        %v2863 = vrot.slane %v2849, %v2862
        %v2864 = vcombine.low %v2808, %v2824
        %v2865 = vcombine.high %v2808, %v2824
        %v2867 = vunpack.c.l.s4 1934713408
        %v2868 = vunpack.c.0.s8 %v2867
        %v2869 = vlaneseq
        %v2870 = vshrl.u32 %v2869, 7
        %v2871 = vsub.s32 %v2868, %v2870
        %v2872 = vrot.slane %v2864, %v2871
        %v2874 = vunpack.c.l.s4 1934713408
        %v2875 = vunpack.c.0.s8 %v2874
        %v2876 = vlaneseq
        %v2877 = vshrl.u32 %v2876, 7
        %v2878 = vsub.s32 %v2875, %v2877
        %v2879 = vrot.slane %v2865, %v2878
        %v2880 = vcombine.low %v2815, %v2831
        %v2881 = vcombine.high %v2815, %v2831
        %v2883 = vunpack.c.l.s4 1934713408
        %v2884 = vunpack.c.0.s8 %v2883
        %v2885 = vlaneseq
        %v2886 = vshrl.u32 %v2885, 7
        %v2887 = vsub.s32 %v2884, %v2886
        %v2888 = vrot.slane %v2880, %v2887
        %v2890 = vunpack.c.l.s4 1934713408
        %v2891 = vunpack.c.0.s8 %v2890
        %v2892 = vlaneseq
        %v2893 = vshrl.u32 %v2892, 7
        %v2894 = vsub.s32 %v2891, %v2893
        %v2895 = vrot.slane %v2881, %v2894
        %v2896 = vcombine.low %v2840, %v2856
        %v2897 = vcombine.high %v2840, %v2856
        %v2899 = vunpack.c.l.s4 1934713408
        %v2900 = vunpack.c.0.s8 %v2899
        %v2901 = vlaneseq
        %v2902 = vshrl.u32 %v2901, 7
        %v2903 = vsub.s32 %v2900, %v2902
        %v2904 = vrot.slane %v2896, %v2903
        %v2906 = vunpack.c.l.s4 1934713408
        %v2907 = vunpack.c.0.s8 %v2906
        %v2908 = vlaneseq
        %v2909 = vshrl.u32 %v2908, 7
        %v2910 = vsub.s32 %v2907, %v2909
        %v2911 = vrot.slane %v2897, %v2910
        %v2912 = vcombine.low %v2847, %v2863
        %v2913 = vcombine.high %v2847, %v2863
        %v2915 = vunpack.c.l.s4 1934713408
        %v2916 = vunpack.c.0.s8 %v2915
        %v2917 = vlaneseq
        %v2918 = vshrl.u32 %v2917, 7
        %v2919 = vsub.s32 %v2916, %v2918
        %v2920 = vrot.slane %v2912, %v2919
        %v2922 = vunpack.c.l.s4 1934713408
        %v2923 = vunpack.c.0.s8 %v2922
        %v2924 = vlaneseq
        %v2925 = vshrl.u32 %v2924, 7
        %v2926 = vsub.s32 %v2923, %v2925
        %v2927 = vrot.slane %v2913, %v2926
        %v2928 = vcombine.low %v2872, %v2904
        %v2929 = vcombine.high %v2872, %v2904
        %v2930 = vcombine.low %v2879, %v2911
        %v2931 = vcombine.high %v2879, %v2911
        %v2932 = vcombine.low %v2888, %v2920
        %v2933 = vcombine.high %v2888, %v2920
        %v2934 = vcombine.low %v2895, %v2927
        %v2935 = vcombine.high %v2895, %v2927
        %v2936 = vld [vmem:[#allocation7] sm:$0xff]
        %v2937 = vld [vmem:[#allocation7 + $0x8] sm:$0xff]
        %v2938 = vld [vmem:[#allocation7 + $0x10] sm:$0xff]
        %v2939 = vld [vmem:[#allocation7 + $0x18] sm:$0xff]
        %v2940 = vld [vmem:[#allocation7 + $0x20] sm:$0xff]
        %v2941 = vld [vmem:[#allocation7 + $0x28] sm:$0xff]
        %v2942 = vld [vmem:[#allocation7 + $0x30] sm:$0xff]
        %v2943 = vld [vmem:[#allocation7 + $0x38] sm:$0xff]
        %v2944 = vld [vmem:[#allocation7 + $0x40] sm:$0xff]
        %v2945 = vld [vmem:[#allocation7 + $0x48] sm:$0xff]
        %v2946 = vld [vmem:[#allocation7 + $0x50] sm:$0xff]
        %v2947 = vld [vmem:[#allocation7 + $0x58] sm:$0xff]
        %v2948 = vld [vmem:[%s5] sm:$0x1]
        %v2950 = vlaneseq
        %v2951 = vshrl.u32 %v2950, 7
        %v2952 = vsub.s32 0, %v2951
        %v2953 = vrot.slane %v2948, %v2952
        %v2967 = vcombine.high %v2936, %v2936
        %v2969 = vunpack.c.l.s4 1983009808
        %v2970 = vunpack.c.0.s8 %v2969
        %v2971 = vlaneseq
        %v2972 = vshrl.u32 %v2971, 7
        %v2973 = vsub.s32 %v2970, %v2972
        %v2974 = vrot.slane %v2936, %v2973
        %v2976 = vunpack.c.l.s4 1983009808
        %v2977 = vunpack.c.0.s8 %v2976
        %v2978 = vlaneseq
        %v2979 = vshrl.u32 %v2978, 7
        %v2980 = vsub.s32 %v2977, %v2979
        %v2981 = vrot.slane %v2967, %v2980
        %v2982 = vcombine.high %v2974, %v2974
        %v2983 = vcombine.high %v2981, %v2981
        %v2984 = vcombine.high %v2937, %v2937
        %v2986 = vunpack.c.l.s4 1983009808
        %v2987 = vunpack.c.0.s8 %v2986
        %v2988 = vlaneseq
        %v2989 = vshrl.u32 %v2988, 7
        %v2990 = vsub.s32 %v2987, %v2989
        %v2991 = vrot.slane %v2937, %v2990
        %v2993 = vunpack.c.l.s4 1983009808
        %v2994 = vunpack.c.0.s8 %v2993
        %v2995 = vlaneseq
        %v2996 = vshrl.u32 %v2995, 7
        %v2997 = vsub.s32 %v2994, %v2996
        %v2998 = vrot.slane %v2984, %v2997
        %v2999 = vcombine.high %v2991, %v2991
        %v3000 = vcombine.high %v2998, %v2998
        %v3001 = vcombine.high %v2938, %v2938
        %v3003 = vunpack.c.l.s4 1983009808
        %v3004 = vunpack.c.0.s8 %v3003
        %v3005 = vlaneseq
        %v3006 = vshrl.u32 %v3005, 7
        %v3007 = vsub.s32 %v3004, %v3006
        %v3008 = vrot.slane %v2938, %v3007
        %v3010 = vunpack.c.l.s4 1983009808
        %v3011 = vunpack.c.0.s8 %v3010
        %v3012 = vlaneseq
        %v3013 = vshrl.u32 %v3012, 7
        %v3014 = vsub.s32 %v3011, %v3013
        %v3015 = vrot.slane %v3001, %v3014
        %v3016 = vcombine.high %v3008, %v3008
        %v3017 = vcombine.high %v3015, %v3015
        %v3018 = vcombine.high %v2939, %v2939
        %v3020 = vunpack.c.l.s4 1983009808
        %v3021 = vunpack.c.0.s8 %v3020
        %v3022 = vlaneseq
        %v3023 = vshrl.u32 %v3022, 7
        %v3024 = vsub.s32 %v3021, %v3023
        %v3025 = vrot.slane %v2939, %v3024
        %v3027 = vunpack.c.l.s4 1983009808
        %v3028 = vunpack.c.0.s8 %v3027
        %v3029 = vlaneseq
        %v3030 = vshrl.u32 %v3029, 7
        %v3031 = vsub.s32 %v3028, %v3030
        %v3032 = vrot.slane %v3018, %v3031
        %v3033 = vcombine.high %v3025, %v3025
        %v3034 = vcombine.high %v3032, %v3032
        %v3035 = vcombine.high %v2940, %v2940
        %v3037 = vunpack.c.l.s4 1983009808
        %v3038 = vunpack.c.0.s8 %v3037
        %v3039 = vlaneseq
        %v3040 = vshrl.u32 %v3039, 7
        %v3041 = vsub.s32 %v3038, %v3040
        %v3042 = vrot.slane %v2940, %v3041
        %v3044 = vunpack.c.l.s4 1983009808
        %v3045 = vunpack.c.0.s8 %v3044
        %v3046 = vlaneseq
        %v3047 = vshrl.u32 %v3046, 7
        %v3048 = vsub.s32 %v3045, %v3047
        %v3049 = vrot.slane %v3035, %v3048
        %v3050 = vcombine.high %v3042, %v3042
        %v3051 = vcombine.high %v3049, %v3049
        %v3052 = vcombine.high %v2941, %v2941
        %v3054 = vunpack.c.l.s4 1983009808
        %v3055 = vunpack.c.0.s8 %v3054
        %v3056 = vlaneseq
        %v3057 = vshrl.u32 %v3056, 7
        %v3058 = vsub.s32 %v3055, %v3057
        %v3059 = vrot.slane %v2941, %v3058
        %v3061 = vunpack.c.l.s4 1983009808
        %v3062 = vunpack.c.0.s8 %v3061
        %v3063 = vlaneseq
        %v3064 = vshrl.u32 %v3063, 7
        %v3065 = vsub.s32 %v3062, %v3064
        %v3066 = vrot.slane %v3052, %v3065
        %v3067 = vcombine.high %v3059, %v3059
        %v3068 = vcombine.high %v3066, %v3066
        %v3069 = vcombine.high %v2942, %v2942
        %v3071 = vunpack.c.l.s4 1983009808
        %v3072 = vunpack.c.0.s8 %v3071
        %v3073 = vlaneseq
        %v3074 = vshrl.u32 %v3073, 7
        %v3075 = vsub.s32 %v3072, %v3074
        %v3076 = vrot.slane %v2942, %v3075
        %v3078 = vunpack.c.l.s4 1983009808
        %v3079 = vunpack.c.0.s8 %v3078
        %v3080 = vlaneseq
        %v3081 = vshrl.u32 %v3080, 7
        %v3082 = vsub.s32 %v3079, %v3081
        %v3083 = vrot.slane %v3069, %v3082
        %v3084 = vcombine.high %v3076, %v3076
        %v3085 = vcombine.high %v3083, %v3083
        %v3086 = vcombine.high %v2943, %v2943
        %v3088 = vunpack.c.l.s4 1983009808
        %v3089 = vunpack.c.0.s8 %v3088
        %v3090 = vlaneseq
        %v3091 = vshrl.u32 %v3090, 7
        %v3092 = vsub.s32 %v3089, %v3091
        %v3093 = vrot.slane %v2943, %v3092
        %v3095 = vunpack.c.l.s4 1983009808
        %v3096 = vunpack.c.0.s8 %v3095
        %v3097 = vlaneseq
        %v3098 = vshrl.u32 %v3097, 7
        %v3099 = vsub.s32 %v3096, %v3098
        %v3100 = vrot.slane %v3086, %v3099
        %v3101 = vcombine.high %v3093, %v3093
        %v3102 = vcombine.high %v3100, %v3100
        %v3103 = vcombine.high %v2944, %v2944
        %v3105 = vunpack.c.l.s4 1983009808
        %v3106 = vunpack.c.0.s8 %v3105
        %v3107 = vlaneseq
        %v3108 = vshrl.u32 %v3107, 7
        %v3109 = vsub.s32 %v3106, %v3108
        %v3110 = vrot.slane %v2944, %v3109
        %v3112 = vunpack.c.l.s4 1983009808
        %v3113 = vunpack.c.0.s8 %v3112
        %v3114 = vlaneseq
        %v3115 = vshrl.u32 %v3114, 7
        %v3116 = vsub.s32 %v3113, %v3115
        %v3117 = vrot.slane %v3103, %v3116
        %v3118 = vcombine.high %v3110, %v3110
        %v3119 = vcombine.high %v3117, %v3117
        %v3120 = vcombine.high %v2945, %v2945
        %v3122 = vunpack.c.l.s4 1983009808
        %v3123 = vunpack.c.0.s8 %v3122
        %v3124 = vlaneseq
        %v3125 = vshrl.u32 %v3124, 7
        %v3126 = vsub.s32 %v3123, %v3125
        %v3127 = vrot.slane %v2945, %v3126
        %v3129 = vunpack.c.l.s4 1983009808
        %v3130 = vunpack.c.0.s8 %v3129
        %v3131 = vlaneseq
        %v3132 = vshrl.u32 %v3131, 7
        %v3133 = vsub.s32 %v3130, %v3132
        %v3134 = vrot.slane %v3120, %v3133
        %v3135 = vcombine.high %v3127, %v3127
        %v3136 = vcombine.high %v3134, %v3134
        %v3137 = vcombine.high %v2946, %v2946
        %v3139 = vunpack.c.l.s4 1983009808
        %v3140 = vunpack.c.0.s8 %v3139
        %v3141 = vlaneseq
        %v3142 = vshrl.u32 %v3141, 7
        %v3143 = vsub.s32 %v3140, %v3142
        %v3144 = vrot.slane %v2946, %v3143
        %v3146 = vunpack.c.l.s4 1983009808
        %v3147 = vunpack.c.0.s8 %v3146
        %v3148 = vlaneseq
        %v3149 = vshrl.u32 %v3148, 7
        %v3150 = vsub.s32 %v3147, %v3149
        %v3151 = vrot.slane %v3137, %v3150
        %v3152 = vcombine.high %v3144, %v3144
        %v3153 = vcombine.high %v3151, %v3151
        %v3154 = vcombine.high %v2947, %v2947
        %v3156 = vunpack.c.l.s4 1983009808
        %v3157 = vunpack.c.0.s8 %v3156
        %v3158 = vlaneseq
        %v3159 = vshrl.u32 %v3158, 7
        %v3160 = vsub.s32 %v3157, %v3159
        %v3161 = vrot.slane %v2947, %v3160
        %v3163 = vunpack.c.l.s4 1983009808
        %v3164 = vunpack.c.0.s8 %v3163
        %v3165 = vlaneseq
        %v3166 = vshrl.u32 %v3165, 7
        %v3167 = vsub.s32 %v3164, %v3166
        %v3168 = vrot.slane %v3154, %v3167
        %v3169 = vcombine.high %v3161, %v3161
        %v3170 = vcombine.high %v3168, %v3168
        %3219 = vmatprep.subr.mxu0 0.0
        %3220 = vmatpush1.xpose.msra.mxu0 0.0
        %3221 = vmatprep.subr.mxu0 0.0
        %3222 = vmatpush1.xpose.msra.mxu0 0.0
        %3223 = vmatprep.subr.mxu0 0.0
        %3224 = vmatpush1.xpose.msra.mxu0 0.0
        %3225 = vmatprep.subr.mxu0 0.0
        %3226 = vmatpush1.xpose.msra.mxu0 0.0
        %3227 = vmatprep.subr.mxu0 0.0
        %3228 = vmatpush1.xpose.msra.mxu0 0.0
        %3229 = vmatprep.subr.mxu0 0.0
        %3230 = vmatpush1.xpose.msra.mxu0 0.0
        %3231 = vmatprep.subr.mxu0 0.0
        %3232 = vmatpush1.xpose.msra.mxu0 0.0
        %3233 = vmatprep.subr.mxu0 0.0
        %3234 = vmatpush1.xpose.msra.mxu0 0.0
        %3235 = vmatprep.subr.mxu0 0.0
        %3236 = vmatpush1.xpose.msra.mxu0 0.0
        %3237 = vmatprep.subr.mxu0 0.0
        %3238 = vmatpush1.xpose.msra.mxu0 0.0
        %3239 = vmatprep.subr.mxu0 0.0
        %3240 = vmatpush1.xpose.msra.mxu0 0.0
        %3241 = vmatprep.subr.mxu0 0.0
        %3242 = vmatpush1.xpose.msra.mxu0 0.0
        %3243 = vmatprep.subr.mxu0 0.0
        %3244 = vmatpush1.xpose.msra.mxu0 0.0
        %3245 = vmatprep.subr.mxu0 0.0
        %3246 = vmatpush1.xpose.msra.mxu0 0.0
        %3247 = vmatprep.subr.mxu0 0.0
        %3248 = vmatpush1.xpose.msra.mxu0 0.0
        %3249 = vmatprep.subr.mxu0 %v2982
        %3250 = vmatpush1.xpose.msra.mxu0 %v2974
        %3251 = vmatprep.subr.mxu0 0.0
        %3252 = vmatpush2.xpose.msra.mxu0 0.0
        %3253 = vmatprep.subr.mxu0 0.0
        %3254 = vmatpush2.xpose.msra.mxu0 0.0
        %3255 = vmatprep.subr.mxu0 0.0
        %3256 = vmatpush2.xpose.msra.mxu0 0.0
        %3257 = vmatprep.subr.mxu0 0.0
        %3258 = vmatpush2.xpose.msra.mxu0 0.0
        %3259 = vmatprep.subr.mxu0 0.0
        %3260 = vmatpush2.xpose.msra.mxu0 0.0
        %3261 = vmatprep.subr.mxu0 0.0
        %3262 = vmatpush2.xpose.msra.mxu0 0.0
        %3263 = vmatprep.subr.mxu0 0.0
        %3264 = vmatpush2.xpose.msra.mxu0 0.0
        %3265 = vmatprep.subr.mxu0 0.0
        %3266 = vmatpush2.xpose.msra.mxu0 0.0
        %3267 = vmatprep.subr.mxu0 0.0
        %3268 = vmatpush2.xpose.msra.mxu0 0.0
        %3269 = vmatprep.subr.mxu0 0.0
        %3270 = vmatpush2.xpose.msra.mxu0 0.0
        %3271 = vmatprep.subr.mxu0 0.0
        %3272 = vmatpush2.xpose.msra.mxu0 0.0
        %3273 = vmatprep.subr.mxu0 0.0
        %3274 = vmatpush2.xpose.msra.mxu0 0.0
        %3275 = vmatprep.subr.mxu0 0.0
        %3276 = vmatpush2.xpose.msra.mxu0 0.0
        %3277 = vmatprep.subr.mxu0 0.0
        %3278 = vmatpush2.xpose.msra.mxu0 0.0
        %3279 = vmatprep.subr.mxu0 0.0
        %3280 = vmatpush2.xpose.msra.mxu0 0.0
        %3281 = vmatprep.subr.mxu0 0.0
        %3282 = vmatpush2.xpose.msra.mxu0 0.0
        %3283 = vmatprep.mubr.f32.mxu0 %v2249
        %3284 = vmatmul.mubr.f32.gmra.mxu0 %v2248
        %v3285 = vpop.f32.mrf.mxu0
        %v3286 = vadd.f32 %v2953, %v3285
        %v3287 = vpop.f32.mrf.mxu0
        %3288 = vdwg.mxu0
        %3289 = vmatprep.subr.mxu0 0.0
        %3290 = vmatpush1.xpose.msra.mxu0 0.0
        %3291 = vmatprep.subr.mxu0 0.0
        %3292 = vmatpush1.xpose.msra.mxu0 0.0
        %3293 = vmatprep.subr.mxu0 0.0
        %3294 = vmatpush1.xpose.msra.mxu0 0.0
        %3295 = vmatprep.subr.mxu0 0.0
        %3296 = vmatpush1.xpose.msra.mxu0 0.0
        %3297 = vmatprep.subr.mxu0 0.0
        %3298 = vmatpush1.xpose.msra.mxu0 0.0
        %3299 = vmatprep.subr.mxu0 0.0
        %3300 = vmatpush1.xpose.msra.mxu0 0.0
        %3301 = vmatprep.subr.mxu0 0.0
        %3302 = vmatpush1.xpose.msra.mxu0 0.0
        %3303 = vmatprep.subr.mxu0 0.0
        %3304 = vmatpush1.xpose.msra.mxu0 0.0
        %3305 = vmatprep.subr.mxu0 0.0
        %3306 = vmatpush1.xpose.msra.mxu0 0.0
        %3307 = vmatprep.subr.mxu0 0.0
        %3308 = vmatpush1.xpose.msra.mxu0 0.0
        %3309 = vmatprep.subr.mxu0 0.0
        %3310 = vmatpush1.xpose.msra.mxu0 0.0
        %3311 = vmatprep.subr.mxu0 0.0
        %3312 = vmatpush1.xpose.msra.mxu0 0.0
        %3313 = vmatprep.subr.mxu0 0.0
        %3314 = vmatpush1.xpose.msra.mxu0 0.0
        %3315 = vmatprep.subr.mxu0 0.0
        %3316 = vmatpush1.xpose.msra.mxu0 0.0
        %3317 = vmatprep.subr.mxu0 0.0
        %3318 = vmatpush1.xpose.msra.mxu0 0.0
        %3319 = vmatprep.subr.mxu0 %v2983
        %3320 = vmatpush1.xpose.msra.mxu0 %v2981
        %3321 = vmatprep.subr.mxu0 0.0
        %3322 = vmatpush2.xpose.msra.mxu0 0.0
        %3323 = vmatprep.subr.mxu0 0.0
        %3324 = vmatpush2.xpose.msra.mxu0 0.0
        %3325 = vmatprep.subr.mxu0 0.0
        %3326 = vmatpush2.xpose.msra.mxu0 0.0
        %3327 = vmatprep.subr.mxu0 0.0
        %3328 = vmatpush2.xpose.msra.mxu0 0.0
        %3329 = vmatprep.subr.mxu0 0.0
        %3330 = vmatpush2.xpose.msra.mxu0 0.0
        %3331 = vmatprep.subr.mxu0 0.0
        %3332 = vmatpush2.xpose.msra.mxu0 0.0
        %3333 = vmatprep.subr.mxu0 0.0
        %3334 = vmatpush2.xpose.msra.mxu0 0.0
        %3335 = vmatprep.subr.mxu0 0.0
        %3336 = vmatpush2.xpose.msra.mxu0 0.0
        %3337 = vmatprep.subr.mxu0 0.0
        %3338 = vmatpush2.xpose.msra.mxu0 0.0
        %3339 = vmatprep.subr.mxu0 0.0
        %3340 = vmatpush2.xpose.msra.mxu0 0.0
        %3341 = vmatprep.subr.mxu0 0.0
        %3342 = vmatpush2.xpose.msra.mxu0 0.0
        %3343 = vmatprep.subr.mxu0 0.0
        %3344 = vmatpush2.xpose.msra.mxu0 0.0
        %3345 = vmatprep.subr.mxu0 0.0
        %3346 = vmatpush2.xpose.msra.mxu0 0.0
        %3347 = vmatprep.subr.mxu0 0.0
        %3348 = vmatpush2.xpose.msra.mxu0 0.0
        %3349 = vmatprep.subr.mxu0 0.0
        %3350 = vmatpush2.xpose.msra.mxu0 0.0
        %3351 = vmatprep.subr.mxu0 0.0
        %3352 = vmatpush2.xpose.msra.mxu0 0.0
        %3353 = vmatprep.mubr.f32.mxu0 %v2251
        %3354 = vmatmul.mubr.f32.gmra.mxu0 %v2250
        %v3355 = vpop.f32.mrf.mxu0
        %v3356 = vadd.f32 %v3286, %v3355
        %v3357 = vpop.f32.mrf.mxu0
        %3358 = vdwg.mxu0
        %3359 = vmatprep.subr.mxu0 0.0
        %3360 = vmatpush1.xpose.msra.mxu0 0.0
        %3361 = vmatprep.subr.mxu0 0.0
        %3362 = vmatpush1.xpose.msra.mxu0 0.0
        %3363 = vmatprep.subr.mxu0 0.0
        %3364 = vmatpush1.xpose.msra.mxu0 0.0
        %3365 = vmatprep.subr.mxu0 0.0
        %3366 = vmatpush1.xpose.msra.mxu0 0.0
        %3367 = vmatprep.subr.mxu0 0.0
        %3368 = vmatpush1.xpose.msra.mxu0 0.0
        %3369 = vmatprep.subr.mxu0 0.0
        %3370 = vmatpush1.xpose.msra.mxu0 0.0
        %3371 = vmatprep.subr.mxu0 0.0
        %3372 = vmatpush1.xpose.msra.mxu0 0.0
        %3373 = vmatprep.subr.mxu0 0.0
        %3374 = vmatpush1.xpose.msra.mxu0 0.0
        %3375 = vmatprep.subr.mxu0 0.0
        %3376 = vmatpush1.xpose.msra.mxu0 0.0
        %3377 = vmatprep.subr.mxu0 0.0
        %3378 = vmatpush1.xpose.msra.mxu0 0.0
        %3379 = vmatprep.subr.mxu0 0.0
        %3380 = vmatpush1.xpose.msra.mxu0 0.0
        %3381 = vmatprep.subr.mxu0 0.0
        %3382 = vmatpush1.xpose.msra.mxu0 0.0
        %3383 = vmatprep.subr.mxu0 0.0
        %3384 = vmatpush1.xpose.msra.mxu0 0.0
        %3385 = vmatprep.subr.mxu0 0.0
        %3386 = vmatpush1.xpose.msra.mxu0 0.0
        %3387 = vmatprep.subr.mxu0 0.0
        %3388 = vmatpush1.xpose.msra.mxu0 0.0
        %3389 = vmatprep.subr.mxu0 %v2999
        %3390 = vmatpush1.xpose.msra.mxu0 %v2991
        %3391 = vmatprep.subr.mxu0 0.0
        %3392 = vmatpush2.xpose.msra.mxu0 0.0
        %3393 = vmatprep.subr.mxu0 0.0
        %3394 = vmatpush2.xpose.msra.mxu0 0.0
        %3395 = vmatprep.subr.mxu0 0.0
        %3396 = vmatpush2.xpose.msra.mxu0 0.0
        %3397 = vmatprep.subr.mxu0 0.0
        %3398 = vmatpush2.xpose.msra.mxu0 0.0
        %3399 = vmatprep.subr.mxu0 0.0
        %3400 = vmatpush2.xpose.msra.mxu0 0.0
        %3401 = vmatprep.subr.mxu0 0.0
        %3402 = vmatpush2.xpose.msra.mxu0 0.0
        %3403 = vmatprep.subr.mxu0 0.0
        %3404 = vmatpush2.xpose.msra.mxu0 0.0
        %3405 = vmatprep.subr.mxu0 0.0
        %3406 = vmatpush2.xpose.msra.mxu0 0.0
        %3407 = vmatprep.subr.mxu0 0.0
        %3408 = vmatpush2.xpose.msra.mxu0 0.0
        %3409 = vmatprep.subr.mxu0 0.0
        %3410 = vmatpush2.xpose.msra.mxu0 0.0
        %3411 = vmatprep.subr.mxu0 0.0
        %3412 = vmatpush2.xpose.msra.mxu0 0.0
        %3413 = vmatprep.subr.mxu0 0.0
        %3414 = vmatpush2.xpose.msra.mxu0 0.0
        %3415 = vmatprep.subr.mxu0 0.0
        %3416 = vmatpush2.xpose.msra.mxu0 0.0
        %3417 = vmatprep.subr.mxu0 0.0
        %3418 = vmatpush2.xpose.msra.mxu0 0.0
        %3419 = vmatprep.subr.mxu0 0.0
        %3420 = vmatpush2.xpose.msra.mxu0 0.0
        %3421 = vmatprep.subr.mxu0 0.0
        %3422 = vmatpush2.xpose.msra.mxu0 0.0
        %3423 = vmatprep.mubr.f32.mxu0 %v2253
        %3424 = vmatmul.mubr.f32.gmra.mxu0 %v2252
        %v3425 = vpop.f32.mrf.mxu0
        %v3426 = vadd.f32 %v3356, %v3425
        %v3427 = vpop.f32.mrf.mxu0
        %3428 = vdwg.mxu0
        %3429 = vmatprep.subr.mxu0 0.0
        %3430 = vmatpush1.xpose.msra.mxu0 0.0
        %3431 = vmatprep.subr.mxu0 0.0
        %3432 = vmatpush1.xpose.msra.mxu0 0.0
        %3433 = vmatprep.subr.mxu0 0.0
        %3434 = vmatpush1.xpose.msra.mxu0 0.0
        %3435 = vmatprep.subr.mxu0 0.0
        %3436 = vmatpush1.xpose.msra.mxu0 0.0
        %3437 = vmatprep.subr.mxu0 0.0
        %3438 = vmatpush1.xpose.msra.mxu0 0.0
        %3439 = vmatprep.subr.mxu0 0.0
        %3440 = vmatpush1.xpose.msra.mxu0 0.0
        %3441 = vmatprep.subr.mxu0 0.0
        %3442 = vmatpush1.xpose.msra.mxu0 0.0
        %3443 = vmatprep.subr.mxu0 0.0
        %3444 = vmatpush1.xpose.msra.mxu0 0.0
        %3445 = vmatprep.subr.mxu0 0.0
        %3446 = vmatpush1.xpose.msra.mxu0 0.0
        %3447 = vmatprep.subr.mxu0 0.0
        %3448 = vmatpush1.xpose.msra.mxu0 0.0
        %3449 = vmatprep.subr.mxu0 0.0
        %3450 = vmatpush1.xpose.msra.mxu0 0.0
        %3451 = vmatprep.subr.mxu0 0.0
        %3452 = vmatpush1.xpose.msra.mxu0 0.0
        %3453 = vmatprep.subr.mxu0 0.0
        %3454 = vmatpush1.xpose.msra.mxu0 0.0
        %3455 = vmatprep.subr.mxu0 0.0
        %3456 = vmatpush1.xpose.msra.mxu0 0.0
        %3457 = vmatprep.subr.mxu0 0.0
        %3458 = vmatpush1.xpose.msra.mxu0 0.0
        %3459 = vmatprep.subr.mxu0 %v3000
        %3460 = vmatpush1.xpose.msra.mxu0 %v2998
        %3461 = vmatprep.subr.mxu0 0.0
        %3462 = vmatpush2.xpose.msra.mxu0 0.0
        %3463 = vmatprep.subr.mxu0 0.0
        %3464 = vmatpush2.xpose.msra.mxu0 0.0
        %3465 = vmatprep.subr.mxu0 0.0
        %3466 = vmatpush2.xpose.msra.mxu0 0.0
        %3467 = vmatprep.subr.mxu0 0.0
        %3468 = vmatpush2.xpose.msra.mxu0 0.0
        %3469 = vmatprep.subr.mxu0 0.0
        %3470 = vmatpush2.xpose.msra.mxu0 0.0
        %3471 = vmatprep.subr.mxu0 0.0
        %3472 = vmatpush2.xpose.msra.mxu0 0.0
        %3473 = vmatprep.subr.mxu0 0.0
        %3474 = vmatpush2.xpose.msra.mxu0 0.0
        %3475 = vmatprep.subr.mxu0 0.0
        %3476 = vmatpush2.xpose.msra.mxu0 0.0
        %3477 = vmatprep.subr.mxu0 0.0
        %3478 = vmatpush2.xpose.msra.mxu0 0.0
        %3479 = vmatprep.subr.mxu0 0.0
        %3480 = vmatpush2.xpose.msra.mxu0 0.0
        %3481 = vmatprep.subr.mxu0 0.0
        %3482 = vmatpush2.xpose.msra.mxu0 0.0
        %3483 = vmatprep.subr.mxu0 0.0
        %3484 = vmatpush2.xpose.msra.mxu0 0.0
        %3485 = vmatprep.subr.mxu0 0.0
        %3486 = vmatpush2.xpose.msra.mxu0 0.0
        %3487 = vmatprep.subr.mxu0 0.0
        %3488 = vmatpush2.xpose.msra.mxu0 0.0
        %3489 = vmatprep.subr.mxu0 0.0
        %3490 = vmatpush2.xpose.msra.mxu0 0.0
        %3491 = vmatprep.subr.mxu0 0.0
        %3492 = vmatpush2.xpose.msra.mxu0 0.0
        %3493 = vmatprep.mubr.f32.mxu0 %v2255
        %3494 = vmatmul.mubr.f32.gmra.mxu0 %v2254
        %v3495 = vpop.f32.mrf.mxu0
        %v3496 = vadd.f32 %v3426, %v3495
        %v3497 = vpop.f32.mrf.mxu0
        %3498 = vdwg.mxu0
        %3499 = vmatprep.subr.mxu0 0.0
        %3500 = vmatpush1.xpose.msra.mxu0 0.0
        %3501 = vmatprep.subr.mxu0 0.0
        %3502 = vmatpush1.xpose.msra.mxu0 0.0
        %3503 = vmatprep.subr.mxu0 0.0
        %3504 = vmatpush1.xpose.msra.mxu0 0.0
        %3505 = vmatprep.subr.mxu0 0.0
        %3506 = vmatpush1.xpose.msra.mxu0 0.0
        %3507 = vmatprep.subr.mxu0 0.0
        %3508 = vmatpush1.xpose.msra.mxu0 0.0
        %3509 = vmatprep.subr.mxu0 0.0
        %3510 = vmatpush1.xpose.msra.mxu0 0.0
        %3511 = vmatprep.subr.mxu0 0.0
        %3512 = vmatpush1.xpose.msra.mxu0 0.0
        %3513 = vmatprep.subr.mxu0 0.0
        %3514 = vmatpush1.xpose.msra.mxu0 0.0
        %3515 = vmatprep.subr.mxu0 0.0
        %3516 = vmatpush1.xpose.msra.mxu0 0.0
        %3517 = vmatprep.subr.mxu0 0.0
        %3518 = vmatpush1.xpose.msra.mxu0 0.0
        %3519 = vmatprep.subr.mxu0 0.0
        %3520 = vmatpush1.xpose.msra.mxu0 0.0
        %3521 = vmatprep.subr.mxu0 0.0
        %3522 = vmatpush1.xpose.msra.mxu0 0.0
        %3523 = vmatprep.subr.mxu0 0.0
        %3524 = vmatpush1.xpose.msra.mxu0 0.0
        %3525 = vmatprep.subr.mxu0 0.0
        %3526 = vmatpush1.xpose.msra.mxu0 0.0
        %3527 = vmatprep.subr.mxu0 0.0
        %3528 = vmatpush1.xpose.msra.mxu0 0.0
        %3529 = vmatprep.subr.mxu0 %v3016
        %3530 = vmatpush1.xpose.msra.mxu0 %v3008
        %3531 = vmatprep.subr.mxu0 0.0
        %3532 = vmatpush2.xpose.msra.mxu0 0.0
        %3533 = vmatprep.subr.mxu0 0.0
        %3534 = vmatpush2.xpose.msra.mxu0 0.0
        %3535 = vmatprep.subr.mxu0 0.0
        %3536 = vmatpush2.xpose.msra.mxu0 0.0
        %3537 = vmatprep.subr.mxu0 0.0
        %3538 = vmatpush2.xpose.msra.mxu0 0.0
        %3539 = vmatprep.subr.mxu0 0.0
        %3540 = vmatpush2.xpose.msra.mxu0 0.0
        %3541 = vmatprep.subr.mxu0 0.0
        %3542 = vmatpush2.xpose.msra.mxu0 0.0
        %3543 = vmatprep.subr.mxu0 0.0
        %3544 = vmatpush2.xpose.msra.mxu0 0.0
        %3545 = vmatprep.subr.mxu0 0.0
        %3546 = vmatpush2.xpose.msra.mxu0 0.0
        %3547 = vmatprep.subr.mxu0 0.0
        %3548 = vmatpush2.xpose.msra.mxu0 0.0
        %3549 = vmatprep.subr.mxu0 0.0
        %3550 = vmatpush2.xpose.msra.mxu0 0.0
        %3551 = vmatprep.subr.mxu0 0.0
        %3552 = vmatpush2.xpose.msra.mxu0 0.0
        %3553 = vmatprep.subr.mxu0 0.0
        %3554 = vmatpush2.xpose.msra.mxu0 0.0
        %3555 = vmatprep.subr.mxu0 0.0
        %3556 = vmatpush2.xpose.msra.mxu0 0.0
        %3557 = vmatprep.subr.mxu0 0.0
        %3558 = vmatpush2.xpose.msra.mxu0 0.0
        %3559 = vmatprep.subr.mxu0 0.0
        %3560 = vmatpush2.xpose.msra.mxu0 0.0
        %3561 = vmatprep.subr.mxu0 0.0
        %3562 = vmatpush2.xpose.msra.mxu0 0.0
        %3563 = vmatprep.mubr.f32.mxu0 %v2385
        %3564 = vmatmul.mubr.f32.gmra.mxu0 %v2384
        %v3565 = vpop.f32.mrf.mxu0
        %v3566 = vadd.f32 %v3496, %v3565
        %v3567 = vpop.f32.mrf.mxu0
        %3568 = vdwg.mxu0
        %3569 = vmatprep.subr.mxu0 0.0
        %3570 = vmatpush1.xpose.msra.mxu0 0.0
        %3571 = vmatprep.subr.mxu0 0.0
        %3572 = vmatpush1.xpose.msra.mxu0 0.0
        %3573 = vmatprep.subr.mxu0 0.0
        %3574 = vmatpush1.xpose.msra.mxu0 0.0
        %3575 = vmatprep.subr.mxu0 0.0
        %3576 = vmatpush1.xpose.msra.mxu0 0.0
        %3577 = vmatprep.subr.mxu0 0.0
        %3578 = vmatpush1.xpose.msra.mxu0 0.0
        %3579 = vmatprep.subr.mxu0 0.0
        %3580 = vmatpush1.xpose.msra.mxu0 0.0
        %3581 = vmatprep.subr.mxu0 0.0
        %3582 = vmatpush1.xpose.msra.mxu0 0.0
        %3583 = vmatprep.subr.mxu0 0.0
        %3584 = vmatpush1.xpose.msra.mxu0 0.0
        %3585 = vmatprep.subr.mxu0 0.0
        %3586 = vmatpush1.xpose.msra.mxu0 0.0
        %3587 = vmatprep.subr.mxu0 0.0
        %3588 = vmatpush1.xpose.msra.mxu0 0.0
        %3589 = vmatprep.subr.mxu0 0.0
        %3590 = vmatpush1.xpose.msra.mxu0 0.0
        %3591 = vmatprep.subr.mxu0 0.0
        %3592 = vmatpush1.xpose.msra.mxu0 0.0
        %3593 = vmatprep.subr.mxu0 0.0
        %3594 = vmatpush1.xpose.msra.mxu0 0.0
        %3595 = vmatprep.subr.mxu0 0.0
        %3596 = vmatpush1.xpose.msra.mxu0 0.0
        %3597 = vmatprep.subr.mxu0 0.0
        %3598 = vmatpush1.xpose.msra.mxu0 0.0
        %3599 = vmatprep.subr.mxu0 %v3017
        %3600 = vmatpush1.xpose.msra.mxu0 %v3015
        %3601 = vmatprep.subr.mxu0 0.0
        %3602 = vmatpush2.xpose.msra.mxu0 0.0
        %3603 = vmatprep.subr.mxu0 0.0
        %3604 = vmatpush2.xpose.msra.mxu0 0.0
        %3605 = vmatprep.subr.mxu0 0.0
        %3606 = vmatpush2.xpose.msra.mxu0 0.0
        %3607 = vmatprep.subr.mxu0 0.0
        %3608 = vmatpush2.xpose.msra.mxu0 0.0
        %3609 = vmatprep.subr.mxu0 0.0
        %3610 = vmatpush2.xpose.msra.mxu0 0.0
        %3611 = vmatprep.subr.mxu0 0.0
        %3612 = vmatpush2.xpose.msra.mxu0 0.0
        %3613 = vmatprep.subr.mxu0 0.0
        %3614 = vmatpush2.xpose.msra.mxu0 0.0
        %3615 = vmatprep.subr.mxu0 0.0
        %3616 = vmatpush2.xpose.msra.mxu0 0.0
        %3617 = vmatprep.subr.mxu0 0.0
        %3618 = vmatpush2.xpose.msra.mxu0 0.0
        %3619 = vmatprep.subr.mxu0 0.0
        %3620 = vmatpush2.xpose.msra.mxu0 0.0
        %3621 = vmatprep.subr.mxu0 0.0
        %3622 = vmatpush2.xpose.msra.mxu0 0.0
        %3623 = vmatprep.subr.mxu0 0.0
        %3624 = vmatpush2.xpose.msra.mxu0 0.0
        %3625 = vmatprep.subr.mxu0 0.0
        %3626 = vmatpush2.xpose.msra.mxu0 0.0
        %3627 = vmatprep.subr.mxu0 0.0
        %3628 = vmatpush2.xpose.msra.mxu0 0.0
        %3629 = vmatprep.subr.mxu0 0.0
        %3630 = vmatpush2.xpose.msra.mxu0 0.0
        %3631 = vmatprep.subr.mxu0 0.0
        %3632 = vmatpush2.xpose.msra.mxu0 0.0
        %3633 = vmatprep.mubr.f32.mxu0 %v2387
        %3634 = vmatmul.mubr.f32.gmra.mxu0 %v2386
        %v3635 = vpop.f32.mrf.mxu0
        %v3636 = vadd.f32 %v3566, %v3635
        %v3637 = vpop.f32.mrf.mxu0
        %3638 = vdwg.mxu0
        %3639 = vmatprep.subr.mxu0 0.0
        %3640 = vmatpush1.xpose.msra.mxu0 0.0
        %3641 = vmatprep.subr.mxu0 0.0
        %3642 = vmatpush1.xpose.msra.mxu0 0.0
        %3643 = vmatprep.subr.mxu0 0.0
        %3644 = vmatpush1.xpose.msra.mxu0 0.0
        %3645 = vmatprep.subr.mxu0 0.0
        %3646 = vmatpush1.xpose.msra.mxu0 0.0
        %3647 = vmatprep.subr.mxu0 0.0
        %3648 = vmatpush1.xpose.msra.mxu0 0.0
        %3649 = vmatprep.subr.mxu0 0.0
        %3650 = vmatpush1.xpose.msra.mxu0 0.0
        %3651 = vmatprep.subr.mxu0 0.0
        %3652 = vmatpush1.xpose.msra.mxu0 0.0
        %3653 = vmatprep.subr.mxu0 0.0
        %3654 = vmatpush1.xpose.msra.mxu0 0.0
        %3655 = vmatprep.subr.mxu0 0.0
        %3656 = vmatpush1.xpose.msra.mxu0 0.0
        %3657 = vmatprep.subr.mxu0 0.0
        %3658 = vmatpush1.xpose.msra.mxu0 0.0
        %3659 = vmatprep.subr.mxu0 0.0
        %3660 = vmatpush1.xpose.msra.mxu0 0.0
        %3661 = vmatprep.subr.mxu0 0.0
        %3662 = vmatpush1.xpose.msra.mxu0 0.0
        %3663 = vmatprep.subr.mxu0 0.0
        %3664 = vmatpush1.xpose.msra.mxu0 0.0
        %3665 = vmatprep.subr.mxu0 0.0
        %3666 = vmatpush1.xpose.msra.mxu0 0.0
        %3667 = vmatprep.subr.mxu0 0.0
        %3668 = vmatpush1.xpose.msra.mxu0 0.0
        %3669 = vmatprep.subr.mxu0 %v3033
        %3670 = vmatpush1.xpose.msra.mxu0 %v3025
        %3671 = vmatprep.subr.mxu0 0.0
        %3672 = vmatpush2.xpose.msra.mxu0 0.0
        %3673 = vmatprep.subr.mxu0 0.0
        %3674 = vmatpush2.xpose.msra.mxu0 0.0
        %3675 = vmatprep.subr.mxu0 0.0
        %3676 = vmatpush2.xpose.msra.mxu0 0.0
        %3677 = vmatprep.subr.mxu0 0.0
        %3678 = vmatpush2.xpose.msra.mxu0 0.0
        %3679 = vmatprep.subr.mxu0 0.0
        %3680 = vmatpush2.xpose.msra.mxu0 0.0
        %3681 = vmatprep.subr.mxu0 0.0
        %3682 = vmatpush2.xpose.msra.mxu0 0.0
        %3683 = vmatprep.subr.mxu0 0.0
        %3684 = vmatpush2.xpose.msra.mxu0 0.0
        %3685 = vmatprep.subr.mxu0 0.0
        %3686 = vmatpush2.xpose.msra.mxu0 0.0
        %3687 = vmatprep.subr.mxu0 0.0
        %3688 = vmatpush2.xpose.msra.mxu0 0.0
        %3689 = vmatprep.subr.mxu0 0.0
        %3690 = vmatpush2.xpose.msra.mxu0 0.0
        %3691 = vmatprep.subr.mxu0 0.0
        %3692 = vmatpush2.xpose.msra.mxu0 0.0
        %3693 = vmatprep.subr.mxu0 0.0
        %3694 = vmatpush2.xpose.msra.mxu0 0.0
        %3695 = vmatprep.subr.mxu0 0.0
        %3696 = vmatpush2.xpose.msra.mxu0 0.0
        %3697 = vmatprep.subr.mxu0 0.0
        %3698 = vmatpush2.xpose.msra.mxu0 0.0
        %3699 = vmatprep.subr.mxu0 0.0
        %3700 = vmatpush2.xpose.msra.mxu0 0.0
        %3701 = vmatprep.subr.mxu0 0.0
        %3702 = vmatpush2.xpose.msra.mxu0 0.0
        %3703 = vmatprep.mubr.f32.mxu0 %v2389
        %3704 = vmatmul.mubr.f32.gmra.mxu0 %v2388
        %v3705 = vpop.f32.mrf.mxu0
        %v3706 = vadd.f32 %v3636, %v3705
        %v3707 = vpop.f32.mrf.mxu0
        %3708 = vdwg.mxu0
        %3709 = vmatprep.subr.mxu0 0.0
        %3710 = vmatpush1.xpose.msra.mxu0 0.0
        %3711 = vmatprep.subr.mxu0 0.0
        %3712 = vmatpush1.xpose.msra.mxu0 0.0
        %3713 = vmatprep.subr.mxu0 0.0
        %3714 = vmatpush1.xpose.msra.mxu0 0.0
        %3715 = vmatprep.subr.mxu0 0.0
        %3716 = vmatpush1.xpose.msra.mxu0 0.0
        %3717 = vmatprep.subr.mxu0 0.0
        %3718 = vmatpush1.xpose.msra.mxu0 0.0
        %3719 = vmatprep.subr.mxu0 0.0
        %3720 = vmatpush1.xpose.msra.mxu0 0.0
        %3721 = vmatprep.subr.mxu0 0.0
        %3722 = vmatpush1.xpose.msra.mxu0 0.0
        %3723 = vmatprep.subr.mxu0 0.0
        %3724 = vmatpush1.xpose.msra.mxu0 0.0
        %3725 = vmatprep.subr.mxu0 0.0
        %3726 = vmatpush1.xpose.msra.mxu0 0.0
        %3727 = vmatprep.subr.mxu0 0.0
        %3728 = vmatpush1.xpose.msra.mxu0 0.0
        %3729 = vmatprep.subr.mxu0 0.0
        %3730 = vmatpush1.xpose.msra.mxu0 0.0
        %3731 = vmatprep.subr.mxu0 0.0
        %3732 = vmatpush1.xpose.msra.mxu0 0.0
        %3733 = vmatprep.subr.mxu0 0.0
        %3734 = vmatpush1.xpose.msra.mxu0 0.0
        %3735 = vmatprep.subr.mxu0 0.0
        %3736 = vmatpush1.xpose.msra.mxu0 0.0
        %3737 = vmatprep.subr.mxu0 0.0
        %3738 = vmatpush1.xpose.msra.mxu0 0.0
        %3739 = vmatprep.subr.mxu0 %v3034
        %3740 = vmatpush1.xpose.msra.mxu0 %v3032
        %3741 = vmatprep.subr.mxu0 0.0
        %3742 = vmatpush2.xpose.msra.mxu0 0.0
        %3743 = vmatprep.subr.mxu0 0.0
        %3744 = vmatpush2.xpose.msra.mxu0 0.0
        %3745 = vmatprep.subr.mxu0 0.0
        %3746 = vmatpush2.xpose.msra.mxu0 0.0
        %3747 = vmatprep.subr.mxu0 0.0
        %3748 = vmatpush2.xpose.msra.mxu0 0.0
        %3749 = vmatprep.subr.mxu0 0.0
        %3750 = vmatpush2.xpose.msra.mxu0 0.0
        %3751 = vmatprep.subr.mxu0 0.0
        %3752 = vmatpush2.xpose.msra.mxu0 0.0
        %3753 = vmatprep.subr.mxu0 0.0
        %3754 = vmatpush2.xpose.msra.mxu0 0.0
        %3755 = vmatprep.subr.mxu0 0.0
        %3756 = vmatpush2.xpose.msra.mxu0 0.0
        %3757 = vmatprep.subr.mxu0 0.0
        %3758 = vmatpush2.xpose.msra.mxu0 0.0
        %3759 = vmatprep.subr.mxu0 0.0
        %3760 = vmatpush2.xpose.msra.mxu0 0.0
        %3761 = vmatprep.subr.mxu0 0.0
        %3762 = vmatpush2.xpose.msra.mxu0 0.0
        %3763 = vmatprep.subr.mxu0 0.0
        %3764 = vmatpush2.xpose.msra.mxu0 0.0
        %3765 = vmatprep.subr.mxu0 0.0
        %3766 = vmatpush2.xpose.msra.mxu0 0.0
        %3767 = vmatprep.subr.mxu0 0.0
        %3768 = vmatpush2.xpose.msra.mxu0 0.0
        %3769 = vmatprep.subr.mxu0 0.0
        %3770 = vmatpush2.xpose.msra.mxu0 0.0
        %3771 = vmatprep.subr.mxu0 0.0
        %3772 = vmatpush2.xpose.msra.mxu0 0.0
        %3773 = vmatprep.mubr.f32.mxu0 %v2391
        %3774 = vmatmul.mubr.f32.gmra.mxu0 %v2390
        %v3775 = vpop.f32.mrf.mxu0
        %v3776 = vadd.f32 %v3706, %v3775
        %v3777 = vpop.f32.mrf.mxu0
        %3778 = vdwg.mxu0
        %3779 = vmatprep.subr.mxu0 0.0
        %3780 = vmatpush1.xpose.msra.mxu0 0.0
        %3781 = vmatprep.subr.mxu0 0.0
        %3782 = vmatpush1.xpose.msra.mxu0 0.0
        %3783 = vmatprep.subr.mxu0 0.0
        %3784 = vmatpush1.xpose.msra.mxu0 0.0
        %3785 = vmatprep.subr.mxu0 0.0
        %3786 = vmatpush1.xpose.msra.mxu0 0.0
        %3787 = vmatprep.subr.mxu0 0.0
        %3788 = vmatpush1.xpose.msra.mxu0 0.0
        %3789 = vmatprep.subr.mxu0 0.0
        %3790 = vmatpush1.xpose.msra.mxu0 0.0
        %3791 = vmatprep.subr.mxu0 0.0
        %3792 = vmatpush1.xpose.msra.mxu0 0.0
        %3793 = vmatprep.subr.mxu0 0.0
        %3794 = vmatpush1.xpose.msra.mxu0 0.0
        %3795 = vmatprep.subr.mxu0 0.0
        %3796 = vmatpush1.xpose.msra.mxu0 0.0
        %3797 = vmatprep.subr.mxu0 0.0
        %3798 = vmatpush1.xpose.msra.mxu0 0.0
        %3799 = vmatprep.subr.mxu0 0.0
        %3800 = vmatpush1.xpose.msra.mxu0 0.0
        %3801 = vmatprep.subr.mxu0 0.0
        %3802 = vmatpush1.xpose.msra.mxu0 0.0
        %3803 = vmatprep.subr.mxu0 0.0
        %3804 = vmatpush1.xpose.msra.mxu0 0.0
        %3805 = vmatprep.subr.mxu0 0.0
        %3806 = vmatpush1.xpose.msra.mxu0 0.0
        %3807 = vmatprep.subr.mxu0 0.0
        %3808 = vmatpush1.xpose.msra.mxu0 0.0
        %3809 = vmatprep.subr.mxu0 %v3050
        %3810 = vmatpush1.xpose.msra.mxu0 %v3042
        %3811 = vmatprep.subr.mxu0 0.0
        %3812 = vmatpush2.xpose.msra.mxu0 0.0
        %3813 = vmatprep.subr.mxu0 0.0
        %3814 = vmatpush2.xpose.msra.mxu0 0.0
        %3815 = vmatprep.subr.mxu0 0.0
        %3816 = vmatpush2.xpose.msra.mxu0 0.0
        %3817 = vmatprep.subr.mxu0 0.0
        %3818 = vmatpush2.xpose.msra.mxu0 0.0
        %3819 = vmatprep.subr.mxu0 0.0
        %3820 = vmatpush2.xpose.msra.mxu0 0.0
        %3821 = vmatprep.subr.mxu0 0.0
        %3822 = vmatpush2.xpose.msra.mxu0 0.0
        %3823 = vmatprep.subr.mxu0 0.0
        %3824 = vmatpush2.xpose.msra.mxu0 0.0
        %3825 = vmatprep.subr.mxu0 0.0
        %3826 = vmatpush2.xpose.msra.mxu0 0.0
        %3827 = vmatprep.subr.mxu0 0.0
        %3828 = vmatpush2.xpose.msra.mxu0 0.0
        %3829 = vmatprep.subr.mxu0 0.0
        %3830 = vmatpush2.xpose.msra.mxu0 0.0
        %3831 = vmatprep.subr.mxu0 0.0
        %3832 = vmatpush2.xpose.msra.mxu0 0.0
        %3833 = vmatprep.subr.mxu0 0.0
        %3834 = vmatpush2.xpose.msra.mxu0 0.0
        %3835 = vmatprep.subr.mxu0 0.0
        %3836 = vmatpush2.xpose.msra.mxu0 0.0
        %3837 = vmatprep.subr.mxu0 0.0
        %3838 = vmatpush2.xpose.msra.mxu0 0.0
        %3839 = vmatprep.subr.mxu0 0.0
        %3840 = vmatpush2.xpose.msra.mxu0 0.0
        %3841 = vmatprep.subr.mxu0 0.0
        %3842 = vmatpush2.xpose.msra.mxu0 0.0
        %3843 = vmatprep.mubr.f32.mxu0 %v2521
        %3844 = vmatmul.mubr.f32.gmra.mxu0 %v2520
        %v3845 = vpop.f32.mrf.mxu0
        %v3846 = vadd.f32 %v3776, %v3845
        %v3847 = vpop.f32.mrf.mxu0
        %3848 = vdwg.mxu0
        %3849 = vmatprep.subr.mxu0 0.0
        %3850 = vmatpush1.xpose.msra.mxu0 0.0
        %3851 = vmatprep.subr.mxu0 0.0
        %3852 = vmatpush1.xpose.msra.mxu0 0.0
        %3853 = vmatprep.subr.mxu0 0.0
        %3854 = vmatpush1.xpose.msra.mxu0 0.0
        %3855 = vmatprep.subr.mxu0 0.0
        %3856 = vmatpush1.xpose.msra.mxu0 0.0
        %3857 = vmatprep.subr.mxu0 0.0
        %3858 = vmatpush1.xpose.msra.mxu0 0.0
        %3859 = vmatprep.subr.mxu0 0.0
        %3860 = vmatpush1.xpose.msra.mxu0 0.0
        %3861 = vmatprep.subr.mxu0 0.0
        %3862 = vmatpush1.xpose.msra.mxu0 0.0
        %3863 = vmatprep.subr.mxu0 0.0
        %3864 = vmatpush1.xpose.msra.mxu0 0.0
        %3865 = vmatprep.subr.mxu0 0.0
        %3866 = vmatpush1.xpose.msra.mxu0 0.0
        %3867 = vmatprep.subr.mxu0 0.0
        %3868 = vmatpush1.xpose.msra.mxu0 0.0
        %3869 = vmatprep.subr.mxu0 0.0
        %3870 = vmatpush1.xpose.msra.mxu0 0.0
        %3871 = vmatprep.subr.mxu0 0.0
        %3872 = vmatpush1.xpose.msra.mxu0 0.0
        %3873 = vmatprep.subr.mxu0 0.0
        %3874 = vmatpush1.xpose.msra.mxu0 0.0
        %3875 = vmatprep.subr.mxu0 0.0
        %3876 = vmatpush1.xpose.msra.mxu0 0.0
        %3877 = vmatprep.subr.mxu0 0.0
        %3878 = vmatpush1.xpose.msra.mxu0 0.0
        %3879 = vmatprep.subr.mxu0 %v3051
        %3880 = vmatpush1.xpose.msra.mxu0 %v3049
        %3881 = vmatprep.subr.mxu0 0.0
        %3882 = vmatpush2.xpose.msra.mxu0 0.0
        %3883 = vmatprep.subr.mxu0 0.0
        %3884 = vmatpush2.xpose.msra.mxu0 0.0
        %3885 = vmatprep.subr.mxu0 0.0
        %3886 = vmatpush2.xpose.msra.mxu0 0.0
        %3887 = vmatprep.subr.mxu0 0.0
        %3888 = vmatpush2.xpose.msra.mxu0 0.0
        %3889 = vmatprep.subr.mxu0 0.0
        %3890 = vmatpush2.xpose.msra.mxu0 0.0
        %3891 = vmatprep.subr.mxu0 0.0
        %3892 = vmatpush2.xpose.msra.mxu0 0.0
        %3893 = vmatprep.subr.mxu0 0.0
        %3894 = vmatpush2.xpose.msra.mxu0 0.0
        %3895 = vmatprep.subr.mxu0 0.0
        %3896 = vmatpush2.xpose.msra.mxu0 0.0
        %3897 = vmatprep.subr.mxu0 0.0
        %3898 = vmatpush2.xpose.msra.mxu0 0.0
        %3899 = vmatprep.subr.mxu0 0.0
        %3900 = vmatpush2.xpose.msra.mxu0 0.0
        %3901 = vmatprep.subr.mxu0 0.0
        %3902 = vmatpush2.xpose.msra.mxu0 0.0
        %3903 = vmatprep.subr.mxu0 0.0
        %3904 = vmatpush2.xpose.msra.mxu0 0.0
        %3905 = vmatprep.subr.mxu0 0.0
        %3906 = vmatpush2.xpose.msra.mxu0 0.0
        %3907 = vmatprep.subr.mxu0 0.0
        %3908 = vmatpush2.xpose.msra.mxu0 0.0
        %3909 = vmatprep.subr.mxu0 0.0
        %3910 = vmatpush2.xpose.msra.mxu0 0.0
        %3911 = vmatprep.subr.mxu0 0.0
        %3912 = vmatpush2.xpose.msra.mxu0 0.0
        %3913 = vmatprep.mubr.f32.mxu0 %v2523
        %3914 = vmatmul.mubr.f32.gmra.mxu0 %v2522
        %v3915 = vpop.f32.mrf.mxu0
        %v3916 = vadd.f32 %v3846, %v3915
        %v3917 = vpop.f32.mrf.mxu0
        %3918 = vdwg.mxu0
        %3919 = vmatprep.subr.mxu0 0.0
        %3920 = vmatpush1.xpose.msra.mxu0 0.0
        %3921 = vmatprep.subr.mxu0 0.0
        %3922 = vmatpush1.xpose.msra.mxu0 0.0
        %3923 = vmatprep.subr.mxu0 0.0
        %3924 = vmatpush1.xpose.msra.mxu0 0.0
        %3925 = vmatprep.subr.mxu0 0.0
        %3926 = vmatpush1.xpose.msra.mxu0 0.0
        %3927 = vmatprep.subr.mxu0 0.0
        %3928 = vmatpush1.xpose.msra.mxu0 0.0
        %3929 = vmatprep.subr.mxu0 0.0
        %3930 = vmatpush1.xpose.msra.mxu0 0.0
        %3931 = vmatprep.subr.mxu0 0.0
        %3932 = vmatpush1.xpose.msra.mxu0 0.0
        %3933 = vmatprep.subr.mxu0 0.0
        %3934 = vmatpush1.xpose.msra.mxu0 0.0
        %3935 = vmatprep.subr.mxu0 0.0
        %3936 = vmatpush1.xpose.msra.mxu0 0.0
        %3937 = vmatprep.subr.mxu0 0.0
        %3938 = vmatpush1.xpose.msra.mxu0 0.0
        %3939 = vmatprep.subr.mxu0 0.0
        %3940 = vmatpush1.xpose.msra.mxu0 0.0
        %3941 = vmatprep.subr.mxu0 0.0
        %3942 = vmatpush1.xpose.msra.mxu0 0.0
        %3943 = vmatprep.subr.mxu0 0.0
        %3944 = vmatpush1.xpose.msra.mxu0 0.0
        %3945 = vmatprep.subr.mxu0 0.0
        %3946 = vmatpush1.xpose.msra.mxu0 0.0
        %3947 = vmatprep.subr.mxu0 0.0
        %3948 = vmatpush1.xpose.msra.mxu0 0.0
        %3949 = vmatprep.subr.mxu0 %v3067
        %3950 = vmatpush1.xpose.msra.mxu0 %v3059
        %3951 = vmatprep.subr.mxu0 0.0
        %3952 = vmatpush2.xpose.msra.mxu0 0.0
        %3953 = vmatprep.subr.mxu0 0.0
        %3954 = vmatpush2.xpose.msra.mxu0 0.0
        %3955 = vmatprep.subr.mxu0 0.0
        %3956 = vmatpush2.xpose.msra.mxu0 0.0
        %3957 = vmatprep.subr.mxu0 0.0
        %3958 = vmatpush2.xpose.msra.mxu0 0.0
        %3959 = vmatprep.subr.mxu0 0.0
        %3960 = vmatpush2.xpose.msra.mxu0 0.0
        %3961 = vmatprep.subr.mxu0 0.0
        %3962 = vmatpush2.xpose.msra.mxu0 0.0
        %3963 = vmatprep.subr.mxu0 0.0
        %3964 = vmatpush2.xpose.msra.mxu0 0.0
        %3965 = vmatprep.subr.mxu0 0.0
        %3966 = vmatpush2.xpose.msra.mxu0 0.0
        %3967 = vmatprep.subr.mxu0 0.0
        %3968 = vmatpush2.xpose.msra.mxu0 0.0
        %3969 = vmatprep.subr.mxu0 0.0
        %3970 = vmatpush2.xpose.msra.mxu0 0.0
        %3971 = vmatprep.subr.mxu0 0.0
        %3972 = vmatpush2.xpose.msra.mxu0 0.0
        %3973 = vmatprep.subr.mxu0 0.0
        %3974 = vmatpush2.xpose.msra.mxu0 0.0
        %3975 = vmatprep.subr.mxu0 0.0
        %3976 = vmatpush2.xpose.msra.mxu0 0.0
        %3977 = vmatprep.subr.mxu0 0.0
        %3978 = vmatpush2.xpose.msra.mxu0 0.0
        %3979 = vmatprep.subr.mxu0 0.0
        %3980 = vmatpush2.xpose.msra.mxu0 0.0
        %3981 = vmatprep.subr.mxu0 0.0
        %3982 = vmatpush2.xpose.msra.mxu0 0.0
        %3983 = vmatprep.mubr.f32.mxu0 %v2525
        %3984 = vmatmul.mubr.f32.gmra.mxu0 %v2524
        %v3985 = vpop.f32.mrf.mxu0
        %v3986 = vadd.f32 %v3916, %v3985
        %v3987 = vpop.f32.mrf.mxu0
        %3988 = vdwg.mxu0
        %3989 = vmatprep.subr.mxu0 0.0
        %3990 = vmatpush1.xpose.msra.mxu0 0.0
        %3991 = vmatprep.subr.mxu0 0.0
        %3992 = vmatpush1.xpose.msra.mxu0 0.0
        %3993 = vmatprep.subr.mxu0 0.0
        %3994 = vmatpush1.xpose.msra.mxu0 0.0
        %3995 = vmatprep.subr.mxu0 0.0
        %3996 = vmatpush1.xpose.msra.mxu0 0.0
        %3997 = vmatprep.subr.mxu0 0.0
        %3998 = vmatpush1.xpose.msra.mxu0 0.0
        %3999 = vmatprep.subr.mxu0 0.0
        %4000 = vmatpush1.xpose.msra.mxu0 0.0
        %4001 = vmatprep.subr.mxu0 0.0
        %4002 = vmatpush1.xpose.msra.mxu0 0.0
        %4003 = vmatprep.subr.mxu0 0.0
        %4004 = vmatpush1.xpose.msra.mxu0 0.0
        %4005 = vmatprep.subr.mxu0 0.0
        %4006 = vmatpush1.xpose.msra.mxu0 0.0
        %4007 = vmatprep.subr.mxu0 0.0
        %4008 = vmatpush1.xpose.msra.mxu0 0.0
        %4009 = vmatprep.subr.mxu0 0.0
        %4010 = vmatpush1.xpose.msra.mxu0 0.0
        %4011 = vmatprep.subr.mxu0 0.0
        %4012 = vmatpush1.xpose.msra.mxu0 0.0
        %4013 = vmatprep.subr.mxu0 0.0
        %4014 = vmatpush1.xpose.msra.mxu0 0.0
        %4015 = vmatprep.subr.mxu0 0.0
        %4016 = vmatpush1.xpose.msra.mxu0 0.0
        %4017 = vmatprep.subr.mxu0 0.0
        %4018 = vmatpush1.xpose.msra.mxu0 0.0
        %4019 = vmatprep.subr.mxu0 %v3068
        %4020 = vmatpush1.xpose.msra.mxu0 %v3066
        %4021 = vmatprep.subr.mxu0 0.0
        %4022 = vmatpush2.xpose.msra.mxu0 0.0
        %4023 = vmatprep.subr.mxu0 0.0
        %4024 = vmatpush2.xpose.msra.mxu0 0.0
        %4025 = vmatprep.subr.mxu0 0.0
        %4026 = vmatpush2.xpose.msra.mxu0 0.0
        %4027 = vmatprep.subr.mxu0 0.0
        %4028 = vmatpush2.xpose.msra.mxu0 0.0
        %4029 = vmatprep.subr.mxu0 0.0
        %4030 = vmatpush2.xpose.msra.mxu0 0.0
        %4031 = vmatprep.subr.mxu0 0.0
        %4032 = vmatpush2.xpose.msra.mxu0 0.0
        %4033 = vmatprep.subr.mxu0 0.0
        %4034 = vmatpush2.xpose.msra.mxu0 0.0
        %4035 = vmatprep.subr.mxu0 0.0
        %4036 = vmatpush2.xpose.msra.mxu0 0.0
        %4037 = vmatprep.subr.mxu0 0.0
        %4038 = vmatpush2.xpose.msra.mxu0 0.0
        %4039 = vmatprep.subr.mxu0 0.0
        %4040 = vmatpush2.xpose.msra.mxu0 0.0
        %4041 = vmatprep.subr.mxu0 0.0
        %4042 = vmatpush2.xpose.msra.mxu0 0.0
        %4043 = vmatprep.subr.mxu0 0.0
        %4044 = vmatpush2.xpose.msra.mxu0 0.0
        %4045 = vmatprep.subr.mxu0 0.0
        %4046 = vmatpush2.xpose.msra.mxu0 0.0
        %4047 = vmatprep.subr.mxu0 0.0
        %4048 = vmatpush2.xpose.msra.mxu0 0.0
        %4049 = vmatprep.subr.mxu0 0.0
        %4050 = vmatpush2.xpose.msra.mxu0 0.0
        %4051 = vmatprep.subr.mxu0 0.0
        %4052 = vmatpush2.xpose.msra.mxu0 0.0
        %4053 = vmatprep.mubr.f32.mxu0 %v2527
        %4054 = vmatmul.mubr.f32.gmra.mxu0 %v2526
        %v4055 = vpop.f32.mrf.mxu0
        %v4056 = vadd.f32 %v3986, %v4055
        %v4057 = vpop.f32.mrf.mxu0
        %4058 = vdwg.mxu0
        %4059 = vmatprep.subr.mxu0 0.0
        %4060 = vmatpush1.xpose.msra.mxu0 0.0
        %4061 = vmatprep.subr.mxu0 0.0
        %4062 = vmatpush1.xpose.msra.mxu0 0.0
        %4063 = vmatprep.subr.mxu0 0.0
        %4064 = vmatpush1.xpose.msra.mxu0 0.0
        %4065 = vmatprep.subr.mxu0 0.0
        %4066 = vmatpush1.xpose.msra.mxu0 0.0
        %4067 = vmatprep.subr.mxu0 0.0
        %4068 = vmatpush1.xpose.msra.mxu0 0.0
        %4069 = vmatprep.subr.mxu0 0.0
        %4070 = vmatpush1.xpose.msra.mxu0 0.0
        %4071 = vmatprep.subr.mxu0 0.0
        %4072 = vmatpush1.xpose.msra.mxu0 0.0
        %4073 = vmatprep.subr.mxu0 0.0
        %4074 = vmatpush1.xpose.msra.mxu0 0.0
        %4075 = vmatprep.subr.mxu0 0.0
        %4076 = vmatpush1.xpose.msra.mxu0 0.0
        %4077 = vmatprep.subr.mxu0 0.0
        %4078 = vmatpush1.xpose.msra.mxu0 0.0
        %4079 = vmatprep.subr.mxu0 0.0
        %4080 = vmatpush1.xpose.msra.mxu0 0.0
        %4081 = vmatprep.subr.mxu0 0.0
        %4082 = vmatpush1.xpose.msra.mxu0 0.0
        %4083 = vmatprep.subr.mxu0 0.0
        %4084 = vmatpush1.xpose.msra.mxu0 0.0
        %4085 = vmatprep.subr.mxu0 0.0
        %4086 = vmatpush1.xpose.msra.mxu0 0.0
        %4087 = vmatprep.subr.mxu0 0.0
        %4088 = vmatpush1.xpose.msra.mxu0 0.0
        %4089 = vmatprep.subr.mxu0 %v3084
        %4090 = vmatpush1.xpose.msra.mxu0 %v3076
        %4091 = vmatprep.subr.mxu0 0.0
        %4092 = vmatpush2.xpose.msra.mxu0 0.0
        %4093 = vmatprep.subr.mxu0 0.0
        %4094 = vmatpush2.xpose.msra.mxu0 0.0
        %4095 = vmatprep.subr.mxu0 0.0
        %4096 = vmatpush2.xpose.msra.mxu0 0.0
        %4097 = vmatprep.subr.mxu0 0.0
        %4098 = vmatpush2.xpose.msra.mxu0 0.0
        %4099 = vmatprep.subr.mxu0 0.0
        %4100 = vmatpush2.xpose.msra.mxu0 0.0
        %4101 = vmatprep.subr.mxu0 0.0
        %4102 = vmatpush2.xpose.msra.mxu0 0.0
        %4103 = vmatprep.subr.mxu0 0.0
        %4104 = vmatpush2.xpose.msra.mxu0 0.0
        %4105 = vmatprep.subr.mxu0 0.0
        %4106 = vmatpush2.xpose.msra.mxu0 0.0
        %4107 = vmatprep.subr.mxu0 0.0
        %4108 = vmatpush2.xpose.msra.mxu0 0.0
        %4109 = vmatprep.subr.mxu0 0.0
        %4110 = vmatpush2.xpose.msra.mxu0 0.0
        %4111 = vmatprep.subr.mxu0 0.0
        %4112 = vmatpush2.xpose.msra.mxu0 0.0
        %4113 = vmatprep.subr.mxu0 0.0
        %4114 = vmatpush2.xpose.msra.mxu0 0.0
        %4115 = vmatprep.subr.mxu0 0.0
        %4116 = vmatpush2.xpose.msra.mxu0 0.0
        %4117 = vmatprep.subr.mxu0 0.0
        %4118 = vmatpush2.xpose.msra.mxu0 0.0
        %4119 = vmatprep.subr.mxu0 0.0
        %4120 = vmatpush2.xpose.msra.mxu0 0.0
        %4121 = vmatprep.subr.mxu0 0.0
        %4122 = vmatpush2.xpose.msra.mxu0 0.0
        %4123 = vmatprep.mubr.f32.mxu0 %v2657
        %4124 = vmatmul.mubr.f32.gmra.mxu0 %v2656
        %v4125 = vpop.f32.mrf.mxu0
        %v4126 = vadd.f32 %v4056, %v4125
        %v4127 = vpop.f32.mrf.mxu0
        %4128 = vdwg.mxu0
        %4129 = vmatprep.subr.mxu0 0.0
        %4130 = vmatpush1.xpose.msra.mxu0 0.0
        %4131 = vmatprep.subr.mxu0 0.0
        %4132 = vmatpush1.xpose.msra.mxu0 0.0
        %4133 = vmatprep.subr.mxu0 0.0
        %4134 = vmatpush1.xpose.msra.mxu0 0.0
        %4135 = vmatprep.subr.mxu0 0.0
        %4136 = vmatpush1.xpose.msra.mxu0 0.0
        %4137 = vmatprep.subr.mxu0 0.0
        %4138 = vmatpush1.xpose.msra.mxu0 0.0
        %4139 = vmatprep.subr.mxu0 0.0
        %4140 = vmatpush1.xpose.msra.mxu0 0.0
        %4141 = vmatprep.subr.mxu0 0.0
        %4142 = vmatpush1.xpose.msra.mxu0 0.0
        %4143 = vmatprep.subr.mxu0 0.0
        %4144 = vmatpush1.xpose.msra.mxu0 0.0
        %4145 = vmatprep.subr.mxu0 0.0
        %4146 = vmatpush1.xpose.msra.mxu0 0.0
        %4147 = vmatprep.subr.mxu0 0.0
        %4148 = vmatpush1.xpose.msra.mxu0 0.0
        %4149 = vmatprep.subr.mxu0 0.0
        %4150 = vmatpush1.xpose.msra.mxu0 0.0
        %4151 = vmatprep.subr.mxu0 0.0
        %4152 = vmatpush1.xpose.msra.mxu0 0.0
        %4153 = vmatprep.subr.mxu0 0.0
        %4154 = vmatpush1.xpose.msra.mxu0 0.0
        %4155 = vmatprep.subr.mxu0 0.0
        %4156 = vmatpush1.xpose.msra.mxu0 0.0
        %4157 = vmatprep.subr.mxu0 0.0
        %4158 = vmatpush1.xpose.msra.mxu0 0.0
        %4159 = vmatprep.subr.mxu0 %v3085
        %4160 = vmatpush1.xpose.msra.mxu0 %v3083
        %4161 = vmatprep.subr.mxu0 0.0
        %4162 = vmatpush2.xpose.msra.mxu0 0.0
        %4163 = vmatprep.subr.mxu0 0.0
        %4164 = vmatpush2.xpose.msra.mxu0 0.0
        %4165 = vmatprep.subr.mxu0 0.0
        %4166 = vmatpush2.xpose.msra.mxu0 0.0
        %4167 = vmatprep.subr.mxu0 0.0
        %4168 = vmatpush2.xpose.msra.mxu0 0.0
        %4169 = vmatprep.subr.mxu0 0.0
        %4170 = vmatpush2.xpose.msra.mxu0 0.0
        %4171 = vmatprep.subr.mxu0 0.0
        %4172 = vmatpush2.xpose.msra.mxu0 0.0
        %4173 = vmatprep.subr.mxu0 0.0
        %4174 = vmatpush2.xpose.msra.mxu0 0.0
        %4175 = vmatprep.subr.mxu0 0.0
        %4176 = vmatpush2.xpose.msra.mxu0 0.0
        %4177 = vmatprep.subr.mxu0 0.0
        %4178 = vmatpush2.xpose.msra.mxu0 0.0
        %4179 = vmatprep.subr.mxu0 0.0
        %4180 = vmatpush2.xpose.msra.mxu0 0.0
        %4181 = vmatprep.subr.mxu0 0.0
        %4182 = vmatpush2.xpose.msra.mxu0 0.0
        %4183 = vmatprep.subr.mxu0 0.0
        %4184 = vmatpush2.xpose.msra.mxu0 0.0
        %4185 = vmatprep.subr.mxu0 0.0
        %4186 = vmatpush2.xpose.msra.mxu0 0.0
        %4187 = vmatprep.subr.mxu0 0.0
        %4188 = vmatpush2.xpose.msra.mxu0 0.0
        %4189 = vmatprep.subr.mxu0 0.0
        %4190 = vmatpush2.xpose.msra.mxu0 0.0
        %4191 = vmatprep.subr.mxu0 0.0
        %4192 = vmatpush2.xpose.msra.mxu0 0.0
        %4193 = vmatprep.mubr.f32.mxu0 %v2659
        %4194 = vmatmul.mubr.f32.gmra.mxu0 %v2658
        %v4195 = vpop.f32.mrf.mxu0
        %v4196 = vadd.f32 %v4126, %v4195
        %v4197 = vpop.f32.mrf.mxu0
        %4198 = vdwg.mxu0
        %4199 = vmatprep.subr.mxu0 0.0
        %4200 = vmatpush1.xpose.msra.mxu0 0.0
        %4201 = vmatprep.subr.mxu0 0.0
        %4202 = vmatpush1.xpose.msra.mxu0 0.0
        %4203 = vmatprep.subr.mxu0 0.0
        %4204 = vmatpush1.xpose.msra.mxu0 0.0
        %4205 = vmatprep.subr.mxu0 0.0
        %4206 = vmatpush1.xpose.msra.mxu0 0.0
        %4207 = vmatprep.subr.mxu0 0.0
        %4208 = vmatpush1.xpose.msra.mxu0 0.0
        %4209 = vmatprep.subr.mxu0 0.0
        %4210 = vmatpush1.xpose.msra.mxu0 0.0
        %4211 = vmatprep.subr.mxu0 0.0
        %4212 = vmatpush1.xpose.msra.mxu0 0.0
        %4213 = vmatprep.subr.mxu0 0.0
        %4214 = vmatpush1.xpose.msra.mxu0 0.0
        %4215 = vmatprep.subr.mxu0 0.0
        %4216 = vmatpush1.xpose.msra.mxu0 0.0
        %4217 = vmatprep.subr.mxu0 0.0
        %4218 = vmatpush1.xpose.msra.mxu0 0.0
        %4219 = vmatprep.subr.mxu0 0.0
        %4220 = vmatpush1.xpose.msra.mxu0 0.0
        %4221 = vmatprep.subr.mxu0 0.0
        %4222 = vmatpush1.xpose.msra.mxu0 0.0
        %4223 = vmatprep.subr.mxu0 0.0
        %4224 = vmatpush1.xpose.msra.mxu0 0.0
        %4225 = vmatprep.subr.mxu0 0.0
        %4226 = vmatpush1.xpose.msra.mxu0 0.0
        %4227 = vmatprep.subr.mxu0 0.0
        %4228 = vmatpush1.xpose.msra.mxu0 0.0
        %4229 = vmatprep.subr.mxu0 %v3101
        %4230 = vmatpush1.xpose.msra.mxu0 %v3093
        %4231 = vmatprep.subr.mxu0 0.0
        %4232 = vmatpush2.xpose.msra.mxu0 0.0
        %4233 = vmatprep.subr.mxu0 0.0
        %4234 = vmatpush2.xpose.msra.mxu0 0.0
        %4235 = vmatprep.subr.mxu0 0.0
        %4236 = vmatpush2.xpose.msra.mxu0 0.0
        %4237 = vmatprep.subr.mxu0 0.0
        %4238 = vmatpush2.xpose.msra.mxu0 0.0
        %4239 = vmatprep.subr.mxu0 0.0
        %4240 = vmatpush2.xpose.msra.mxu0 0.0
        %4241 = vmatprep.subr.mxu0 0.0
        %4242 = vmatpush2.xpose.msra.mxu0 0.0
        %4243 = vmatprep.subr.mxu0 0.0
        %4244 = vmatpush2.xpose.msra.mxu0 0.0
        %4245 = vmatprep.subr.mxu0 0.0
        %4246 = vmatpush2.xpose.msra.mxu0 0.0
        %4247 = vmatprep.subr.mxu0 0.0
        %4248 = vmatpush2.xpose.msra.mxu0 0.0
        %4249 = vmatprep.subr.mxu0 0.0
        %4250 = vmatpush2.xpose.msra.mxu0 0.0
        %4251 = vmatprep.subr.mxu0 0.0
        %4252 = vmatpush2.xpose.msra.mxu0 0.0
        %4253 = vmatprep.subr.mxu0 0.0
        %4254 = vmatpush2.xpose.msra.mxu0 0.0
        %4255 = vmatprep.subr.mxu0 0.0
        %4256 = vmatpush2.xpose.msra.mxu0 0.0
        %4257 = vmatprep.subr.mxu0 0.0
        %4258 = vmatpush2.xpose.msra.mxu0 0.0
        %4259 = vmatprep.subr.mxu0 0.0
        %4260 = vmatpush2.xpose.msra.mxu0 0.0
        %4261 = vmatprep.subr.mxu0 0.0
        %4262 = vmatpush2.xpose.msra.mxu0 0.0
        %4263 = vmatprep.mubr.f32.mxu0 %v2661
        %4264 = vmatmul.mubr.f32.gmra.mxu0 %v2660
        %v4265 = vpop.f32.mrf.mxu0
        %v4266 = vadd.f32 %v4196, %v4265
        %v4267 = vpop.f32.mrf.mxu0
        %4268 = vdwg.mxu0
        %4269 = vmatprep.subr.mxu0 0.0
        %4270 = vmatpush1.xpose.msra.mxu0 0.0
        %4271 = vmatprep.subr.mxu0 0.0
        %4272 = vmatpush1.xpose.msra.mxu0 0.0
        %4273 = vmatprep.subr.mxu0 0.0
        %4274 = vmatpush1.xpose.msra.mxu0 0.0
        %4275 = vmatprep.subr.mxu0 0.0
        %4276 = vmatpush1.xpose.msra.mxu0 0.0
        %4277 = vmatprep.subr.mxu0 0.0
        %4278 = vmatpush1.xpose.msra.mxu0 0.0
        %4279 = vmatprep.subr.mxu0 0.0
        %4280 = vmatpush1.xpose.msra.mxu0 0.0
        %4281 = vmatprep.subr.mxu0 0.0
        %4282 = vmatpush1.xpose.msra.mxu0 0.0
        %4283 = vmatprep.subr.mxu0 0.0
        %4284 = vmatpush1.xpose.msra.mxu0 0.0
        %4285 = vmatprep.subr.mxu0 0.0
        %4286 = vmatpush1.xpose.msra.mxu0 0.0
        %4287 = vmatprep.subr.mxu0 0.0
        %4288 = vmatpush1.xpose.msra.mxu0 0.0
        %4289 = vmatprep.subr.mxu0 0.0
        %4290 = vmatpush1.xpose.msra.mxu0 0.0
        %4291 = vmatprep.subr.mxu0 0.0
        %4292 = vmatpush1.xpose.msra.mxu0 0.0
        %4293 = vmatprep.subr.mxu0 0.0
        %4294 = vmatpush1.xpose.msra.mxu0 0.0
        %4295 = vmatprep.subr.mxu0 0.0
        %4296 = vmatpush1.xpose.msra.mxu0 0.0
        %4297 = vmatprep.subr.mxu0 0.0
        %4298 = vmatpush1.xpose.msra.mxu0 0.0
        %4299 = vmatprep.subr.mxu0 %v3102
        %4300 = vmatpush1.xpose.msra.mxu0 %v3100
        %4301 = vmatprep.subr.mxu0 0.0
        %4302 = vmatpush2.xpose.msra.mxu0 0.0
        %4303 = vmatprep.subr.mxu0 0.0
        %4304 = vmatpush2.xpose.msra.mxu0 0.0
        %4305 = vmatprep.subr.mxu0 0.0
        %4306 = vmatpush2.xpose.msra.mxu0 0.0
        %4307 = vmatprep.subr.mxu0 0.0
        %4308 = vmatpush2.xpose.msra.mxu0 0.0
        %4309 = vmatprep.subr.mxu0 0.0
        %4310 = vmatpush2.xpose.msra.mxu0 0.0
        %4311 = vmatprep.subr.mxu0 0.0
        %4312 = vmatpush2.xpose.msra.mxu0 0.0
        %4313 = vmatprep.subr.mxu0 0.0
        %4314 = vmatpush2.xpose.msra.mxu0 0.0
        %4315 = vmatprep.subr.mxu0 0.0
        %4316 = vmatpush2.xpose.msra.mxu0 0.0
        %4317 = vmatprep.subr.mxu0 0.0
        %4318 = vmatpush2.xpose.msra.mxu0 0.0
        %4319 = vmatprep.subr.mxu0 0.0
        %4320 = vmatpush2.xpose.msra.mxu0 0.0
        %4321 = vmatprep.subr.mxu0 0.0
        %4322 = vmatpush2.xpose.msra.mxu0 0.0
        %4323 = vmatprep.subr.mxu0 0.0
        %4324 = vmatpush2.xpose.msra.mxu0 0.0
        %4325 = vmatprep.subr.mxu0 0.0
        %4326 = vmatpush2.xpose.msra.mxu0 0.0
        %4327 = vmatprep.subr.mxu0 0.0
        %4328 = vmatpush2.xpose.msra.mxu0 0.0
        %4329 = vmatprep.subr.mxu0 0.0
        %4330 = vmatpush2.xpose.msra.mxu0 0.0
        %4331 = vmatprep.subr.mxu0 0.0
        %4332 = vmatpush2.xpose.msra.mxu0 0.0
        %4333 = vmatprep.mubr.f32.mxu0 %v2663
        %4334 = vmatmul.mubr.f32.gmra.mxu0 %v2662
        %v4335 = vpop.f32.mrf.mxu0
        %v4336 = vadd.f32 %v4266, %v4335
        %v4337 = vpop.f32.mrf.mxu0
        %4338 = vdwg.mxu0
        %4339 = vmatprep.subr.mxu0 0.0
        %4340 = vmatpush1.xpose.msra.mxu0 0.0
        %4341 = vmatprep.subr.mxu0 0.0
        %4342 = vmatpush1.xpose.msra.mxu0 0.0
        %4343 = vmatprep.subr.mxu0 0.0
        %4344 = vmatpush1.xpose.msra.mxu0 0.0
        %4345 = vmatprep.subr.mxu0 0.0
        %4346 = vmatpush1.xpose.msra.mxu0 0.0
        %4347 = vmatprep.subr.mxu0 0.0
        %4348 = vmatpush1.xpose.msra.mxu0 0.0
        %4349 = vmatprep.subr.mxu0 0.0
        %4350 = vmatpush1.xpose.msra.mxu0 0.0
        %4351 = vmatprep.subr.mxu0 0.0
        %4352 = vmatpush1.xpose.msra.mxu0 0.0
        %4353 = vmatprep.subr.mxu0 0.0
        %4354 = vmatpush1.xpose.msra.mxu0 0.0
        %4355 = vmatprep.subr.mxu0 0.0
        %4356 = vmatpush1.xpose.msra.mxu0 0.0
        %4357 = vmatprep.subr.mxu0 0.0
        %4358 = vmatpush1.xpose.msra.mxu0 0.0
        %4359 = vmatprep.subr.mxu0 0.0
        %4360 = vmatpush1.xpose.msra.mxu0 0.0
        %4361 = vmatprep.subr.mxu0 0.0
        %4362 = vmatpush1.xpose.msra.mxu0 0.0
        %4363 = vmatprep.subr.mxu0 0.0
        %4364 = vmatpush1.xpose.msra.mxu0 0.0
        %4365 = vmatprep.subr.mxu0 0.0
        %4366 = vmatpush1.xpose.msra.mxu0 0.0
        %4367 = vmatprep.subr.mxu0 0.0
        %4368 = vmatpush1.xpose.msra.mxu0 0.0
        %4369 = vmatprep.subr.mxu0 %v3118
        %4370 = vmatpush1.xpose.msra.mxu0 %v3110
        %4371 = vmatprep.subr.mxu0 0.0
        %4372 = vmatpush2.xpose.msra.mxu0 0.0
        %4373 = vmatprep.subr.mxu0 0.0
        %4374 = vmatpush2.xpose.msra.mxu0 0.0
        %4375 = vmatprep.subr.mxu0 0.0
        %4376 = vmatpush2.xpose.msra.mxu0 0.0
        %4377 = vmatprep.subr.mxu0 0.0
        %4378 = vmatpush2.xpose.msra.mxu0 0.0
        %4379 = vmatprep.subr.mxu0 0.0
        %4380 = vmatpush2.xpose.msra.mxu0 0.0
        %4381 = vmatprep.subr.mxu0 0.0
        %4382 = vmatpush2.xpose.msra.mxu0 0.0
        %4383 = vmatprep.subr.mxu0 0.0
        %4384 = vmatpush2.xpose.msra.mxu0 0.0
        %4385 = vmatprep.subr.mxu0 0.0
        %4386 = vmatpush2.xpose.msra.mxu0 0.0
        %4387 = vmatprep.subr.mxu0 0.0
        %4388 = vmatpush2.xpose.msra.mxu0 0.0
        %4389 = vmatprep.subr.mxu0 0.0
        %4390 = vmatpush2.xpose.msra.mxu0 0.0
        %4391 = vmatprep.subr.mxu0 0.0
        %4392 = vmatpush2.xpose.msra.mxu0 0.0
        %4393 = vmatprep.subr.mxu0 0.0
        %4394 = vmatpush2.xpose.msra.mxu0 0.0
        %4395 = vmatprep.subr.mxu0 0.0
        %4396 = vmatpush2.xpose.msra.mxu0 0.0
        %4397 = vmatprep.subr.mxu0 0.0
        %4398 = vmatpush2.xpose.msra.mxu0 0.0
        %4399 = vmatprep.subr.mxu0 0.0
        %4400 = vmatpush2.xpose.msra.mxu0 0.0
        %4401 = vmatprep.subr.mxu0 0.0
        %4402 = vmatpush2.xpose.msra.mxu0 0.0
        %4403 = vmatprep.mubr.f32.mxu0 %v2793
        %4404 = vmatmul.mubr.f32.gmra.mxu0 %v2792
        %v4405 = vpop.f32.mrf.mxu0
        %v4406 = vadd.f32 %v4336, %v4405
        %v4407 = vpop.f32.mrf.mxu0
        %4408 = vdwg.mxu0
        %4409 = vmatprep.subr.mxu0 0.0
        %4410 = vmatpush1.xpose.msra.mxu0 0.0
        %4411 = vmatprep.subr.mxu0 0.0
        %4412 = vmatpush1.xpose.msra.mxu0 0.0
        %4413 = vmatprep.subr.mxu0 0.0
        %4414 = vmatpush1.xpose.msra.mxu0 0.0
        %4415 = vmatprep.subr.mxu0 0.0
        %4416 = vmatpush1.xpose.msra.mxu0 0.0
        %4417 = vmatprep.subr.mxu0 0.0
        %4418 = vmatpush1.xpose.msra.mxu0 0.0
        %4419 = vmatprep.subr.mxu0 0.0
        %4420 = vmatpush1.xpose.msra.mxu0 0.0
        %4421 = vmatprep.subr.mxu0 0.0
        %4422 = vmatpush1.xpose.msra.mxu0 0.0
        %4423 = vmatprep.subr.mxu0 0.0
        %4424 = vmatpush1.xpose.msra.mxu0 0.0
        %4425 = vmatprep.subr.mxu0 0.0
        %4426 = vmatpush1.xpose.msra.mxu0 0.0
        %4427 = vmatprep.subr.mxu0 0.0
        %4428 = vmatpush1.xpose.msra.mxu0 0.0
        %4429 = vmatprep.subr.mxu0 0.0
        %4430 = vmatpush1.xpose.msra.mxu0 0.0
        %4431 = vmatprep.subr.mxu0 0.0
        %4432 = vmatpush1.xpose.msra.mxu0 0.0
        %4433 = vmatprep.subr.mxu0 0.0
        %4434 = vmatpush1.xpose.msra.mxu0 0.0
        %4435 = vmatprep.subr.mxu0 0.0
        %4436 = vmatpush1.xpose.msra.mxu0 0.0
        %4437 = vmatprep.subr.mxu0 0.0
        %4438 = vmatpush1.xpose.msra.mxu0 0.0
        %4439 = vmatprep.subr.mxu0 %v3119
        %4440 = vmatpush1.xpose.msra.mxu0 %v3117
        %4441 = vmatprep.subr.mxu0 0.0
        %4442 = vmatpush2.xpose.msra.mxu0 0.0
        %4443 = vmatprep.subr.mxu0 0.0
        %4444 = vmatpush2.xpose.msra.mxu0 0.0
        %4445 = vmatprep.subr.mxu0 0.0
        %4446 = vmatpush2.xpose.msra.mxu0 0.0
        %4447 = vmatprep.subr.mxu0 0.0
        %4448 = vmatpush2.xpose.msra.mxu0 0.0
        %4449 = vmatprep.subr.mxu0 0.0
        %4450 = vmatpush2.xpose.msra.mxu0 0.0
        %4451 = vmatprep.subr.mxu0 0.0
        %4452 = vmatpush2.xpose.msra.mxu0 0.0
        %4453 = vmatprep.subr.mxu0 0.0
        %4454 = vmatpush2.xpose.msra.mxu0 0.0
        %4455 = vmatprep.subr.mxu0 0.0
        %4456 = vmatpush2.xpose.msra.mxu0 0.0
        %4457 = vmatprep.subr.mxu0 0.0
        %4458 = vmatpush2.xpose.msra.mxu0 0.0
        %4459 = vmatprep.subr.mxu0 0.0
        %4460 = vmatpush2.xpose.msra.mxu0 0.0
        %4461 = vmatprep.subr.mxu0 0.0
        %4462 = vmatpush2.xpose.msra.mxu0 0.0
        %4463 = vmatprep.subr.mxu0 0.0
        %4464 = vmatpush2.xpose.msra.mxu0 0.0
        %4465 = vmatprep.subr.mxu0 0.0
        %4466 = vmatpush2.xpose.msra.mxu0 0.0
        %4467 = vmatprep.subr.mxu0 0.0
        %4468 = vmatpush2.xpose.msra.mxu0 0.0
        %4469 = vmatprep.subr.mxu0 0.0
        %4470 = vmatpush2.xpose.msra.mxu0 0.0
        %4471 = vmatprep.subr.mxu0 0.0
        %4472 = vmatpush2.xpose.msra.mxu0 0.0
        %4473 = vmatprep.mubr.f32.mxu0 %v2795
        %4474 = vmatmul.mubr.f32.gmra.mxu0 %v2794
        %v4475 = vpop.f32.mrf.mxu0
        %v4476 = vadd.f32 %v4406, %v4475
        %v4477 = vpop.f32.mrf.mxu0
        %4478 = vdwg.mxu0
        %4479 = vmatprep.subr.mxu0 0.0
        %4480 = vmatpush1.xpose.msra.mxu0 0.0
        %4481 = vmatprep.subr.mxu0 0.0
        %4482 = vmatpush1.xpose.msra.mxu0 0.0
        %4483 = vmatprep.subr.mxu0 0.0
        %4484 = vmatpush1.xpose.msra.mxu0 0.0
        %4485 = vmatprep.subr.mxu0 0.0
        %4486 = vmatpush1.xpose.msra.mxu0 0.0
        %4487 = vmatprep.subr.mxu0 0.0
        %4488 = vmatpush1.xpose.msra.mxu0 0.0
        %4489 = vmatprep.subr.mxu0 0.0
        %4490 = vmatpush1.xpose.msra.mxu0 0.0
        %4491 = vmatprep.subr.mxu0 0.0
        %4492 = vmatpush1.xpose.msra.mxu0 0.0
        %4493 = vmatprep.subr.mxu0 0.0
        %4494 = vmatpush1.xpose.msra.mxu0 0.0
        %4495 = vmatprep.subr.mxu0 0.0
        %4496 = vmatpush1.xpose.msra.mxu0 0.0
        %4497 = vmatprep.subr.mxu0 0.0
        %4498 = vmatpush1.xpose.msra.mxu0 0.0
        %4499 = vmatprep.subr.mxu0 0.0
        %4500 = vmatpush1.xpose.msra.mxu0 0.0
        %4501 = vmatprep.subr.mxu0 0.0
        %4502 = vmatpush1.xpose.msra.mxu0 0.0
        %4503 = vmatprep.subr.mxu0 0.0
        %4504 = vmatpush1.xpose.msra.mxu0 0.0
        %4505 = vmatprep.subr.mxu0 0.0
        %4506 = vmatpush1.xpose.msra.mxu0 0.0
        %4507 = vmatprep.subr.mxu0 0.0
        %4508 = vmatpush1.xpose.msra.mxu0 0.0
        %4509 = vmatprep.subr.mxu0 %v3135
        %4510 = vmatpush1.xpose.msra.mxu0 %v3127
        %4511 = vmatprep.subr.mxu0 0.0
        %4512 = vmatpush2.xpose.msra.mxu0 0.0
        %4513 = vmatprep.subr.mxu0 0.0
        %4514 = vmatpush2.xpose.msra.mxu0 0.0
        %4515 = vmatprep.subr.mxu0 0.0
        %4516 = vmatpush2.xpose.msra.mxu0 0.0
        %4517 = vmatprep.subr.mxu0 0.0
        %4518 = vmatpush2.xpose.msra.mxu0 0.0
        %4519 = vmatprep.subr.mxu0 0.0
        %4520 = vmatpush2.xpose.msra.mxu0 0.0
        %4521 = vmatprep.subr.mxu0 0.0
        %4522 = vmatpush2.xpose.msra.mxu0 0.0
        %4523 = vmatprep.subr.mxu0 0.0
        %4524 = vmatpush2.xpose.msra.mxu0 0.0
        %4525 = vmatprep.subr.mxu0 0.0
        %4526 = vmatpush2.xpose.msra.mxu0 0.0
        %4527 = vmatprep.subr.mxu0 0.0
        %4528 = vmatpush2.xpose.msra.mxu0 0.0
        %4529 = vmatprep.subr.mxu0 0.0
        %4530 = vmatpush2.xpose.msra.mxu0 0.0
        %4531 = vmatprep.subr.mxu0 0.0
        %4532 = vmatpush2.xpose.msra.mxu0 0.0
        %4533 = vmatprep.subr.mxu0 0.0
        %4534 = vmatpush2.xpose.msra.mxu0 0.0
        %4535 = vmatprep.subr.mxu0 0.0
        %4536 = vmatpush2.xpose.msra.mxu0 0.0
        %4537 = vmatprep.subr.mxu0 0.0
        %4538 = vmatpush2.xpose.msra.mxu0 0.0
        %4539 = vmatprep.subr.mxu0 0.0
        %4540 = vmatpush2.xpose.msra.mxu0 0.0
        %4541 = vmatprep.subr.mxu0 0.0
        %4542 = vmatpush2.xpose.msra.mxu0 0.0
        %4543 = vmatprep.mubr.f32.mxu0 %v2797
        %4544 = vmatmul.mubr.f32.gmra.mxu0 %v2796
        %v4545 = vpop.f32.mrf.mxu0
        %v4546 = vadd.f32 %v4476, %v4545
        %v4547 = vpop.f32.mrf.mxu0
        %4548 = vdwg.mxu0
        %4549 = vmatprep.subr.mxu0 0.0
        %4550 = vmatpush1.xpose.msra.mxu0 0.0
        %4551 = vmatprep.subr.mxu0 0.0
        %4552 = vmatpush1.xpose.msra.mxu0 0.0
        %4553 = vmatprep.subr.mxu0 0.0
        %4554 = vmatpush1.xpose.msra.mxu0 0.0
        %4555 = vmatprep.subr.mxu0 0.0
        %4556 = vmatpush1.xpose.msra.mxu0 0.0
        %4557 = vmatprep.subr.mxu0 0.0
        %4558 = vmatpush1.xpose.msra.mxu0 0.0
        %4559 = vmatprep.subr.mxu0 0.0
        %4560 = vmatpush1.xpose.msra.mxu0 0.0
        %4561 = vmatprep.subr.mxu0 0.0
        %4562 = vmatpush1.xpose.msra.mxu0 0.0
        %4563 = vmatprep.subr.mxu0 0.0
        %4564 = vmatpush1.xpose.msra.mxu0 0.0
        %4565 = vmatprep.subr.mxu0 0.0
        %4566 = vmatpush1.xpose.msra.mxu0 0.0
        %4567 = vmatprep.subr.mxu0 0.0
        %4568 = vmatpush1.xpose.msra.mxu0 0.0
        %4569 = vmatprep.subr.mxu0 0.0
        %4570 = vmatpush1.xpose.msra.mxu0 0.0
        %4571 = vmatprep.subr.mxu0 0.0
        %4572 = vmatpush1.xpose.msra.mxu0 0.0
        %4573 = vmatprep.subr.mxu0 0.0
        %4574 = vmatpush1.xpose.msra.mxu0 0.0
        %4575 = vmatprep.subr.mxu0 0.0
        %4576 = vmatpush1.xpose.msra.mxu0 0.0
        %4577 = vmatprep.subr.mxu0 0.0
        %4578 = vmatpush1.xpose.msra.mxu0 0.0
        %4579 = vmatprep.subr.mxu0 %v3136
        %4580 = vmatpush1.xpose.msra.mxu0 %v3134
        %4581 = vmatprep.subr.mxu0 0.0
        %4582 = vmatpush2.xpose.msra.mxu0 0.0
        %4583 = vmatprep.subr.mxu0 0.0
        %4584 = vmatpush2.xpose.msra.mxu0 0.0
        %4585 = vmatprep.subr.mxu0 0.0
        %4586 = vmatpush2.xpose.msra.mxu0 0.0
        %4587 = vmatprep.subr.mxu0 0.0
        %4588 = vmatpush2.xpose.msra.mxu0 0.0
        %4589 = vmatprep.subr.mxu0 0.0
        %4590 = vmatpush2.xpose.msra.mxu0 0.0
        %4591 = vmatprep.subr.mxu0 0.0
        %4592 = vmatpush2.xpose.msra.mxu0 0.0
        %4593 = vmatprep.subr.mxu0 0.0
        %4594 = vmatpush2.xpose.msra.mxu0 0.0
        %4595 = vmatprep.subr.mxu0 0.0
        %4596 = vmatpush2.xpose.msra.mxu0 0.0
        %4597 = vmatprep.subr.mxu0 0.0
        %4598 = vmatpush2.xpose.msra.mxu0 0.0
        %4599 = vmatprep.subr.mxu0 0.0
        %4600 = vmatpush2.xpose.msra.mxu0 0.0
        %4601 = vmatprep.subr.mxu0 0.0
        %4602 = vmatpush2.xpose.msra.mxu0 0.0
        %4603 = vmatprep.subr.mxu0 0.0
        %4604 = vmatpush2.xpose.msra.mxu0 0.0
        %4605 = vmatprep.subr.mxu0 0.0
        %4606 = vmatpush2.xpose.msra.mxu0 0.0
        %4607 = vmatprep.subr.mxu0 0.0
        %4608 = vmatpush2.xpose.msra.mxu0 0.0
        %4609 = vmatprep.subr.mxu0 0.0
        %4610 = vmatpush2.xpose.msra.mxu0 0.0
        %4611 = vmatprep.subr.mxu0 0.0
        %4612 = vmatpush2.xpose.msra.mxu0 0.0
        %4613 = vmatprep.mubr.f32.mxu0 %v2799
        %4614 = vmatmul.mubr.f32.gmra.mxu0 %v2798
        %v4615 = vpop.f32.mrf.mxu0
        %v4616 = vadd.f32 %v4546, %v4615
        %v4617 = vpop.f32.mrf.mxu0
        %4618 = vdwg.mxu0
        %4619 = vmatprep.subr.mxu0 0.0
        %4620 = vmatpush1.xpose.msra.mxu0 0.0
        %4621 = vmatprep.subr.mxu0 0.0
        %4622 = vmatpush1.xpose.msra.mxu0 0.0
        %4623 = vmatprep.subr.mxu0 0.0
        %4624 = vmatpush1.xpose.msra.mxu0 0.0
        %4625 = vmatprep.subr.mxu0 0.0
        %4626 = vmatpush1.xpose.msra.mxu0 0.0
        %4627 = vmatprep.subr.mxu0 0.0
        %4628 = vmatpush1.xpose.msra.mxu0 0.0
        %4629 = vmatprep.subr.mxu0 0.0
        %4630 = vmatpush1.xpose.msra.mxu0 0.0
        %4631 = vmatprep.subr.mxu0 0.0
        %4632 = vmatpush1.xpose.msra.mxu0 0.0
        %4633 = vmatprep.subr.mxu0 0.0
        %4634 = vmatpush1.xpose.msra.mxu0 0.0
        %4635 = vmatprep.subr.mxu0 0.0
        %4636 = vmatpush1.xpose.msra.mxu0 0.0
        %4637 = vmatprep.subr.mxu0 0.0
        %4638 = vmatpush1.xpose.msra.mxu0 0.0
        %4639 = vmatprep.subr.mxu0 0.0
        %4640 = vmatpush1.xpose.msra.mxu0 0.0
        %4641 = vmatprep.subr.mxu0 0.0
        %4642 = vmatpush1.xpose.msra.mxu0 0.0
        %4643 = vmatprep.subr.mxu0 0.0
        %4644 = vmatpush1.xpose.msra.mxu0 0.0
        %4645 = vmatprep.subr.mxu0 0.0
        %4646 = vmatpush1.xpose.msra.mxu0 0.0
        %4647 = vmatprep.subr.mxu0 0.0
        %4648 = vmatpush1.xpose.msra.mxu0 0.0
        %4649 = vmatprep.subr.mxu0 %v3152
        %4650 = vmatpush1.xpose.msra.mxu0 %v3144
        %4651 = vmatprep.subr.mxu0 0.0
        %4652 = vmatpush2.xpose.msra.mxu0 0.0
        %4653 = vmatprep.subr.mxu0 0.0
        %4654 = vmatpush2.xpose.msra.mxu0 0.0
        %4655 = vmatprep.subr.mxu0 0.0
        %4656 = vmatpush2.xpose.msra.mxu0 0.0
        %4657 = vmatprep.subr.mxu0 0.0
        %4658 = vmatpush2.xpose.msra.mxu0 0.0
        %4659 = vmatprep.subr.mxu0 0.0
        %4660 = vmatpush2.xpose.msra.mxu0 0.0
        %4661 = vmatprep.subr.mxu0 0.0
        %4662 = vmatpush2.xpose.msra.mxu0 0.0
        %4663 = vmatprep.subr.mxu0 0.0
        %4664 = vmatpush2.xpose.msra.mxu0 0.0
        %4665 = vmatprep.subr.mxu0 0.0
        %4666 = vmatpush2.xpose.msra.mxu0 0.0
        %4667 = vmatprep.subr.mxu0 0.0
        %4668 = vmatpush2.xpose.msra.mxu0 0.0
        %4669 = vmatprep.subr.mxu0 0.0
        %4670 = vmatpush2.xpose.msra.mxu0 0.0
        %4671 = vmatprep.subr.mxu0 0.0
        %4672 = vmatpush2.xpose.msra.mxu0 0.0
        %4673 = vmatprep.subr.mxu0 0.0
        %4674 = vmatpush2.xpose.msra.mxu0 0.0
        %4675 = vmatprep.subr.mxu0 0.0
        %4676 = vmatpush2.xpose.msra.mxu0 0.0
        %4677 = vmatprep.subr.mxu0 0.0
        %4678 = vmatpush2.xpose.msra.mxu0 0.0
        %4679 = vmatprep.subr.mxu0 0.0
        %4680 = vmatpush2.xpose.msra.mxu0 0.0
        %4681 = vmatprep.subr.mxu0 0.0
        %4682 = vmatpush2.xpose.msra.mxu0 0.0
        %4683 = vmatprep.mubr.f32.mxu0 %v2929
        %4684 = vmatmul.mubr.f32.gmra.mxu0 %v2928
        %v4685 = vpop.f32.mrf.mxu0
        %v4686 = vadd.f32 %v4616, %v4685
        %v4687 = vpop.f32.mrf.mxu0
        %4688 = vdwg.mxu0
        %4689 = vmatprep.subr.mxu0 0.0
        %4690 = vmatpush1.xpose.msra.mxu0 0.0
        %4691 = vmatprep.subr.mxu0 0.0
        %4692 = vmatpush1.xpose.msra.mxu0 0.0
        %4693 = vmatprep.subr.mxu0 0.0
        %4694 = vmatpush1.xpose.msra.mxu0 0.0
        %4695 = vmatprep.subr.mxu0 0.0
        %4696 = vmatpush1.xpose.msra.mxu0 0.0
        %4697 = vmatprep.subr.mxu0 0.0
        %4698 = vmatpush1.xpose.msra.mxu0 0.0
        %4699 = vmatprep.subr.mxu0 0.0
        %4700 = vmatpush1.xpose.msra.mxu0 0.0
        %4701 = vmatprep.subr.mxu0 0.0
        %4702 = vmatpush1.xpose.msra.mxu0 0.0
        %4703 = vmatprep.subr.mxu0 0.0
        %4704 = vmatpush1.xpose.msra.mxu0 0.0
        %4705 = vmatprep.subr.mxu0 0.0
        %4706 = vmatpush1.xpose.msra.mxu0 0.0
        %4707 = vmatprep.subr.mxu0 0.0
        %4708 = vmatpush1.xpose.msra.mxu0 0.0
        %4709 = vmatprep.subr.mxu0 0.0
        %4710 = vmatpush1.xpose.msra.mxu0 0.0
        %4711 = vmatprep.subr.mxu0 0.0
        %4712 = vmatpush1.xpose.msra.mxu0 0.0
        %4713 = vmatprep.subr.mxu0 0.0
        %4714 = vmatpush1.xpose.msra.mxu0 0.0
        %4715 = vmatprep.subr.mxu0 0.0
        %4716 = vmatpush1.xpose.msra.mxu0 0.0
        %4717 = vmatprep.subr.mxu0 0.0
        %4718 = vmatpush1.xpose.msra.mxu0 0.0
        %4719 = vmatprep.subr.mxu0 %v3153
        %4720 = vmatpush1.xpose.msra.mxu0 %v3151
        %4721 = vmatprep.subr.mxu0 0.0
        %4722 = vmatpush2.xpose.msra.mxu0 0.0
        %4723 = vmatprep.subr.mxu0 0.0
        %4724 = vmatpush2.xpose.msra.mxu0 0.0
        %4725 = vmatprep.subr.mxu0 0.0
        %4726 = vmatpush2.xpose.msra.mxu0 0.0
        %4727 = vmatprep.subr.mxu0 0.0
        %4728 = vmatpush2.xpose.msra.mxu0 0.0
        %4729 = vmatprep.subr.mxu0 0.0
        %4730 = vmatpush2.xpose.msra.mxu0 0.0
        %4731 = vmatprep.subr.mxu0 0.0
        %4732 = vmatpush2.xpose.msra.mxu0 0.0
        %4733 = vmatprep.subr.mxu0 0.0
        %4734 = vmatpush2.xpose.msra.mxu0 0.0
        %4735 = vmatprep.subr.mxu0 0.0
        %4736 = vmatpush2.xpose.msra.mxu0 0.0
        %4737 = vmatprep.subr.mxu0 0.0
        %4738 = vmatpush2.xpose.msra.mxu0 0.0
        %4739 = vmatprep.subr.mxu0 0.0
        %4740 = vmatpush2.xpose.msra.mxu0 0.0
        %4741 = vmatprep.subr.mxu0 0.0
        %4742 = vmatpush2.xpose.msra.mxu0 0.0
        %4743 = vmatprep.subr.mxu0 0.0
        %4744 = vmatpush2.xpose.msra.mxu0 0.0
        %4745 = vmatprep.subr.mxu0 0.0
        %4746 = vmatpush2.xpose.msra.mxu0 0.0
        %4747 = vmatprep.subr.mxu0 0.0
        %4748 = vmatpush2.xpose.msra.mxu0 0.0
        %4749 = vmatprep.subr.mxu0 0.0
        %4750 = vmatpush2.xpose.msra.mxu0 0.0
        %4751 = vmatprep.subr.mxu0 0.0
        %4752 = vmatpush2.xpose.msra.mxu0 0.0
        %4753 = vmatprep.mubr.f32.mxu0 %v2931
        %4754 = vmatmul.mubr.f32.gmra.mxu0 %v2930
        %v4755 = vpop.f32.mrf.mxu0
        %v4756 = vadd.f32 %v4686, %v4755
        %v4757 = vpop.f32.mrf.mxu0
        %4758 = vdwg.mxu0
        %4759 = vmatprep.subr.mxu0 0.0
        %4760 = vmatpush1.xpose.msra.mxu0 0.0
        %4761 = vmatprep.subr.mxu0 0.0
        %4762 = vmatpush1.xpose.msra.mxu0 0.0
        %4763 = vmatprep.subr.mxu0 0.0
        %4764 = vmatpush1.xpose.msra.mxu0 0.0
        %4765 = vmatprep.subr.mxu0 0.0
        %4766 = vmatpush1.xpose.msra.mxu0 0.0
        %4767 = vmatprep.subr.mxu0 0.0
        %4768 = vmatpush1.xpose.msra.mxu0 0.0
        %4769 = vmatprep.subr.mxu0 0.0
        %4770 = vmatpush1.xpose.msra.mxu0 0.0
        %4771 = vmatprep.subr.mxu0 0.0
        %4772 = vmatpush1.xpose.msra.mxu0 0.0
        %4773 = vmatprep.subr.mxu0 0.0
        %4774 = vmatpush1.xpose.msra.mxu0 0.0
        %4775 = vmatprep.subr.mxu0 0.0
        %4776 = vmatpush1.xpose.msra.mxu0 0.0
        %4777 = vmatprep.subr.mxu0 0.0
        %4778 = vmatpush1.xpose.msra.mxu0 0.0
        %4779 = vmatprep.subr.mxu0 0.0
        %4780 = vmatpush1.xpose.msra.mxu0 0.0
        %4781 = vmatprep.subr.mxu0 0.0
        %4782 = vmatpush1.xpose.msra.mxu0 0.0
        %4783 = vmatprep.subr.mxu0 0.0
        %4784 = vmatpush1.xpose.msra.mxu0 0.0
        %4785 = vmatprep.subr.mxu0 0.0
        %4786 = vmatpush1.xpose.msra.mxu0 0.0
        %4787 = vmatprep.subr.mxu0 0.0
        %4788 = vmatpush1.xpose.msra.mxu0 0.0
        %4789 = vmatprep.subr.mxu0 %v3169
        %4790 = vmatpush1.xpose.msra.mxu0 %v3161
        %4791 = vmatprep.subr.mxu0 0.0
        %4792 = vmatpush2.xpose.msra.mxu0 0.0
        %4793 = vmatprep.subr.mxu0 0.0
        %4794 = vmatpush2.xpose.msra.mxu0 0.0
        %4795 = vmatprep.subr.mxu0 0.0
        %4796 = vmatpush2.xpose.msra.mxu0 0.0
        %4797 = vmatprep.subr.mxu0 0.0
        %4798 = vmatpush2.xpose.msra.mxu0 0.0
        %4799 = vmatprep.subr.mxu0 0.0
        %4800 = vmatpush2.xpose.msra.mxu0 0.0
        %4801 = vmatprep.subr.mxu0 0.0
        %4802 = vmatpush2.xpose.msra.mxu0 0.0
        %4803 = vmatprep.subr.mxu0 0.0
        %4804 = vmatpush2.xpose.msra.mxu0 0.0
        %4805 = vmatprep.subr.mxu0 0.0
        %4806 = vmatpush2.xpose.msra.mxu0 0.0
        %4807 = vmatprep.subr.mxu0 0.0
        %4808 = vmatpush2.xpose.msra.mxu0 0.0
        %4809 = vmatprep.subr.mxu0 0.0
        %4810 = vmatpush2.xpose.msra.mxu0 0.0
        %4811 = vmatprep.subr.mxu0 0.0
        %4812 = vmatpush2.xpose.msra.mxu0 0.0
        %4813 = vmatprep.subr.mxu0 0.0
        %4814 = vmatpush2.xpose.msra.mxu0 0.0
        %4815 = vmatprep.subr.mxu0 0.0
        %4816 = vmatpush2.xpose.msra.mxu0 0.0
        %4817 = vmatprep.subr.mxu0 0.0
        %4818 = vmatpush2.xpose.msra.mxu0 0.0
        %4819 = vmatprep.subr.mxu0 0.0
        %4820 = vmatpush2.xpose.msra.mxu0 0.0
        %4821 = vmatprep.subr.mxu0 0.0
        %4822 = vmatpush2.xpose.msra.mxu0 0.0
        %4823 = vmatprep.mubr.f32.mxu0 %v2933
        %4824 = vmatmul.mubr.f32.gmra.mxu0 %v2932
        %v4825 = vpop.f32.mrf.mxu0
        %v4826 = vadd.f32 %v4756, %v4825
        %v4827 = vpop.f32.mrf.mxu0
        %4828 = vdwg.mxu0
        %4829 = vmatprep.subr.mxu0 0.0
        %4830 = vmatpush1.xpose.msra.mxu0 0.0
        %4831 = vmatprep.subr.mxu0 0.0
        %4832 = vmatpush1.xpose.msra.mxu0 0.0
        %4833 = vmatprep.subr.mxu0 0.0
        %4834 = vmatpush1.xpose.msra.mxu0 0.0
        %4835 = vmatprep.subr.mxu0 0.0
        %4836 = vmatpush1.xpose.msra.mxu0 0.0
        %4837 = vmatprep.subr.mxu0 0.0
        %4838 = vmatpush1.xpose.msra.mxu0 0.0
        %4839 = vmatprep.subr.mxu0 0.0
        %4840 = vmatpush1.xpose.msra.mxu0 0.0
        %4841 = vmatprep.subr.mxu0 0.0
        %4842 = vmatpush1.xpose.msra.mxu0 0.0
        %4843 = vmatprep.subr.mxu0 0.0
        %4844 = vmatpush1.xpose.msra.mxu0 0.0
        %4845 = vmatprep.subr.mxu0 0.0
        %4846 = vmatpush1.xpose.msra.mxu0 0.0
        %4847 = vmatprep.subr.mxu0 0.0
        %4848 = vmatpush1.xpose.msra.mxu0 0.0
        %4849 = vmatprep.subr.mxu0 0.0
        %4850 = vmatpush1.xpose.msra.mxu0 0.0
        %4851 = vmatprep.subr.mxu0 0.0
        %4852 = vmatpush1.xpose.msra.mxu0 0.0
        %4853 = vmatprep.subr.mxu0 0.0
        %4854 = vmatpush1.xpose.msra.mxu0 0.0
        %4855 = vmatprep.subr.mxu0 0.0
        %4856 = vmatpush1.xpose.msra.mxu0 0.0
        %4857 = vmatprep.subr.mxu0 0.0
        %4858 = vmatpush1.xpose.msra.mxu0 0.0
        %4859 = vmatprep.subr.mxu0 %v3170
        %4860 = vmatpush1.xpose.msra.mxu0 %v3168
        %4861 = vmatprep.subr.mxu0 0.0
        %4862 = vmatpush2.xpose.msra.mxu0 0.0
        %4863 = vmatprep.subr.mxu0 0.0
        %4864 = vmatpush2.xpose.msra.mxu0 0.0
        %4865 = vmatprep.subr.mxu0 0.0
        %4866 = vmatpush2.xpose.msra.mxu0 0.0
        %4867 = vmatprep.subr.mxu0 0.0
        %4868 = vmatpush2.xpose.msra.mxu0 0.0
        %4869 = vmatprep.subr.mxu0 0.0
        %4870 = vmatpush2.xpose.msra.mxu0 0.0
        %4871 = vmatprep.subr.mxu0 0.0
        %4872 = vmatpush2.xpose.msra.mxu0 0.0
        %4873 = vmatprep.subr.mxu0 0.0
        %4874 = vmatpush2.xpose.msra.mxu0 0.0
        %4875 = vmatprep.subr.mxu0 0.0
        %4876 = vmatpush2.xpose.msra.mxu0 0.0
        %4877 = vmatprep.subr.mxu0 0.0
        %4878 = vmatpush2.xpose.msra.mxu0 0.0
        %4879 = vmatprep.subr.mxu0 0.0
        %4880 = vmatpush2.xpose.msra.mxu0 0.0
        %4881 = vmatprep.subr.mxu0 0.0
        %4882 = vmatpush2.xpose.msra.mxu0 0.0
        %4883 = vmatprep.subr.mxu0 0.0
        %4884 = vmatpush2.xpose.msra.mxu0 0.0
        %4885 = vmatprep.subr.mxu0 0.0
        %4886 = vmatpush2.xpose.msra.mxu0 0.0
        %4887 = vmatprep.subr.mxu0 0.0
        %4888 = vmatpush2.xpose.msra.mxu0 0.0
        %4889 = vmatprep.subr.mxu0 0.0
        %4890 = vmatpush2.xpose.msra.mxu0 0.0
        %4891 = vmatprep.subr.mxu0 0.0
        %4892 = vmatpush2.xpose.msra.mxu0 0.0
        %4893 = vmatprep.mubr.f32.mxu0 %v2935
        %4894 = vmatmul.mubr.f32.gmra.mxu0 %v2934
        %v4895 = vpop.f32.mrf.mxu0
        %v4896 = vadd.f32 %v4826, %v4895
        %v4897 = vpop.f32.mrf.mxu0
        %4898 = vdwg.mxu0
        %vm4899 = vcmask 15360
        %4900 = vst.msk [vmem:[%s365] sm:$0xff] %vm4899, %v4896
        %p4901 = scmp.lt.s32.totalorder %s24, 1
        %s4902 = scalar_select %p4901, %s24, 1
        %s4903 = smul.addr %s4902, 8
        %s4904 = scalar_lea.vmem %s6, %s4903
        // Predicated region
        $region61: #{tpu_custom_call.1} parent=43 // pred_check
          %p4905 = pneg %p183
        $region62: #{tpu_custom_call.1} parent=43 // pred_check_branch
          %4907 = sbr.rel (%p4905) target = $region64
        $region63: #{tpu_custom_call.1} parent=43 // pred_region
          _
        $region64: #{tpu_custom_call.1} parent=43 // pred_fallthru
          _
      $region44: #{tpu_custom_call.1} parent=5 // pred_fallthru
        _
      %p4908 = scmp.le.s32.totalorder 2, %s19
      // Predicated region
      $region65: #{tpu_custom_call.1} parent=5 // pred_check
        %p4909 = pneg %p4908
      $region66: #{tpu_custom_call.1} parent=5 // pred_check_branch
        %4911 = sbr.rel (%p4909) target = $region68
      $region67: #{tpu_custom_call.1} parent=5 // pred_region
        %s4912 = ssub.s32 %s19, 2
        // Predicated region
        $region69: #{tpu_custom_call.1} parent=67 // pred_check
          %p4913 = pneg %p189
        $region70: #{tpu_custom_call.1} parent=67 // pred_check_branch
          %4915 = sbr.rel (%p4913) target = $region72
        $region71: #{tpu_custom_call.1} parent=67 // pred_region
          %p4916 = scmp.lt.s32.totalorder %s25, 1
          %s4917 = scalar_select %p4916, %s25, 1
          %s4918 = smul.addr %s4917, 8
          %s4919 = scalar_lea.vmem %s6, %s4918
        $region72: #{tpu_custom_call.1} parent=67 // pred_fallthru
          _
      $region68: #{tpu_custom_call.1} parent=5 // pred_fallthru
        _
    $region6: #{tpu_custom_call.1} parent=1 // loop_footer
      %s23 = sadd.s32 1, %s19
    $region7: #{tpu_custom_call.1} parent=1 // loop_footer_branch
      %18 = sbr.rel target = $region3
    $region8: #{tpu_custom_call.1} parent=1 // loop_exit
      _
    %4920 = vsyncpa [#allocation3], 1
    %s4921 = scalar_lea.sflag [#allocation3], 1
    %4922 = vsyncpa %s4921, 1
    %4923 = vsyncpa [#allocation5], 1
    %s4924 = scalar_lea.sflag [#allocation5], 1
    %4925 = vsyncpa %s4924, 1
    %4926 = vsyncpa [#allocation8], 1

</llo_original>
